<compile_context>
chip_gen: v6e
topology: v6e:2x2x1
jax: 0.10.0
libtpu: 0.0.40
codegen_flags: <defaults>
</compile_context>

<pallas_src>
import jax
import jax.numpy as jnp
from jax import lax
from jax.experimental import pallas as pl
from jax.experimental.pallas import tpu as pltpu


def _drop_threshold(g_logistic):
    """Hard-gumbel drop threshold, precomputed once outside the kernel (bf16).

    drop (add -100) iff  g > 2*sigmoid(attn) - 1  <=>  attn < 2*atanh(g),
    with always-drop (+inf) for g >= 1 and never-drop (-inf) for g <= -1.
    """
    g = g_logistic.astype(jnp.float32)
    finite = 2.0 * jnp.arctanh(jnp.clip(g, -1.0, 1.0))
    thr = jnp.where(g >= 1.0, jnp.inf, jnp.where(g <= -1.0, -jnp.inf, finite))
    return thr.astype(jnp.bfloat16)


def _deformable_attn_kernel(xq_ref, xkv_ref, thr_ref, wq_ref, wkv_ref, wbd_ref,
                            bw_ref, o_ref, q_s, m_s, l_s, acc_s):
    """One (batch, query-tile, key-tile) grid step."""
    ki = pl.program_id(2)
    c = xq_ref.shape[2]

    # Per-(batch, query-tile) init: q projection (scale pre-folded) + softmax state.
    @pl.when(ki == 0)
    def _init():
        q_s[...] = jnp.dot(xq_ref[0], wq_ref[...],
                           preferred_element_type=jnp.float32)          # (TQ, C)
        m_s[...] = jnp.full_like(m_s, -jnp.inf)
        l_s[...] = jnp.zeros_like(l_s)
        acc_s[...] = jnp.zeros_like(acc_s)

    # k/v projection for this key tile (single fused (C, 2C) matmul, sliced after).
    kv = jnp.dot(xkv_ref[0], wkv_ref[...], preferred_element_type=jnp.float32)
    k = kv[:, :c]                                                        # (TK, C)
    v = kv[:, c:]                                                        # (TK, C)

    # Scores in f32 (keeps the drop decision consistent with the reference),
    # hard-gumbel mask is a plain compare against the precomputed threshold.
    s = lax.dot_general(q_s[...], k, (((1,), (1,)), ((), ())),
                        preferred_element_type=jnp.float32)              # (TQ, TK)
    s = jnp.where(s < thr_ref[0].astype(jnp.float32), s - 100.0, s)

    # Online softmax + bf16 MXU accumulation of p @ v.
    m_prev = m_s[...]
    m_new = jnp.maximum(m_prev, jnp.max(s, axis=-1, keepdims=True))
    alpha = jnp.exp(m_prev - m_new)
    p = jnp.exp(s - m_new)
    l_s[...] = alpha * l_s[...] + jnp.sum(p, axis=-1, keepdims=True)
    acc_s[...] = alpha * acc_s[...] + jnp.dot(
        p.astype(jnp.bfloat16), v.astype(jnp.bfloat16),
        preferred_element_type=jnp.float32)
    m_s[...] = m_new

    # Last key tile: normalize, then fuse the transpose/reshape glue and the output
    # projection into lane-dense block-diagonal matmuls; one 128-wide store.
    @pl.when(ki == pl.num_programs(2) - 1)
    def _finalize():
        y = acc_s[...] / l_s[...]                                        # (TQ, C)
        pc = wbd_ref.shape[0]                                            # 128
        blocks = []
        for g in range(y.shape[0] // pc):                                # TQ // 128
            blocks.append(lax.dot_general(
                y[g * pc:(g + 1) * pc, :], wbd_ref[...],
                (((0,), (0,)), ((), ())),
                preferred_element_type=jnp.float32))                     # (C, 128)
        o_ref[0] = jnp.concatenate(blocks, axis=0) + bw_ref[...]


def deformable_attention(x, w_qkv, w_proj, b_proj, g_logistic, num_heads,
                         *, tq=256, tk=256):
    B, N, C = x.shape
    assert C % num_heads == 0
    scale = (C // num_heads) ** (-0.5)

    # Lane-dense output packing: P * C == 128 lanes per output block.
    assert (128 % C == 0) or (C % 128 == 0), "C must divide (or be a multiple of) 128"
    pc = 128 if C <= 128 else C
    P = pc // C

    tq = min(tq, N)
    tk = min(tk, N)
    assert tq % pc == 0, "query tile must be a multiple of the 128-lane output pack"
    assert N % tq == 0 and N % tk == 0, "N must be divisible by the tile sizes"
    # TODO(synk): ragged N needs pl.BoundedSlice / masking; not required here.

    nq, nk = N // tq, N // tk
    mrep = N // C

    # One-time host/XLA prep (outside the hot kernel):
    w_q = w_qkv[:, :C] * jnp.float32(scale)                    # fold attention scale
    w_kv = w_qkv[:, C:]                                        # fused k|v weight (C, 2C)
    w_bd = jnp.kron(jnp.eye(P, dtype=w_proj.dtype), w_proj)    # block-diag (128, 128)
    b_wide = jnp.tile(jnp.reshape(b_proj, (1, C)), (1, P))     # (1, 128)
    thr = _drop_threshold(g_logistic)                          # (B, N, N) bf16

    flops = 2 * B * (N * C * C                     # q projection
                     + nq * N * C * (2 * C)        # k/v projection (per query tile)
                     + 2 * N * N * C               # scores + p @ v
                     + N * C * pc)                 # fused glue + output projection
    cost = pl.CostEstimate(
        flops=flops,
        transcendentals=B * N * (N + nk),
        bytes_accessed=(4 * B * N * C + 4 * B * nq * N * C + 2 * B * N * N
                        + 4 * B * N * C + 4 * (C * C + 2 * C * C + pc * pc + pc)),
    )

    out_lane = pl.pallas_call(
        _deformable_attn_kernel,
        out_shape=jax.ShapeDtypeStruct((B, N // P, pc), jnp.float32),
        grid=(B, nq, nk),
        in_specs=[
            pl.BlockSpec((1, tq, C), lambda b, qi, ki: (b, qi, 0)),    # x (query rows)
            pl.BlockSpec((1, tk, C), lambda b, qi, ki: (b, ki, 0)),    # x (key rows)
            pl.BlockSpec((1, tq, tk), lambda b, qi, ki: (b, qi, ki)),  # drop threshold bf16
            pl.BlockSpec((C, C), lambda b, qi, ki: (0, 0)),            # W_q (pre-scaled)
            pl.BlockSpec((C, 2 * C), lambda b, qi, ki: (0, 0)),        # W_k | W_v fused
            pl.BlockSpec((pc, pc), lambda b, qi, ki: (0, 0)),          # block-diag W_proj
            pl.BlockSpec((1, pc), lambda b, qi, ki: (0, 0)),           # tiled proj bias
        ],
        out_specs=pl.BlockSpec((1, tq // P, pc), lambda b, qi, ki: (b, qi, 0)),
        scratch_shapes=[
            pltpu.VMEM((tq, C), jnp.float32),   # q tile, cached across key tiles
            pltpu.VMEM((tq, 1), jnp.float32),   # running row max
            pltpu.VMEM((tq, 1), jnp.float32),   # running denominator
            pltpu.VMEM((tq, C), jnp.float32),   # output accumulator
        ],
        compiler_params=pltpu.CompilerParams(
            dimension_semantics=("parallel", "parallel", "arbitrary"),
            # Tiled working set is ~2 MiB; explicit limit gives headroom for larger
            # tile configs (v5e's default scoped VMEM is only 16 MiB).
            vmem_limit_bytes=32 * 1024 * 1024),
        cost_estimate=cost,
    )(x, x, thr, w_q, w_kv, w_bd, b_wide)

    # Undo the lane-dense row packing: pure layout plumbing, done in XLA.
    out = out_lane.reshape(B, mrep // P, C, P, C)
    out = out.transpose(0, 2, 1, 3, 4).reshape(B, N, C)
    return out


def _reference(x, w_qkv, w_proj, b_proj, drop_thr, num_heads):
    """Pure-JAX reference mirroring the PyTorch forward.

    Uses the same (bf16-rounded) drop threshold as the kernel; `attn < thr` is
    mathematically identical to torch's hard gumbel_softmax drop criterion
    `g > 2*sigmoid(attn) - 1` with g ~ Logistic(0,1) (see _drop_threshold).
    """
    B, N, C = x.shape
    scale = (C // num_heads) ** (-0.5)
    qkv = x @ w_qkv
    q, k, v = qkv[..., :C], qkv[..., C:2 * C], qkv[..., 2 * C:]
    attn = jnp.einsum('bnc,bmc->bnm', q, k) * scale
    attn = jnp.where(attn < drop_thr.astype(jnp.float32), attn - 100.0, attn)
    attn = jax.nn.softmax(attn, axis=-1)
    y = jnp.einsum('bnm,bmc->bnc', attn, v)
    y = jnp.transpose(y, (0, 2, 1)).reshape(B, N, C)
    return y @ w_proj + b_proj.reshape(1, 1, C)


if __name__ == "__main__":
    B, N, C, H = 2, 512, 32, 4            # dim=32, num_heads=4 -> head_dim=8

    key = jax.random.PRNGKey(0)
    k1, k2, k3, k4, k5 = jax.random.split(key, 5)

    x = jax.random.normal(k1, (B, N, C), jnp.float32)
    # nn.Linear(dim, 3*dim, bias=False) / nn.Linear(dim, dim); weights stored (in, out).
    w_qkv = jax.random.normal(k2, (C, 3 * C), jnp.float32) * 0.1
    w_proj = jax.random.normal(k3, (C, C), jnp.float32) * 0.1
    b_proj = jax.random.normal(k4, (C,), jnp.float32) * 0.1
    # Logistic noise == difference of the two i.i.d. Gumbel draws of gumbel_softmax.
    g_logistic = jax.random.logistic(k5, (B, N, N), jnp.float32)

    out = deformable_attention(x, w_qkv, w_proj, b_proj, g_logistic, H,
                               tq=256, tk=256)
    jax.block_until_ready(out)

    thr = _drop_threshold(g_logistic)     # same bf16-rounded threshold as the kernel
    ref = _reference(x, w_qkv, w_proj, b_proj, thr, H)
    assert out.shape == (B, N, C)
    # Tolerance covers the bf16 p/v MXU inputs; everything feeding the drop
    # decision stays in f32, so the masking matches the reference.
    assert bool(jnp.allclose(out, ref, atol=5e-3, rtol=5e-3)), "mismatch vs reference"

    print("KERNEL_OK")
</pallas_src>

<mosaic_0001>
module attributes {stable_mosaic.version = 11 : i64} {
  func.func @_deformable_attn_kernel(%arg0: i32, %arg1: i32, %arg2: i32, %arg3: memref<1x256x32xf32, #tpu.memory_space<vmem>>, %arg4: memref<1x256x32xf32, #tpu.memory_space<vmem>>, %arg5: memref<1x256x256xbf16, #tpu.memory_space<vmem>>, %arg6: memref<32x32xf32, #tpu.memory_space<vmem>>, %arg7: memref<32x64xf32, #tpu.memory_space<vmem>>, %arg8: memref<128x128xf32, #tpu.memory_space<vmem>>, %arg9: memref<1x128xf32, #tpu.memory_space<vmem>>, %arg10: memref<1x64x128xf32, #tpu.memory_space<vmem>>, %arg11: memref<256x32xf32, #tpu.memory_space<vmem>>, %arg12: memref<256x1xf32, #tpu.memory_space<vmem>>, %arg13: memref<256x1xf32, #tpu.memory_space<vmem>>, %arg14: memref<256x32xf32, #tpu.memory_space<vmem>>) attributes {dimension_semantics = [#tpu.dimension_semantics<parallel>, #tpu.dimension_semantics<parallel>, #tpu.dimension_semantics<arbitrary>], iteration_bounds = array<i64: 2, 2, 2>, scalar_prefetch = 0 : i64, scratch_operands = 4 : i64, tpu.core_type = #tpu.core_type<tc>, window_params = [{transform_indices = @transform_0, window_bounds = array<i64: 1, 256, 32>}, {transform_indices = @transform_1, window_bounds = array<i64: 1, 256, 32>}, {transform_indices = @transform_2, window_bounds = array<i64: 1, 256, 256>}, {pipeline_mode = #tpu.pipeline_mode<synchronous>, transform_indices = @transform_3, window_bounds = array<i64: 32, 32>}, {pipeline_mode = #tpu.pipeline_mode<synchronous>, transform_indices = @transform_4, window_bounds = array<i64: 32, 64>}, {pipeline_mode = #tpu.pipeline_mode<synchronous>, transform_indices = @transform_5, window_bounds = array<i64: 128, 128>}, {pipeline_mode = #tpu.pipeline_mode<synchronous>, transform_indices = @transform_6, window_bounds = array<i64: 1, 128>}, {transform_indices = @transform_7, window_bounds = array<i64: 1, 64, 128>}]} {
    %c0_i32 = arith.constant 0 : i32
    %0 = arith.cmpi eq, %arg2, %c0_i32 : i32
    %1 = arith.extui %0 : i1 to i32
    %c0_i32_0 = arith.constant 0 : i32
    %2 = arith.cmpi ne, %1, %c0_i32_0 : i32
    scf.if %2 {
      %c0_28 = arith.constant 0 : index
      %c0_29 = arith.constant 0 : index
      %c0_30 = arith.constant 0 : index
      %45 = vector.load %arg3[%c0_28, %c0_29, %c0_30] : memref<1x256x32xf32, #tpu.memory_space<vmem>>, vector<1x256x32xf32>
      %46 = vector.shape_cast %45 : vector<1x256x32xf32> to vector<256x32xf32>
      %c0_31 = arith.constant 0 : index
      %c0_32 = arith.constant 0 : index
      %47 = vector.load %arg6[%c0_31, %c0_32] : memref<32x32xf32, #tpu.memory_space<vmem>>, vector<32x32xf32>
      %cst_33 = arith.constant dense<0.000000e+00> : vector<256x32xf32>
      %48 = tpu.matmul %46, %47, %cst_33 {dimension_numbers = #tpu.dot_dimension_numbers<[1], [0], [0], [1], [0, 0, 1, 1], [], []>} : vector<256x32xf32>, vector<32x32xf32>, vector<256x32xf32> -> vector<256x32xf32>
      %c0_34 = arith.constant 0 : index
      %c0_35 = arith.constant 0 : index
      %49 = vector.load %arg11[%c0_34, %c0_35] : memref<256x32xf32, #tpu.memory_space<vmem>>, vector<256x32xf32>
      tpu.vector_store %arg11[%c0_34, %c0_35], %48 {strides = array<i32>} : memref<256x32xf32, #tpu.memory_space<vmem>>, vector<256x32xf32>,
      %cst_36 = arith.constant 0xFF800000 : f32
      %50 = vector.broadcast %cst_36 : f32 to vector<256x1xf32>
      %c0_37 = arith.constant 0 : index
      %c0_38 = arith.constant 0 : index
      %51 = vector.load %arg12[%c0_37, %c0_38] : memref<256x1xf32, #tpu.memory_space<vmem>>, vector<256x1xf32>
      tpu.vector_store %arg12[%c0_37, %c0_38], %50 {strides = array<i32>} : memref<256x1xf32, #tpu.memory_space<vmem>>, vector<256x1xf32>,
      %cst_39 = arith.constant 0.000000e+00 : f32
      %52 = vector.broadcast %cst_39 : f32 to vector<256x1xf32>
      %c0_40 = arith.constant 0 : index
      %c0_41 = arith.constant 0 : index
      %53 = vector.load %arg13[%c0_40, %c0_41] : memref<256x1xf32, #tpu.memory_space<vmem>>, vector<256x1xf32>
      tpu.vector_store %arg13[%c0_40, %c0_41], %52 {strides = array<i32>} : memref<256x1xf32, #tpu.memory_space<vmem>>, vector<256x1xf32>,
      %cst_42 = arith.constant 0.000000e+00 : f32
      %54 = vector.broadcast %cst_42 : f32 to vector<256x32xf32>
      %c0_43 = arith.constant 0 : index
      %c0_44 = arith.constant 0 : index
      %55 = vector.load %arg14[%c0_43, %c0_44] : memref<256x32xf32, #tpu.memory_space<vmem>>, vector<256x32xf32>
      tpu.vector_store %arg14[%c0_43, %c0_44], %54 {strides = array<i32>} : memref<256x32xf32, #tpu.memory_space<vmem>>, vector<256x32xf32>,
    } else {
    }
    %c0 = arith.constant 0 : index
    %c0_1 = arith.constant 0 : index
    %c0_2 = arith.constant 0 : index
    %3 = vector.load %arg4[%c0, %c0_1, %c0_2] : memref<1x256x32xf32, #tpu.memory_space<vmem>>, vector<1x256x32xf32>
    %4 = vector.shape_cast %3 : vector<1x256x32xf32> to vector<256x32xf32>
    %c0_3 = arith.constant 0 : index
    %c0_4 = arith.constant 0 : index
    %5 = vector.load %arg7[%c0_3, %c0_4] : memref<32x64xf32, #tpu.memory_space<vmem>>, vector<32x64xf32>
    %cst = arith.constant dense<0.000000e+00> : vector<256x64xf32>
    %6 = tpu.matmul %4, %5, %cst {dimension_numbers = #tpu.dot_dimension_numbers<[1], [0], [0], [1], [0, 0, 1, 1], [], []>} : vector<256x32xf32>, vector<32x64xf32>, vector<256x64xf32> -> vector<256x64xf32>
    %7 = vector.extract_strided_slice %6 {offsets = [0, 0], sizes = [256, 32], strides = [1, 1]} : vector<256x64xf32> to vector<256x32xf32>
    %8 = vector.extract_strided_slice %6 {offsets = [0, 32], sizes = [256, 32], strides = [1, 1]} : vector<256x64xf32> to vector<256x32xf32>
    %c0_5 = arith.constant 0 : index
    %c0_6 = arith.constant 0 : index
    %9 = vector.load %arg11[%c0_5, %c0_6] : memref<256x32xf32, #tpu.memory_space<vmem>>, vector<256x32xf32>
    %cst_7 = arith.constant dense<0.000000e+00> : vector<256x256xf32>
    %10 = tpu.matmul %9, %7, %cst_7 {dimension_numbers = #tpu.dot_dimension_numbers<[1], [1], [0], [0], [0, 0, 1, 0], [], []>} : vector<256x32xf32>, vector<256x32xf32>, vector<256x256xf32> -> vector<256x256xf32>
    %c0_8 = arith.constant 0 : index
    %c0_9 = arith.constant 0 : index
    %c0_10 = arith.constant 0 : index
    %11 = vector.load %arg5[%c0_8, %c0_9, %c0_10] : memref<1x256x256xbf16, #tpu.memory_space<vmem>>, vector<1x256x256xbf16>
    %12 = vector.shape_cast %11 : vector<1x256x256xbf16> to vector<256x256xbf16>
    %13 = arith.extf %12 : vector<256x256xbf16> to vector<256x256xf32>
    %14 = arith.cmpf olt, %10, %13 : vector<256x256xf32>
    %cst_11 = arith.constant 1.000000e+02 : f32
    %15 = vector.broadcast %cst_11 : f32 to vector<256x256xf32>
    %16 = arith.subf %10, %15 : vector<256x256xf32>
    %17 = arith.select %14, %16, %10 : vector<256x256xi1>, vector<256x256xf32>
    %c0_12 = arith.constant 0 : index
    %c0_13 = arith.constant 0 : index
    %18 = vector.load %arg12[%c0_12, %c0_13] : memref<256x1xf32, #tpu.memory_space<vmem>>, vector<256x1xf32>
    %cst_14 = arith.constant dense<0xFF800000> : vector<256xf32>
    %19 = vector.multi_reduction <maximumf>, %17, %cst_14 [1] : vector<256x256xf32> to vector<256xf32>
    %20 = vector.shape_cast %19 : vector<256xf32> to vector<256x1xf32>
    %21 = arith.maximumf %18, %20 : vector<256x1xf32>
    %22 = arith.subf %18, %21 : vector<256x1xf32>
    %23 = math.exp %22 : vector<256x1xf32>
    %24 = vector.broadcast %21 : vector<256x1xf32> to vector<256x256xf32>
    %25 = arith.subf %17, %24 : vector<256x256xf32>
    %26 = math.exp %25 : vector<256x256xf32>
    %c0_15 = arith.constant 0 : index
    %c0_16 = arith.constant 0 : index
    %27 = vector.load %arg13[%c0_15, %c0_16] : memref<256x1xf32, #tpu.memory_space<vmem>>, vector<256x1xf32>
    %28 = arith.mulf %23, %27 : vector<256x1xf32>
    %cst_17 = arith.constant dense<0.000000e+00> : vector<256xf32>
    %29 = vector.multi_reduction <add>, %26, %cst_17 [1] : vector<256x256xf32> to vector<256xf32>
    %30 = vector.shape_cast %29 : vector<256xf32> to vector<256x1xf32>
    %31 = arith.addf %28, %30 : vector<256x1xf32>
    %c0_18 = arith.constant 0 : index
    %c0_19 = arith.constant 0 : index
    %32 = vector.load %arg13[%c0_18, %c0_19] : memref<256x1xf32, #tpu.memory_space<vmem>>, vector<256x1xf32>
    tpu.vector_store %arg13[%c0_18, %c0_19], %31 {strides = array<i32>} : memref<256x1xf32, #tpu.memory_space<vmem>>, vector<256x1xf32>,
    %c0_20 = arith.constant 0 : index
    %c0_21 = arith.constant 0 : index
    %33 = vector.load %arg14[%c0_20, %c0_21] : memref<256x32xf32, #tpu.memory_space<vmem>>, vector<256x32xf32>
    %34 = vector.broadcast %23 : vector<256x1xf32> to vector<256x32xf32>
    %35 = arith.mulf %34, %33 : vector<256x32xf32>
    %36 = arith.truncf %26 : vector<256x256xf32> to vector<256x256xbf16>
    %37 = arith.truncf %8 : vector<256x32xf32> to vector<256x32xbf16>
    %cst_22 = arith.constant dense<0.000000e+00> : vector<256x32xf32>
    %38 = tpu.matmul %36, %37, %cst_22 {dimension_numbers = #tpu.dot_dimension_numbers<[1], [0], [0], [1], [0, 0, 1, 1], [], []>} : vector<256x256xbf16>, vector<256x32xbf16>, vector<256x32xf32> -> vector<256x32xf32>
    %39 = arith.addf %35, %38 : vector<256x32xf32>
    %c0_23 = arith.constant 0 : index
    %c0_24 = arith.constant 0 : index
    %40 = vector.load %arg14[%c0_23, %c0_24] : memref<256x32xf32, #tpu.memory_space<vmem>>, vector<256x32xf32>
    tpu.vector_store %arg14[%c0_23, %c0_24], %39 {strides = array<i32>} : memref<256x32xf32, #tpu.memory_space<vmem>>, vector<256x32xf32>,
    %c0_25 = arith.constant 0 : index
    %c0_26 = arith.constant 0 : index
    %41 = vector.load %arg12[%c0_25, %c0_26] : memref<256x1xf32, #tpu.memory_space<vmem>>, vector<256x1xf32>
    tpu.vector_store %arg12[%c0_25, %c0_26], %21 {strides = array<i32>} : memref<256x1xf32, #tpu.memory_space<vmem>>, vector<256x1xf32>,
    %c1_i32 = arith.constant 1 : i32
    %42 = arith.cmpi eq, %arg2, %c1_i32 : i32
    %43 = arith.extui %42 : i1 to i32
    %c0_i32_27 = arith.constant 0 : i32
    %44 = arith.cmpi ne, %43, %c0_i32_27 : i32
    scf.if %44 {
      %c0_28 = arith.constant 0 : index
      %c0_29 = arith.constant 0 : index
      %45 = vector.load %arg14[%c0_28, %c0_29] : memref<256x32xf32, #tpu.memory_space<vmem>>, vector<256x32xf32>
      %c0_30 = arith.constant 0 : index
      %c0_31 = arith.constant 0 : index
      %46 = vector.load %arg13[%c0_30, %c0_31] : memref<256x1xf32, #tpu.memory_space<vmem>>, vector<256x1xf32>
      %47 = vector.broadcast %46 : vector<256x1xf32> to vector<256x32xf32>
      %48 = arith.divf %45, %47 : vector<256x32xf32>
      %49 = vector.extract_strided_slice %48 {offsets = [0, 0], sizes = [128, 32], strides = [1, 1]} : vector<256x32xf32> to vector<128x32xf32>
      %c0_32 = arith.constant 0 : index
      %c0_33 = arith.constant 0 : index
      %50 = vector.load %arg8[%c0_32, %c0_33] : memref<128x128xf32, #tpu.memory_space<vmem>>, vector<128x128xf32>
      %cst_34 = arith.constant dense<0.000000e+00> : vector<32x128xf32>
      %51 = tpu.matmul %49, %50, %cst_34 {dimension_numbers = #tpu.dot_dimension_numbers<[0], [0], [1], [1], [0, 1, 1, 1], [], []>} : vector<128x32xf32>, vector<128x128xf32>, vector<32x128xf32> -> vector<32x128xf32>
      %52 = vector.extract_strided_slice %48 {offsets = [128, 0], sizes = [128, 32], strides = [1, 1]} : vector<256x32xf32> to vector<128x32xf32>
      %c0_35 = arith.constant 0 : index
      %c0_36 = arith.constant 0 : index
      %53 = vector.load %arg8[%c0_35, %c0_36] : memref<128x128xf32, #tpu.memory_space<vmem>>, vector<128x128xf32>
      %cst_37 = arith.constant dense<0.000000e+00> : vector<32x128xf32>
      %54 = tpu.matmul %52, %53, %cst_37 {dimension_numbers = #tpu.dot_dimension_numbers<[0], [0], [1], [1], [0, 1, 1, 1], [], []>} : vector<128x32xf32>, vector<128x128xf32>, vector<32x128xf32> -> vector<32x128xf32>
      %55 = tpu.concatenate %51, %54 in 0 : vector<32x128xf32>, vector<32x128xf32> -> vector<64x128xf32>
      %c0_38 = arith.constant 0 : index
      %c0_39 = arith.constant 0 : index
      %56 = vector.load %arg9[%c0_38, %c0_39] : memref<1x128xf32, #tpu.memory_space<vmem>>, vector<1x128xf32>
      %57 = vector.broadcast %56 : vector<1x128xf32> to vector<64x128xf32>
      %58 = arith.addf %55, %57 : vector<64x128xf32>
      %c0_40 = arith.constant 0 : index
      %c0_41 = arith.constant 0 : index
      %c0_42 = arith.constant 0 : index
      %59 = vector.load %arg10[%c0_40, %c0_41, %c0_42] : memref<1x64x128xf32, #tpu.memory_space<vmem>>, vector<1x64x128xf32>
      %60 = vector.shape_cast %59 : vector<1x64x128xf32> to vector<64x128xf32>
      %61 = vector.shape_cast %58 : vector<64x128xf32> to vector<1x64x128xf32>
      tpu.vector_store %arg10[%c0_40, %c0_41, %c0_42], %61 {strides = array<i32>} : memref<1x64x128xf32, #tpu.memory_space<vmem>>, vector<1x64x128xf32>,
    } else {
    }
    return
  }
  func.func @transform_0(%arg0: i32, %arg1: i32, %arg2: i32) -> (i32, i32, i32) {
    %c0_i32 = arith.constant 0 : i32
    %c0_i32_0 = arith.constant 0 : i32
    return %arg0, %arg1, %c0_i32 : i32, i32, i32
  }
  func.func @transform_1(%arg0: i32, %arg1: i32, %arg2: i32) -> (i32, i32, i32) {
    %c0_i32 = arith.constant 0 : i32
    %c0_i32_0 = arith.constant 0 : i32
    return %arg0, %arg2, %c0_i32 : i32, i32, i32
  }
  func.func @transform_2(%arg0: i32, %arg1: i32, %arg2: i32) -> (i32, i32, i32) {
    %c0_i32 = arith.constant 0 : i32
    return %arg0, %arg1, %arg2 : i32, i32, i32
  }
  func.func @transform_3(%arg0: i32, %arg1: i32, %arg2: i32) -> (i32, i32) {
    %c0_i32 = arith.constant 0 : i32
    %c0_i32_0 = arith.constant 0 : i32
    %c0_i32_1 = arith.constant 0 : i32
    return %c0_i32, %c0_i32_0 : i32, i32
  }
  func.func @transform_4(%arg0: i32, %arg1: i32, %arg2: i32) -> (i32, i32) {
    %c0_i32 = arith.constant 0 : i32
    %c0_i32_0 = arith.constant 0 : i32
    %c0_i32_1 = arith.constant 0 : i32
    return %c0_i32, %c0_i32_0 : i32, i32
  }
  func.func @transform_5(%arg0: i32, %arg1: i32, %arg2: i32) -> (i32, i32) {
    %c0_i32 = arith.constant 0 : i32
    %c0_i32_0 = arith.constant 0 : i32
    %c0_i32_1 = arith.constant 0 : i32
    return %c0_i32, %c0_i32_0 : i32, i32
  }
  func.func @transform_6(%arg0: i32, %arg1: i32, %arg2: i32) -> (i32, i32) {
    %c0_i32 = arith.constant 0 : i32
    %c0_i32_0 = arith.constant 0 : i32
    %c0_i32_1 = arith.constant 0 : i32
    return %c0_i32, %c0_i32_0 : i32, i32
  }
  func.func @transform_7(%arg0: i32, %arg1: i32, %arg2: i32) -> (i32, i32, i32) {
    %c0_i32 = arith.constant 0 : i32
    %c0_i32_0 = arith.constant 0 : i32
    return %arg0, %arg1, %c0_i32 : i32, i32, i32
  }
}

</mosaic_0001>

<llo_original>
// kernel: tpu_custom_call.1
$region0: #{tpu_custom_call.1}
  #allocation0 [shape = 'u32[]', space=smem, size = 0x4, offset = 0x4, fixed_abs, tag = 'smem constant byte address 0x4 - core index']
  #allocation1 [shape = 'u32[144,128]{1,0:T(1,128)}', space=vmem, size = 0x12000, scoped, tag = 'internal scratch']
  #allocation2 [shape = 'f32[256,32]{1,0:T(8,128)}', space=vmem, size = 0x20000, scoped, tag = 'scratch operand']
  #allocation3 [shape = 'f32[256,1]{1,0:T(8,128)}', space=vmem, size = 0x20000, scoped, tag = 'scratch operand']
  #allocation4 [shape = 'f32[256,1]{1,0:T(8,128)}', space=vmem, size = 0x20000, scoped, tag = 'scratch operand']
  #allocation5 [shape = 'f32[256,32]{1,0:T(8,128)}', space=vmem, size = 0x20000, scoped, tag = 'scratch operand']
  %s0 = inlined_call_operand.vmem [shape: f32[2,512,32], index: 0, kind: input, shape index: {}]
  %s1 = inlined_call_operand.vmem [shape: f32[2,512,32], index: 1, kind: input, shape index: {}]
  %s2 = inlined_call_operand.vmem [shape: bf16[2,512,512], index: 2, kind: input, shape index: {}]
  %s3 = inlined_call_operand.vmem [shape: f32[32,32], index: 3, kind: input, shape index: {}]
  %s4 = inlined_call_operand.vmem [shape: f32[32,64], index: 4, kind: input, shape index: {}]
  %s5 = inlined_call_operand.vmem [shape: f32[128,128], index: 5, kind: input, shape index: {}]
  %s6 = inlined_call_operand.vmem [shape: f32[1,128], index: 6, kind: input, shape index: {}]
  %s7 = inlined_call_operand.hbm [shape: f32[2,128,128], index: 7, kind: output, shape index: {}]
  %s8 = sld [smem:[#allocation0]]
  $region107: #{tpu_custom_call.1} parent=0
    _
  %s10 = ssub.s32 1, %s8
  %s11 = scalar_select 0, %s10, %s8
  $region1: #{tpu_custom_call.1} parent=0
    #allocation6 [shape = 'u8[262144]{0}', space=vmem, size = 0x40000, scoped, tag = 'input window, operand 2']
    #allocation7 [shape = 'u8[65536]{0}', space=vmem, size = 0x10000, scoped, tag = 'output window, operand 0']
    #allocation8 [shape = 's32[2]{0}', space=sflag, size = 0x8, scoped, tag = 'scoped memory for tpu_custom_call.1']
    %12 = vsyncpa [#allocation8], 0
    %s13 = scalar_lea.sflag [#allocation8], 1
    %14 = vsyncpa %s13, 0
    loop: start=0, step=1, limit=10
    $region2: #{tpu_custom_call.1} parent=1 // loop_pre_header
      _
    $region3: #{tpu_custom_call.1} parent=1 // loop_header
      %s16 = sphi 0, %s20
      %p17 = scmp.ge.s32.totalorder %s16, 10
      %s23 = sphi 0, %s42
      %s24 = sphi 0, %s38
      %s25 = sphi 0, %s34
      %s26 = sphi 0, %s23
      %s27 = sphi 0, %s24
      %s28 = sphi 0, %s25
      %s29 = sphi 0, %s26
      %s30 = sphi 0, %s27
      %s31 = sphi 0, %s28
      %s47 = sphi 0, %s49
      %s50 = sphi 0, %s47
      %s51 = sphi 0, %s50
      %s67 = sphi 0, %s51
      %s75 = sphi 0, %s77
      %s78 = sphi 0, %s75
      %s79 = sphi 0, %s78
      %s95 = sphi 0, %s79
      %s105 = sphi 0, %s107
      %s108 = sphi 0, %s105
      %s109 = sphi 0, %s108
      %s125 = sphi 0, %s109
      %s129 = sphi 0, %s129
      %s131 = sphi 0, %s129
      %s132 = sphi 0, %s131
      %s146 = sphi 0, %s132
      %s150 = sphi 0, %s150
      %s152 = sphi 0, %s150
      %s153 = sphi 0, %s152
      %s167 = sphi 0, %s153
      %s171 = sphi 0, %s171
      %s173 = sphi 0, %s171
      %s174 = sphi 0, %s173
      %s188 = sphi 0, %s174
      %s192 = sphi 0, %s192
      %s194 = sphi 0, %s192
      %s195 = sphi 0, %s194
      %s209 = sphi 0, %s195
      %s217 = sphi 0, %s219
      %s220 = sphi 0, %s217
      %s221 = sphi 0, %s220
      %s237 = sphi 0, %s221
    $region4: #{tpu_custom_call.1} parent=1 // loop_header_branch
      %19 = sbr.rel (%p17) target = $region8
    $region5: #{tpu_custom_call.1} parent=1 // loop_body
      %s21 = ssub.s32 %s16, 1
      %s22 = ssub.s32 %s16, 2
      %s32 = sadd.s32 1, %s25
      %p33 = scmp.ge.s32.totalorder %s32, 2
      %s34 = scalar_select %p33, 0, %s32
      %s35 = sadd.s32 1, %s24
      %s36 = scalar_select %p33, %s35, %s24
      %p37 = scmp.ge.s32.totalorder %s36, 2
      %s38 = scalar_select %p37, 0, %s36
      %s39 = sadd.s32 1, %s23
      %s40 = scalar_select %p37, %s39, %s23
      %p41 = scmp.ge.s32.totalorder %s40, 2
      %s42 = scalar_select %p41, 0, %s40
      %s43 = ssub.s32 %s23, %s42
      %s44 = ssub.s32 %s24, %s38
      %s45 = sor.u32 %s43, %s44
      %p46 = scmp.eq.s32.totalorder %s45, 0
      %s48 = sadd.s32 %s47, 1
      %s49 = scalar_select %p46, %s47, %s48
      %p52 = pneg %p46
      %p53 = scmp.eq.s32.totalorder %s16, 7
      %p54 = por %p52, %p53
      %p55 = scmp.ne.s32.totalorder %s47, %s50
      %p56 = scmp.eq.s32.totalorder %s16, 0
      %p57 = por %p55, %p56
      %p58 = scmp.ne.s32.totalorder %s47, %s50
      %p59 = scmp.eq.s32.totalorder %s21, 7
      %p60 = por %p58, %p59
      %p61 = scmp.ne.s32.totalorder %s50, %s51
      %p62 = scmp.eq.s32.totalorder %s21, 0
      %p63 = por %p61, %p62
      %p64 = scmp.ne.s32.totalorder %s50, %s51
      %p65 = scmp.eq.s32.totalorder %s22, 7
      %p66 = por %p64, %p65
      %p68 = scmp.ne.s32.totalorder %s51, %s67
      %p69 = scmp.eq.s32.totalorder %s22, 0
      %p70 = por %p68, %p69
      %s71 = ssub.s32 %s23, %s42
      %s72 = ssub.s32 %s25, %s34
      %s73 = sor.u32 %s71, %s72
      %p74 = scmp.eq.s32.totalorder %s73, 0
      %s76 = sadd.s32 %s75, 1
      %s77 = scalar_select %p74, %s75, %s76
      %p80 = pneg %p74
      %p81 = scmp.eq.s32.totalorder %s16, 7
      %p82 = por %p80, %p81
      %p83 = scmp.ne.s32.totalorder %s75, %s78
      %p84 = scmp.eq.s32.totalorder %s16, 0
      %p85 = por %p83, %p84
      %p86 = scmp.ne.s32.totalorder %s75, %s78
      %p87 = scmp.eq.s32.totalorder %s21, 7
      %p88 = por %p86, %p87
      %p89 = scmp.ne.s32.totalorder %s78, %s79
      %p90 = scmp.eq.s32.totalorder %s21, 0
      %p91 = por %p89, %p90
      %p92 = scmp.ne.s32.totalorder %s78, %s79
      %p93 = scmp.eq.s32.totalorder %s22, 7
      %p94 = por %p92, %p93
      %p96 = scmp.ne.s32.totalorder %s79, %s95
      %p97 = scmp.eq.s32.totalorder %s22, 0
      %p98 = por %p96, %p97
      %s99 = ssub.s32 %s23, %s42
      %s100 = ssub.s32 %s24, %s38
      %s101 = sor.u32 %s99, %s100
      %s102 = ssub.s32 %s25, %s34
      %s103 = sor.u32 %s101, %s102
      %p104 = scmp.eq.s32.totalorder %s103, 0
      %s106 = sadd.s32 %s105, 1
      %s107 = scalar_select %p104, %s105, %s106
      %p110 = pneg %p104
      %p111 = scmp.eq.s32.totalorder %s16, 7
      %p112 = por %p110, %p111
      %p113 = scmp.ne.s32.totalorder %s105, %s108
      %p114 = scmp.eq.s32.totalorder %s16, 0
      %p115 = por %p113, %p114
      %p116 = scmp.ne.s32.totalorder %s105, %s108
      %p117 = scmp.eq.s32.totalorder %s21, 7
      %p118 = por %p116, %p117
      %p119 = scmp.ne.s32.totalorder %s108, %s109
      %p120 = scmp.eq.s32.totalorder %s21, 0
      %p121 = por %p119, %p120
      %p122 = scmp.ne.s32.totalorder %s108, %s109
      %p123 = scmp.eq.s32.totalorder %s22, 7
      %p124 = por %p122, %p123
      %p126 = scmp.ne.s32.totalorder %s109, %s125
      %p127 = scmp.eq.s32.totalorder %s22, 0
      %p128 = por %p126, %p127
      %s130 = sadd.s32 %s129, 1
      %p133 = scmp.eq.s32.totalorder %s16, 7
      %p134 = scmp.ne.s32.totalorder %s129, %s131
      %p135 = scmp.eq.s32.totalorder %s16, 0
      %p136 = por %p134, %p135
      %p137 = scmp.ne.s32.totalorder %s129, %s131
      %p138 = scmp.eq.s32.totalorder %s21, 7
      %p139 = por %p137, %p138
      %p140 = scmp.ne.s32.totalorder %s131, %s132
      %p141 = scmp.eq.s32.totalorder %s21, 0
      %p142 = por %p140, %p141
      %p143 = scmp.ne.s32.totalorder %s131, %s132
      %p144 = scmp.eq.s32.totalorder %s22, 7
      %p145 = por %p143, %p144
      %p147 = scmp.ne.s32.totalorder %s132, %s146
      %p148 = scmp.eq.s32.totalorder %s22, 0
      %p149 = por %p147, %p148
      %s151 = sadd.s32 %s150, 1
      %p154 = scmp.eq.s32.totalorder %s16, 7
      %p155 = scmp.ne.s32.totalorder %s150, %s152
      %p156 = scmp.eq.s32.totalorder %s16, 0
      %p157 = por %p155, %p156
      %p158 = scmp.ne.s32.totalorder %s150, %s152
      %p159 = scmp.eq.s32.totalorder %s21, 7
      %p160 = por %p158, %p159
      %p161 = scmp.ne.s32.totalorder %s152, %s153
      %p162 = scmp.eq.s32.totalorder %s21, 0
      %p163 = por %p161, %p162
      %p164 = scmp.ne.s32.totalorder %s152, %s153
      %p165 = scmp.eq.s32.totalorder %s22, 7
      %p166 = por %p164, %p165
      %p168 = scmp.ne.s32.totalorder %s153, %s167
      %p169 = scmp.eq.s32.totalorder %s22, 0
      %p170 = por %p168, %p169
      %s172 = sadd.s32 %s171, 1
      %p175 = scmp.eq.s32.totalorder %s16, 7
      %p176 = scmp.ne.s32.totalorder %s171, %s173
      %p177 = scmp.eq.s32.totalorder %s16, 0
      %p178 = por %p176, %p177
      %p179 = scmp.ne.s32.totalorder %s171, %s173
      %p180 = scmp.eq.s32.totalorder %s21, 7
      %p181 = por %p179, %p180
      %p182 = scmp.ne.s32.totalorder %s173, %s174
      %p183 = scmp.eq.s32.totalorder %s21, 0
      %p184 = por %p182, %p183
      %p185 = scmp.ne.s32.totalorder %s173, %s174
      %p186 = scmp.eq.s32.totalorder %s22, 7
      %p187 = por %p185, %p186
      %p189 = scmp.ne.s32.totalorder %s174, %s188
      %p190 = scmp.eq.s32.totalorder %s22, 0
      %p191 = por %p189, %p190
      %s193 = sadd.s32 %s192, 1
      %p196 = scmp.eq.s32.totalorder %s16, 7
      %p197 = scmp.ne.s32.totalorder %s192, %s194
      %p198 = scmp.eq.s32.totalorder %s16, 0
      %p199 = por %p197, %p198
      %p200 = scmp.ne.s32.totalorder %s192, %s194
      %p201 = scmp.eq.s32.totalorder %s21, 7
      %p202 = por %p200, %p201
      %p203 = scmp.ne.s32.totalorder %s194, %s195
      %p204 = scmp.eq.s32.totalorder %s21, 0
      %p205 = por %p203, %p204
      %p206 = scmp.ne.s32.totalorder %s194, %s195
      %p207 = scmp.eq.s32.totalorder %s22, 7
      %p208 = por %p206, %p207
      %p210 = scmp.ne.s32.totalorder %s195, %s209
      %p211 = scmp.eq.s32.totalorder %s22, 0
      %p212 = por %p210, %p211
      %s213 = ssub.s32 %s23, %s42
      %s214 = ssub.s32 %s24, %s38
      %s215 = sor.u32 %s213, %s214
      %p216 = scmp.eq.s32.totalorder %s215, 0
      %s218 = sadd.s32 %s217, 1
      %s219 = scalar_select %p216, %s217, %s218
      %p222 = pneg %p216
      %p223 = scmp.eq.s32.totalorder %s16, 7
      %p224 = por %p222, %p223
      %p225 = scmp.ne.s32.totalorder %s217, %s220
      %p226 = scmp.eq.s32.totalorder %s16, 0
      %p227 = por %p225, %p226
      %p228 = scmp.ne.s32.totalorder %s217, %s220
      %p229 = scmp.eq.s32.totalorder %s21, 7
      %p230 = por %p228, %p229
      %p231 = scmp.ne.s32.totalorder %s220, %s221
      %p232 = scmp.eq.s32.totalorder %s21, 0
      %p233 = por %p231, %p232
      %p234 = scmp.ne.s32.totalorder %s220, %s221
      %p235 = scmp.eq.s32.totalorder %s22, 7
      %p236 = por %p234, %p235
      %p238 = scmp.ne.s32.totalorder %s221, %s237
      %p239 = scmp.eq.s32.totalorder %s22, 0
      %p240 = por %p238, %p239
      %p241 = scmp.le.s32.totalorder 1, %s16
      %p242 = scmp.lt.s32.totalorder %s16, 9
      %p243 = pnand %p241, %p242
      %p244 = pneg %p243
      // Predicated region
      $region9: #{tpu_custom_call.1} parent=5 // pred_check
        _
      $region10: #{tpu_custom_call.1} parent=5 // pred_check_branch
        %246 = sbr.rel (%p243) target = $region12
      $region11: #{tpu_custom_call.1} parent=5 // pred_region
        %s247 = ssub.s32 %s16, 1
        // Predicated region
        $region13: #{tpu_custom_call.1} parent=11 // pred_check
          %p248 = pneg %p142
        $region14: #{tpu_custom_call.1} parent=11 // pred_check_branch
          %250 = sbr.rel (%p248) target = $region16
        $region15: #{tpu_custom_call.1} parent=11 // pred_region
          _
        $region16: #{tpu_custom_call.1} parent=11 // pred_fallthru
          _
        // Predicated region
        $region17: #{tpu_custom_call.1} parent=11 // pred_check
          %p251 = pneg %p163
        $region18: #{tpu_custom_call.1} parent=11 // pred_check_branch
          %253 = sbr.rel (%p251) target = $region20
        $region19: #{tpu_custom_call.1} parent=11 // pred_region
          _
        $region20: #{tpu_custom_call.1} parent=11 // pred_fallthru
          _
        // Predicated region
        $region21: #{tpu_custom_call.1} parent=11 // pred_check
          %p254 = pneg %p184
        $region22: #{tpu_custom_call.1} parent=11 // pred_check_branch
          %256 = sbr.rel (%p254) target = $region24
        $region23: #{tpu_custom_call.1} parent=11 // pred_region
          _
        $region24: #{tpu_custom_call.1} parent=11 // pred_fallthru
          _
        // Predicated region
        $region25: #{tpu_custom_call.1} parent=11 // pred_check
          %p257 = pneg %p205
        $region26: #{tpu_custom_call.1} parent=11 // pred_check_branch
          %259 = sbr.rel (%p257) target = $region28
        $region27: #{tpu_custom_call.1} parent=11 // pred_region
          _
        $region28: #{tpu_custom_call.1} parent=11 // pred_fallthru
          _
      $region12: #{tpu_custom_call.1} parent=5 // pred_fallthru
        _
      %p260 = scmp.lt.s32.totalorder %s16, 8
      // Predicated region
      $region29: #{tpu_custom_call.1} parent=5 // pred_check
        %p261 = pneg %p260
      $region30: #{tpu_custom_call.1} parent=5 // pred_check_branch
        %263 = sbr.rel (%p261) target = $region32
      $region31: #{tpu_custom_call.1} parent=5 // pred_region
        // Predicated region
        $region33: #{tpu_custom_call.1} parent=31 // pred_check
          %p264 = pneg %p57
        $region34: #{tpu_custom_call.1} parent=31 // pred_check_branch
          %266 = sbr.rel (%p264) target = $region36
        $region35: #{tpu_custom_call.1} parent=31 // pred_region
          %s267 = smul.u32 32, %s24
          %p268 = scmp.lt.s32.totalorder %s23, 1
          %s269 = scalar_select %p268, %s23, 1
          %p270 = scmp.lt.s32.totalorder %s267, 63
          %s271 = scalar_select %p270, %s267, 63
          %s272 = smul.addr %s269, 64
          %s273 = sadd.s32 %s271, %s272
          %s274 = smul.addr %s273, 8
          %s275 = scalar_lea.vmem %s0, %s274
          %s276 = smul.u32 32, %s24
        $region36: #{tpu_custom_call.1} parent=31 // pred_fallthru
          _
        // Predicated region
        $region37: #{tpu_custom_call.1} parent=31 // pred_check
          %p277 = pneg %p85
        $region38: #{tpu_custom_call.1} parent=31 // pred_check_branch
          %279 = sbr.rel (%p277) target = $region40
        $region39: #{tpu_custom_call.1} parent=31 // pred_region
          %s280 = smul.u32 32, %s25
          %p281 = scmp.lt.s32.totalorder %s23, 1
          %s282 = scalar_select %p281, %s23, 1
          %p283 = scmp.lt.s32.totalorder %s280, 63
          %s284 = scalar_select %p283, %s280, 63
          %s285 = smul.addr %s282, 64
          %s286 = sadd.s32 %s284, %s285
          %s287 = smul.addr %s286, 8
          %s288 = scalar_lea.vmem %s1, %s287
          %s289 = smul.u32 32, %s25
        $region40: #{tpu_custom_call.1} parent=31 // pred_fallthru
          _
        // Predicated region
        $region41: #{tpu_custom_call.1} parent=31 // pred_check
          %p290 = pneg %p115
        $region42: #{tpu_custom_call.1} parent=31 // pred_check_branch
          %292 = sbr.rel (%p290) target = $region44
        $region43: #{tpu_custom_call.1} parent=31 // pred_region
          %s293 = sand.u32 %s105, 1
          %s294 = sand.u32 %s105, 1
          %s295 = smul.addr %s294, 256
          %s296 = scalar_lea.vmem [#allocation6], %s295
          %s297 = smul.u32 32, %s24
          %s298 = smul.u32 2, %s25
          %s299 = smul.addr %s297, 4
          %s300 = sadd.s32 %s298, %s299
          %s301 = smul.addr %s23, 256
          %s302 = sadd.s32 %s300, %s301
          %s303 = smul.addr %s302, 4
          %s304 = scalar_lea.vmem %s2, %s303
          // Predicated region
          $region45: #{tpu_custom_call.1} parent=43 // pred_check
            _
          $region46: #{tpu_custom_call.1} parent=43 // pred_check_branch
            %306 = sbr.rel (0) target = $region48
          $region47: #{tpu_custom_call.1} parent=43 // pred_region
            // Predicated region
            $region49: #{tpu_custom_call.1} parent=47 // pred_check
              _
            $region50: #{tpu_custom_call.1} parent=47 // pred_check_branch
              %308 = sbr.rel (0) target = $region52
            $region51: #{tpu_custom_call.1} parent=47 // pred_region
              // Predicated region
              $region64: #{tpu_custom_call.1} parent=51 // pred_check
                _
              $region65: #{tpu_custom_call.1} parent=51 // pred_check_branch
                %386 = sbr.rel (0) target = $region67
              $region66: #{tpu_custom_call.1} parent=51 // pred_region
                loop: start=0, step=1, limit=1
                $region68: #{tpu_custom_call.1} parent=66 // loop_pre_header
                  _
                $region69: #{tpu_custom_call.1} parent=66 // loop_header
                  %s388 = sphi 0, %s392
                  %p389 = scmp.ge.s32.totalorder %s388, 1
                  %s393 = sphi %s304, %s304
                  %s394 = sphi %s296, %s296
                $region70: #{tpu_custom_call.1} parent=66 // loop_header_branch
                  %391 = sbr.rel (%p389) target = $region74
                $region71: #{tpu_custom_call.1} parent=66 // loop_body
                  %v395 = vld [vmem:[%s393] sm:$0xff]
                  %396 = vst [vmem:[%s394] sm:$0xff] %v395
                  %v397 = vld [vmem:[%s393 + $0x10] sm:$0xff]
                  %398 = vst [vmem:[%s394 + $0x8] sm:$0xff] %v397
                  %v399 = vld [vmem:[%s393 + $0x20] sm:$0xff]
                  %400 = vst [vmem:[%s394 + $0x10] sm:$0xff] %v399
                  %v401 = vld [vmem:[%s393 + $0x30] sm:$0xff]
                  %402 = vst [vmem:[%s394 + $0x18] sm:$0xff] %v401
                  %v403 = vld [vmem:[%s393 + $0x40] sm:$0xff]
                  %404 = vst [vmem:[%s394 + $0x20] sm:$0xff] %v403
                  %v405 = vld [vmem:[%s393 + $0x50] sm:$0xff]
                  %406 = vst [vmem:[%s394 + $0x28] sm:$0xff] %v405
                  %v407 = vld [vmem:[%s393 + $0x60] sm:$0xff]
                  %408 = vst [vmem:[%s394 + $0x30] sm:$0xff] %v407
                  %v409 = vld [vmem:[%s393 + $0x70] sm:$0xff]
                  %410 = vst [vmem:[%s394 + $0x38] sm:$0xff] %v409
                  %v411 = vld [vmem:[%s393 + $0x80] sm:$0xff]
                  %412 = vst [vmem:[%s394 + $0x40] sm:$0xff] %v411
                  %v413 = vld [vmem:[%s393 + $0x90] sm:$0xff]
                  %414 = vst [vmem:[%s394 + $0x48] sm:$0xff] %v413
                  %v415 = vld [vmem:[%s393 + $0xa0] sm:$0xff]
                  %416 = vst [vmem:[%s394 + $0x50] sm:$0xff] %v415
                  %v417 = vld [vmem:[%s393 + $0xb0] sm:$0xff]
                  %418 = vst [vmem:[%s394 + $0x58] sm:$0xff] %v417
                  %v419 = vld [vmem:[%s393 + $0xc0] sm:$0xff]
                  %420 = vst [vmem:[%s394 + $0x60] sm:$0xff] %v419
                  %v421 = vld [vmem:[%s393 + $0xd0] sm:$0xff]
                  %422 = vst [vmem:[%s394 + $0x68] sm:$0xff] %v421
                  %v423 = vld [vmem:[%s393 + $0xe0] sm:$0xff]
                  %424 = vst [vmem:[%s394 + $0x70] sm:$0xff] %v423
                  %v425 = vld [vmem:[%s393 + $0xf0] sm:$0xff]
                  %426 = vst [vmem:[%s394 + $0x78] sm:$0xff] %v425
                  %v427 = vld [vmem:[%s393 + $0x100] sm:$0xff]
                  %428 = vst [vmem:[%s394 + $0x80] sm:$0xff] %v427
                  %v429 = vld [vmem:[%s393 + $0x110] sm:$0xff]
                  %430 = vst [vmem:[%s394 + $0x88] sm:$0xff] %v429
                  %v431 = vld [vmem:[%s393 + $0x120] sm:$0xff]
                  %432 = vst [vmem:[%s394 + $0x90] sm:$0xff] %v431
                  %v433 = vld [vmem:[%s393 + $0x130] sm:$0xff]
                  %434 = vst [vmem:[%s394 + $0x98] sm:$0xff] %v433
                  %v435 = vld [vmem:[%s393 + $0x140] sm:$0xff]
                  %436 = vst [vmem:[%s394 + $0xa0] sm:$0xff] %v435
                  %v437 = vld [vmem:[%s393 + $0x150] sm:$0xff]
                  %438 = vst [vmem:[%s394 + $0xa8] sm:$0xff] %v437
                  %v439 = vld [vmem:[%s393 + $0x160] sm:$0xff]
                  %440 = vst [vmem:[%s394 + $0xb0] sm:$0xff] %v439
                  %v441 = vld [vmem:[%s393 + $0x170] sm:$0xff]
                  %442 = vst [vmem:[%s394 + $0xb8] sm:$0xff] %v441
                  %v443 = vld [vmem:[%s393 + $0x180] sm:$0xff]
                  %444 = vst [vmem:[%s394 + $0xc0] sm:$0xff] %v443
                  %v445 = vld [vmem:[%s393 + $0x190] sm:$0xff]
                  %446 = vst [vmem:[%s394 + $0xc8] sm:$0xff] %v445
                  %v447 = vld [vmem:[%s393 + $0x1a0] sm:$0xff]
                  %448 = vst [vmem:[%s394 + $0xd0] sm:$0xff] %v447
                  %v449 = vld [vmem:[%s393 + $0x1b0] sm:$0xff]
                  %450 = vst [vmem:[%s394 + $0xd8] sm:$0xff] %v449
                  %v451 = vld [vmem:[%s393 + $0x1c0] sm:$0xff]
                  %452 = vst [vmem:[%s394 + $0xe0] sm:$0xff] %v451
                  %v453 = vld [vmem:[%s393 + $0x1d0] sm:$0xff]
                  %454 = vst [vmem:[%s394 + $0xe8] sm:$0xff] %v453
                  %v455 = vld [vmem:[%s393 + $0x1e0] sm:$0xff]
                  %456 = vst [vmem:[%s394 + $0xf0] sm:$0xff] %v455
                  %v457 = vld [vmem:[%s393 + $0x1f0] sm:$0xff]
                  %458 = vst [vmem:[%s394 + $0xf8] sm:$0xff] %v457
                $region72: #{tpu_custom_call.1} parent=66 // loop_footer
                  %s392 = sadd.s32 1, %s388
                $region73: #{tpu_custom_call.1} parent=66 // loop_footer_branch
                  %387 = sbr.rel target = $region69
                $region74: #{tpu_custom_call.1} parent=66 // loop_exit
                  _
              $region67: #{tpu_custom_call.1} parent=51 // pred_fallthru
                _
              // Predicated region
              $region75: #{tpu_custom_call.1} parent=51 // pred_check
                _
              $region76: #{tpu_custom_call.1} parent=51 // pred_check_branch
                %460 = sbr.rel target = $region78
              $region77: #{tpu_custom_call.1} parent=51 // pred_region
                _
              $region78: #{tpu_custom_call.1} parent=51 // pred_fallthru
                _
            $region52: #{tpu_custom_call.1} parent=47 // pred_fallthru
              _
            // Predicated region
            $region53: #{tpu_custom_call.1} parent=47 // pred_check
              _
            $region54: #{tpu_custom_call.1} parent=47 // pred_check_branch
              %310 = sbr.rel target = $region56
            $region55: #{tpu_custom_call.1} parent=47 // pred_region
              %s312 = ssub.s32 256, 1
              loop: start=0, step=1, limit=1
              $region57: #{tpu_custom_call.1} parent=55 // loop_pre_header
                _
              $region58: #{tpu_custom_call.1} parent=55 // loop_header
                %s314 = sphi 0, %s318
                %p315 = scmp.ge.s32.totalorder %s314, 1
                %s319 = sphi %s304, %s304
                %s320 = sphi %s296, %s296
              $region59: #{tpu_custom_call.1} parent=55 // loop_header_branch
                %317 = sbr.rel (%p315) target = $region63
              $region60: #{tpu_custom_call.1} parent=55 // loop_body
                %v321 = vld [vmem:[%s319] sm:%s312]
                %322 = vst [vmem:[%s320] sm:%s312] %v321
                %v323 = vld [vmem:[%s319 + $0x10] sm:%s312]
                %324 = vst [vmem:[%s320 + $0x8] sm:%s312] %v323
                %v325 = vld [vmem:[%s319 + $0x20] sm:%s312]
                %326 = vst [vmem:[%s320 + $0x10] sm:%s312] %v325
                %v327 = vld [vmem:[%s319 + $0x30] sm:%s312]
                %328 = vst [vmem:[%s320 + $0x18] sm:%s312] %v327
                %v329 = vld [vmem:[%s319 + $0x40] sm:%s312]
                %330 = vst [vmem:[%s320 + $0x20] sm:%s312] %v329
                %v331 = vld [vmem:[%s319 + $0x50] sm:%s312]
                %332 = vst [vmem:[%s320 + $0x28] sm:%s312] %v331
                %v333 = vld [vmem:[%s319 + $0x60] sm:%s312]
                %334 = vst [vmem:[%s320 + $0x30] sm:%s312] %v333
                %v335 = vld [vmem:[%s319 + $0x70] sm:%s312]
                %336 = vst [vmem:[%s320 + $0x38] sm:%s312] %v335
                %v337 = vld [vmem:[%s319 + $0x80] sm:%s312]
                %338 = vst [vmem:[%s320 + $0x40] sm:%s312] %v337
                %v339 = vld [vmem:[%s319 + $0x90] sm:%s312]
                %340 = vst [vmem:[%s320 + $0x48] sm:%s312] %v339
                %v341 = vld [vmem:[%s319 + $0xa0] sm:%s312]
                %342 = vst [vmem:[%s320 + $0x50] sm:%s312] %v341
                %v343 = vld [vmem:[%s319 + $0xb0] sm:%s312]
                %344 = vst [vmem:[%s320 + $0x58] sm:%s312] %v343
                %v345 = vld [vmem:[%s319 + $0xc0] sm:%s312]
                %346 = vst [vmem:[%s320 + $0x60] sm:%s312] %v345
                %v347 = vld [vmem:[%s319 + $0xd0] sm:%s312]
                %348 = vst [vmem:[%s320 + $0x68] sm:%s312] %v347
                %v349 = vld [vmem:[%s319 + $0xe0] sm:%s312]
                %350 = vst [vmem:[%s320 + $0x70] sm:%s312] %v349
                %v351 = vld [vmem:[%s319 + $0xf0] sm:%s312]
                %352 = vst [vmem:[%s320 + $0x78] sm:%s312] %v351
                %v353 = vld [vmem:[%s319 + $0x100] sm:%s312]
                %354 = vst [vmem:[%s320 + $0x80] sm:%s312] %v353
                %v355 = vld [vmem:[%s319 + $0x110] sm:%s312]
                %356 = vst [vmem:[%s320 + $0x88] sm:%s312] %v355
                %v357 = vld [vmem:[%s319 + $0x120] sm:%s312]
                %358 = vst [vmem:[%s320 + $0x90] sm:%s312] %v357
                %v359 = vld [vmem:[%s319 + $0x130] sm:%s312]
                %360 = vst [vmem:[%s320 + $0x98] sm:%s312] %v359
                %v361 = vld [vmem:[%s319 + $0x140] sm:%s312]
                %362 = vst [vmem:[%s320 + $0xa0] sm:%s312] %v361
                %v363 = vld [vmem:[%s319 + $0x150] sm:%s312]
                %364 = vst [vmem:[%s320 + $0xa8] sm:%s312] %v363
                %v365 = vld [vmem:[%s319 + $0x160] sm:%s312]
                %366 = vst [vmem:[%s320 + $0xb0] sm:%s312] %v365
                %v367 = vld [vmem:[%s319 + $0x170] sm:%s312]
                %368 = vst [vmem:[%s320 + $0xb8] sm:%s312] %v367
                %v369 = vld [vmem:[%s319 + $0x180] sm:%s312]
                %370 = vst [vmem:[%s320 + $0xc0] sm:%s312] %v369
                %v371 = vld [vmem:[%s319 + $0x190] sm:%s312]
                %372 = vst [vmem:[%s320 + $0xc8] sm:%s312] %v371
                %v373 = vld [vmem:[%s319 + $0x1a0] sm:%s312]
                %374 = vst [vmem:[%s320 + $0xd0] sm:%s312] %v373
                %v375 = vld [vmem:[%s319 + $0x1b0] sm:%s312]
                %376 = vst [vmem:[%s320 + $0xd8] sm:%s312] %v375
                %v377 = vld [vmem:[%s319 + $0x1c0] sm:%s312]
                %378 = vst [vmem:[%s320 + $0xe0] sm:%s312] %v377
                %v379 = vld [vmem:[%s319 + $0x1d0] sm:%s312]
                %380 = vst [vmem:[%s320 + $0xe8] sm:%s312] %v379
                %v381 = vld [vmem:[%s319 + $0x1e0] sm:%s312]
                %382 = vst [vmem:[%s320 + $0xf0] sm:%s312] %v381
                %v383 = vld [vmem:[%s319 + $0x1f0] sm:%s312]
                %384 = vst [vmem:[%s320 + $0xf8] sm:%s312] %v383
              $region61: #{tpu_custom_call.1} parent=55 // loop_footer
                %s318 = sadd.s32 1, %s314
              $region62: #{tpu_custom_call.1} parent=55 // loop_footer_branch
                %313 = sbr.rel target = $region58
              $region63: #{tpu_custom_call.1} parent=55 // loop_exit
                _
            $region56: #{tpu_custom_call.1} parent=47 // pred_fallthru
              _
          $region48: #{tpu_custom_call.1} parent=43 // pred_fallthru
            _
          %461 = vnop
        $region44: #{tpu_custom_call.1} parent=31 // pred_fallthru
          _
      $region32: #{tpu_custom_call.1} parent=5 // pred_fallthru
        _
      %p462 = scmp.le.s32.totalorder 1, %s16
      %p463 = scmp.lt.s32.totalorder %s16, 9
      %p464 = pnand %p462, %p463
      %p465 = pneg %p464
      // Predicated region
      $region79: #{tpu_custom_call.1} parent=5 // pred_check
        _
      $region80: #{tpu_custom_call.1} parent=5 // pred_check_branch
        %467 = sbr.rel (%p464) target = $region82
      $region81: #{tpu_custom_call.1} parent=5 // pred_region
        %s468 = ssub.s32 %s16, 1
        %s469 = sand.u32 %s108, 1
        %s470 = sand.u32 %s108, 1
        %s471 = smul.addr %s470, 256
        %s472 = scalar_lea.vmem [#allocation6], %s471
        // Predicated region
        $region83: #{tpu_custom_call.1} parent=81 // pred_check
          %p473 = pneg %p121
        $region84: #{tpu_custom_call.1} parent=81 // pred_check_branch
          %475 = sbr.rel (%p473) target = $region86
        $region85: #{tpu_custom_call.1} parent=81 // pred_region
          _
        $region86: #{tpu_custom_call.1} parent=81 // pred_fallthru
          _
        %s476 = smul.u32 32, %s27
        %p477 = scmp.lt.s32.totalorder %s26, 1
        %s478 = scalar_select %p477, %s26, 1
        %p479 = scmp.lt.s32.totalorder %s476, 63
        %s480 = scalar_select %p479, %s476, 63
        %s481 = smul.addr %s478, 64
        %s482 = sadd.s32 %s480, %s481
        %s483 = smul.addr %s482, 8
        %s484 = scalar_lea.vmem %s0, %s483
        %p485 = pneg %p63
        %p486 = pneg %p60
        %s487 = smul.u32 32, %s28
        %p488 = scmp.lt.s32.totalorder %s26, 1
        %s489 = scalar_select %p488, %s26, 1
        %p490 = scmp.lt.s32.totalorder %s487, 63
        %s491 = scalar_select %p490, %s487, 63
        %s492 = smul.addr %s489, 64
        %s493 = sadd.s32 %s491, %s492
        %s494 = smul.addr %s493, 8
        %s495 = scalar_lea.vmem %s1, %s494
        %p496 = pneg %p91
        %p497 = pneg %p88
        %s498 = sand.u32 %s108, 1
        %s499 = sand.u32 %s108, 1
        %s500 = smul.addr %s499, 256
        %s501 = scalar_lea.vmem [#allocation6], %s500
        %p502 = pneg %p121
        %p503 = pneg %p118
        %p504 = pneg %p142
        %p505 = pneg %p139
        %p506 = pneg %p163
        %p507 = pneg %p160
        %p508 = pneg %p184
        %p509 = pneg %p181
        %p510 = pneg %p205
        %p511 = pneg %p202
        %p512 = pneg %p233
        %p513 = pneg %p230
        %s514 = sand.u32 %s220, 1
        %s515 = scalar_lea.sflag [#allocation8], %s514
        %s516 = sand.u32 %s220, 1
        %s517 = smul.addr %s516, 64
        %s518 = scalar_lea.vmem [#allocation7], %s517
        %s519 = smul.u32 32, %s27
        %p520 = scmp.lt.s32.totalorder %s26, 1
        %s521 = scalar_select %p520, %s26, 1
        %p522 = scmp.lt.s32.totalorder %s519, 63
        %s523 = scalar_select %p522, %s519, 63
        %s524 = smul.addr %s521, 64
        %s525 = sadd.s32 %s523, %s524
        %s526 = smul.addr %s525, 8
        %s527 = scalar_lea.vmem %s0, %s526
        %s528 = smul.u32 32, %s27
        %s529 = smul.u32 32, %s28
        %p530 = scmp.lt.s32.totalorder %s26, 1
        %s531 = scalar_select %p530, %s26, 1
        %p532 = scmp.lt.s32.totalorder %s529, 63
        %s533 = scalar_select %p532, %s529, 63
        %s534 = smul.addr %s531, 64
        %s535 = sadd.s32 %s533, %s534
        %s536 = smul.addr %s535, 8
        %s537 = scalar_lea.vmem %s1, %s536
        %s538 = smul.u32 32, %s28
        %s539 = smul.u32 32, %s27
        %s540 = smul.u32 2, %s28
        %s541 = smul.u32 8, %s27
        %p543 = scmp.eq.s32.totalorder %s28, 0
        // Predicated region
        $region87: #{tpu_custom_call.1} parent=81 // pred_check
          %p544 = pneg %p543
        $region88: #{tpu_custom_call.1} parent=81 // pred_check_branch
          %546 = sbr.rel (%p544) target = $region90
        $region89: #{tpu_custom_call.1} parent=81 // pred_region
          %v547 = vld [vmem:[%s527] sm:$0xff]
          %v548 = vld [vmem:[%s527 + $0x8] sm:$0xff]
          %v549 = vld [vmem:[%s527 + $0x10] sm:$0xff]
          %v550 = vld [vmem:[%s527 + $0x18] sm:$0xff]
          %v551 = vld [vmem:[%s527 + $0x20] sm:$0xff]
          %v552 = vld [vmem:[%s527 + $0x28] sm:$0xff]
          %v553 = vld [vmem:[%s527 + $0x30] sm:$0xff]
          %v554 = vld [vmem:[%s527 + $0x38] sm:$0xff]
          %v555 = vld [vmem:[%s527 + $0x40] sm:$0xff]
          %v556 = vld [vmem:[%s527 + $0x48] sm:$0xff]
          %v557 = vld [vmem:[%s527 + $0x50] sm:$0xff]
          %v558 = vld [vmem:[%s527 + $0x58] sm:$0xff]
          %v559 = vld [vmem:[%s527 + $0x60] sm:$0xff]
          %v560 = vld [vmem:[%s527 + $0x68] sm:$0xff]
          %v561 = vld [vmem:[%s527 + $0x70] sm:$0xff]
          %v562 = vld [vmem:[%s527 + $0x78] sm:$0xff]
          %v563 = vld [vmem:[%s527 + $0x80] sm:$0xff]
          %v564 = vld [vmem:[%s527 + $0x88] sm:$0xff]
          %v565 = vld [vmem:[%s527 + $0x90] sm:$0xff]
          %v566 = vld [vmem:[%s527 + $0x98] sm:$0xff]
          %v567 = vld [vmem:[%s527 + $0xa0] sm:$0xff]
          %v568 = vld [vmem:[%s527 + $0xa8] sm:$0xff]
          %v569 = vld [vmem:[%s527 + $0xb0] sm:$0xff]
          %v570 = vld [vmem:[%s527 + $0xb8] sm:$0xff]
          %v571 = vld [vmem:[%s527 + $0xc0] sm:$0xff]
          %v572 = vld [vmem:[%s527 + $0xc8] sm:$0xff]
          %v573 = vld [vmem:[%s527 + $0xd0] sm:$0xff]
          %v574 = vld [vmem:[%s527 + $0xd8] sm:$0xff]
          %v575 = vld [vmem:[%s527 + $0xe0] sm:$0xff]
          %v576 = vld [vmem:[%s527 + $0xe8] sm:$0xff]
          %v577 = vld [vmem:[%s527 + $0xf0] sm:$0xff]
          %v578 = vld [vmem:[%s527 + $0xf8] sm:$0xff]
          %v579 = vld [vmem:[%s3] sm:$0xff]
          %v580 = vld [vmem:[%s3 + $0x8] sm:$0xff]
          %v581 = vld [vmem:[%s3 + $0x10] sm:$0xff]
          %v582 = vld [vmem:[%s3 + $0x18] sm:$0xff]
          %vm583 = vcmask 261120
          %v585 = vsel %vm583, %v547, 0
          %v588 = vsel %vm583, %v548, 0
          %v591 = vsel %vm583, %v549, 0
          %v594 = vsel %vm583, %v550, 0
          %v597 = vsel %vm583, %v551, 0
          %v600 = vsel %vm583, %v552, 0
          %v603 = vsel %vm583, %v553, 0
          %v606 = vsel %vm583, %v554, 0
          %v609 = vsel %vm583, %v555, 0
          %v612 = vsel %vm583, %v556, 0
          %v615 = vsel %vm583, %v557, 0
          %v618 = vsel %vm583, %v558, 0
          %v621 = vsel %vm583, %v559, 0
          %v624 = vsel %vm583, %v560, 0
          %v627 = vsel %vm583, %v561, 0
          %v630 = vsel %vm583, %v562, 0
          %v633 = vsel %vm583, %v563, 0
          %v636 = vsel %vm583, %v564, 0
          %v639 = vsel %vm583, %v565, 0
          %v642 = vsel %vm583, %v566, 0
          %v645 = vsel %vm583, %v567, 0
          %v648 = vsel %vm583, %v568, 0
          %v651 = vsel %vm583, %v569, 0
          %v654 = vsel %vm583, %v570, 0
          %v657 = vsel %vm583, %v571, 0
          %v660 = vsel %vm583, %v572, 0
          %v663 = vsel %vm583, %v573, 0
          %v666 = vsel %vm583, %v574, 0
          %v669 = vsel %vm583, %v575, 0
          %v672 = vsel %vm583, %v576, 0
          %v675 = vsel %vm583, %v577, 0
          %v678 = vsel %vm583, %v578, 0
          %680 = vmatprep.subr.mxu0 0.0
          %681 = vmatpush1.msra.mxu0 0.0
          %682 = vmatprep.subr.mxu0 0.0
          %683 = vmatpush1.msra.mxu0 0.0
          %684 = vmatprep.subr.mxu0 0.0
          %685 = vmatpush1.msra.mxu0 0.0
          %686 = vmatprep.subr.mxu0 0.0
          %687 = vmatpush1.msra.mxu0 0.0
          %688 = vmatprep.subr.mxu0 0.0
          %689 = vmatpush1.msra.mxu0 0.0
          %690 = vmatprep.subr.mxu0 0.0
          %691 = vmatpush1.msra.mxu0 0.0
          %692 = vmatprep.subr.mxu0 0.0
          %693 = vmatpush1.msra.mxu0 0.0
          %694 = vmatprep.subr.mxu0 0.0
          %695 = vmatpush1.msra.mxu0 0.0
          %696 = vmatprep.subr.mxu0 0.0
          %697 = vmatpush1.msra.mxu0 0.0
          %698 = vmatprep.subr.mxu0 0.0
          %699 = vmatpush1.msra.mxu0 0.0
          %700 = vmatprep.subr.mxu0 0.0
          %701 = vmatpush1.msra.mxu0 0.0
          %702 = vmatprep.subr.mxu0 0.0
          %703 = vmatpush1.msra.mxu0 0.0
          %704 = vmatprep.subr.mxu0 0.0
          %705 = vmatpush1.msra.mxu0 %v582
          %706 = vmatprep.subr.mxu0 0.0
          %707 = vmatpush1.msra.mxu0 %v581
          %708 = vmatprep.subr.mxu0 0.0
          %709 = vmatpush1.msra.mxu0 %v580
          %710 = vmatprep.subr.mxu0 0.0
          %711 = vmatpush1.msra.mxu0 %v579
          %712 = vmatprep.subr.mxu0 0.0
          %713 = vmatpush2.msra.mxu0 0.0
          %714 = vmatprep.subr.mxu0 0.0
          %715 = vmatpush2.msra.mxu0 0.0
          %716 = vmatprep.subr.mxu0 0.0
          %717 = vmatpush2.msra.mxu0 0.0
          %718 = vmatprep.subr.mxu0 0.0
          %719 = vmatpush2.msra.mxu0 0.0
          %720 = vmatprep.subr.mxu0 0.0
          %721 = vmatpush2.msra.mxu0 0.0
          %722 = vmatprep.subr.mxu0 0.0
          %723 = vmatpush2.msra.mxu0 0.0
          %724 = vmatprep.subr.mxu0 0.0
          %725 = vmatpush2.msra.mxu0 0.0
          %726 = vmatprep.subr.mxu0 0.0
          %727 = vmatpush2.msra.mxu0 0.0
          %728 = vmatprep.subr.mxu0 0.0
          %729 = vmatpush2.msra.mxu0 0.0
          %730 = vmatprep.subr.mxu0 0.0
          %731 = vmatpush2.msra.mxu0 0.0
          %732 = vmatprep.subr.mxu0 0.0
          %733 = vmatpush2.msra.mxu0 0.0
          %734 = vmatprep.subr.mxu0 0.0
          %735 = vmatpush2.msra.mxu0 0.0
          %736 = vmatprep.subr.mxu0 0.0
          %737 = vmatpush2.msra.mxu0 0.0
          %738 = vmatprep.subr.mxu0 0.0
          %739 = vmatpush2.msra.mxu0 0.0
          %740 = vmatprep.subr.mxu0 0.0
          %741 = vmatpush2.msra.mxu0 0.0
          %742 = vmatprep.subr.mxu0 0.0
          %743 = vmatpush2.msra.mxu0 0.0
          %744 = vmatprep.mubr.f32.mxu0 0.0
          %745 = vmatmul.mubr.f32.gmra.mxu0 %v585
          %v746 = vpop.f32.mrf.mxu0
          %v747 = vadd.f32 0.0, %v746
          %v748 = vpop.f32.mrf.mxu0
          %749 = vmatprep.mubr.f32.mxu0 0.0
          %750 = vmatmul.mubr.f32.gmra.mxu0 %v588
          %v751 = vpop.f32.mrf.mxu0
          %v752 = vadd.f32 0.0, %v751
          %v753 = vpop.f32.mrf.mxu0
          %754 = vmatprep.mubr.f32.mxu0 0.0
          %755 = vmatmul.mubr.f32.gmra.mxu0 %v591
          %v756 = vpop.f32.mrf.mxu0
          %v757 = vadd.f32 0.0, %v756
          %v758 = vpop.f32.mrf.mxu0
          %759 = vmatprep.mubr.f32.mxu0 0.0
          %760 = vmatmul.mubr.f32.gmra.mxu0 %v594
          %v761 = vpop.f32.mrf.mxu0
          %v762 = vadd.f32 0.0, %v761
          %v763 = vpop.f32.mrf.mxu0
          %764 = vmatprep.mubr.f32.mxu0 0.0
          %765 = vmatmul.mubr.f32.gmra.mxu0 %v597
          %v766 = vpop.f32.mrf.mxu0
          %v767 = vadd.f32 0.0, %v766
          %v768 = vpop.f32.mrf.mxu0
          %769 = vmatprep.mubr.f32.mxu0 0.0
          %770 = vmatmul.mubr.f32.gmra.mxu0 %v600
          %v771 = vpop.f32.mrf.mxu0
          %v772 = vadd.f32 0.0, %v771
          %v773 = vpop.f32.mrf.mxu0
          %774 = vmatprep.mubr.f32.mxu0 0.0
          %775 = vmatmul.mubr.f32.gmra.mxu0 %v603
          %v776 = vpop.f32.mrf.mxu0
          %v777 = vadd.f32 0.0, %v776
          %v778 = vpop.f32.mrf.mxu0
          %779 = vmatprep.mubr.f32.mxu0 0.0
          %780 = vmatmul.mubr.f32.gmra.mxu0 %v606
          %v781 = vpop.f32.mrf.mxu0
          %v782 = vadd.f32 0.0, %v781
          %v783 = vpop.f32.mrf.mxu0
          %784 = vmatprep.mubr.f32.mxu0 0.0
          %785 = vmatmul.mubr.f32.gmra.mxu0 %v609
          %v786 = vpop.f32.mrf.mxu0
          %v787 = vadd.f32 0.0, %v786
          %v788 = vpop.f32.mrf.mxu0
          %789 = vmatprep.mubr.f32.mxu0 0.0
          %790 = vmatmul.mubr.f32.gmra.mxu0 %v612
          %v791 = vpop.f32.mrf.mxu0
          %v792 = vadd.f32 0.0, %v791
          %v793 = vpop.f32.mrf.mxu0
          %794 = vmatprep.mubr.f32.mxu0 0.0
          %795 = vmatmul.mubr.f32.gmra.mxu0 %v615
          %v796 = vpop.f32.mrf.mxu0
          %v797 = vadd.f32 0.0, %v796
          %v798 = vpop.f32.mrf.mxu0
          %799 = vmatprep.mubr.f32.mxu0 0.0
          %800 = vmatmul.mubr.f32.gmra.mxu0 %v618
          %v801 = vpop.f32.mrf.mxu0
          %v802 = vadd.f32 0.0, %v801
          %v803 = vpop.f32.mrf.mxu0
          %804 = vmatprep.mubr.f32.mxu0 0.0
          %805 = vmatmul.mubr.f32.gmra.mxu0 %v621
          %v806 = vpop.f32.mrf.mxu0
          %v807 = vadd.f32 0.0, %v806
          %v808 = vpop.f32.mrf.mxu0
          %809 = vmatprep.mubr.f32.mxu0 0.0
          %810 = vmatmul.mubr.f32.gmra.mxu0 %v624
          %v811 = vpop.f32.mrf.mxu0
          %v812 = vadd.f32 0.0, %v811
          %v813 = vpop.f32.mrf.mxu0
          %814 = vmatprep.mubr.f32.mxu0 0.0
          %815 = vmatmul.mubr.f32.gmra.mxu0 %v627
          %v816 = vpop.f32.mrf.mxu0
          %v817 = vadd.f32 0.0, %v816
          %v818 = vpop.f32.mrf.mxu0
          %819 = vmatprep.mubr.f32.mxu0 0.0
          %820 = vmatmul.mubr.f32.gmra.mxu0 %v630
          %v821 = vpop.f32.mrf.mxu0
          %v822 = vadd.f32 0.0, %v821
          %v823 = vpop.f32.mrf.mxu0
          %824 = vmatprep.mubr.f32.mxu0 0.0
          %825 = vmatmul.mubr.f32.gmra.mxu0 %v633
          %v826 = vpop.f32.mrf.mxu0
          %v827 = vadd.f32 0.0, %v826
          %v828 = vpop.f32.mrf.mxu0
          %829 = vmatprep.mubr.f32.mxu0 0.0
          %830 = vmatmul.mubr.f32.gmra.mxu0 %v636
          %v831 = vpop.f32.mrf.mxu0
          %v832 = vadd.f32 0.0, %v831
          %v833 = vpop.f32.mrf.mxu0
          %834 = vmatprep.mubr.f32.mxu0 0.0
          %835 = vmatmul.mubr.f32.gmra.mxu0 %v639
          %v836 = vpop.f32.mrf.mxu0
          %v837 = vadd.f32 0.0, %v836
          %v838 = vpop.f32.mrf.mxu0
          %839 = vmatprep.mubr.f32.mxu0 0.0
          %840 = vmatmul.mubr.f32.gmra.mxu0 %v642
          %v841 = vpop.f32.mrf.mxu0
          %v842 = vadd.f32 0.0, %v841
          %v843 = vpop.f32.mrf.mxu0
          %844 = vmatprep.mubr.f32.mxu0 0.0
          %845 = vmatmul.mubr.f32.gmra.mxu0 %v645
          %v846 = vpop.f32.mrf.mxu0
          %v847 = vadd.f32 0.0, %v846
          %v848 = vpop.f32.mrf.mxu0
          %849 = vmatprep.mubr.f32.mxu0 0.0
          %850 = vmatmul.mubr.f32.gmra.mxu0 %v648
          %v851 = vpop.f32.mrf.mxu0
          %v852 = vadd.f32 0.0, %v851
          %v853 = vpop.f32.mrf.mxu0
          %854 = vmatprep.mubr.f32.mxu0 0.0
          %855 = vmatmul.mubr.f32.gmra.mxu0 %v651
          %v856 = vpop.f32.mrf.mxu0
          %v857 = vadd.f32 0.0, %v856
          %v858 = vpop.f32.mrf.mxu0
          %859 = vmatprep.mubr.f32.mxu0 0.0
          %860 = vmatmul.mubr.f32.gmra.mxu0 %v654
          %v861 = vpop.f32.mrf.mxu0
          %v862 = vadd.f32 0.0, %v861
          %v863 = vpop.f32.mrf.mxu0
          %864 = vmatprep.mubr.f32.mxu0 0.0
          %865 = vmatmul.mubr.f32.gmra.mxu0 %v657
          %v866 = vpop.f32.mrf.mxu0
          %v867 = vadd.f32 0.0, %v866
          %v868 = vpop.f32.mrf.mxu0
          %869 = vmatprep.mubr.f32.mxu0 0.0
          %870 = vmatmul.mubr.f32.gmra.mxu0 %v660
          %v871 = vpop.f32.mrf.mxu0
          %v872 = vadd.f32 0.0, %v871
          %v873 = vpop.f32.mrf.mxu0
          %874 = vmatprep.mubr.f32.mxu0 0.0
          %875 = vmatmul.mubr.f32.gmra.mxu0 %v663
          %v876 = vpop.f32.mrf.mxu0
          %v877 = vadd.f32 0.0, %v876
          %v878 = vpop.f32.mrf.mxu0
          %879 = vmatprep.mubr.f32.mxu0 0.0
          %880 = vmatmul.mubr.f32.gmra.mxu0 %v666
          %v881 = vpop.f32.mrf.mxu0
          %v882 = vadd.f32 0.0, %v881
          %v883 = vpop.f32.mrf.mxu0
          %884 = vmatprep.mubr.f32.mxu0 0.0
          %885 = vmatmul.mubr.f32.gmra.mxu0 %v669
          %v886 = vpop.f32.mrf.mxu0
          %v887 = vadd.f32 0.0, %v886
          %v888 = vpop.f32.mrf.mxu0
          %889 = vmatprep.mubr.f32.mxu0 0.0
          %890 = vmatmul.mubr.f32.gmra.mxu0 %v672
          %v891 = vpop.f32.mrf.mxu0
          %v892 = vadd.f32 0.0, %v891
          %v893 = vpop.f32.mrf.mxu0
          %894 = vmatprep.mubr.f32.mxu0 0.0
          %895 = vmatmul.mubr.f32.gmra.mxu0 %v675
          %v896 = vpop.f32.mrf.mxu0
          %v897 = vadd.f32 0.0, %v896
          %v898 = vpop.f32.mrf.mxu0
          %899 = vmatprep.mubr.f32.mxu0 0.0
          %900 = vmatmul.mubr.f32.gmra.mxu0 %v678
          %v901 = vpop.f32.mrf.mxu0
          %v902 = vadd.f32 0.0, %v901
          %v903 = vpop.f32.mrf.mxu0
          %904 = vdwg.mxu0
          %905 = vst.msk [vmem:[#allocation2] sm:$0xff] %vm583, %v747
          %906 = vst.msk [vmem:[#allocation2 + $0x8] sm:$0xff] %vm583, %v752
          %907 = vst.msk [vmem:[#allocation2 + $0x10] sm:$0xff] %vm583, %v757
          %908 = vst.msk [vmem:[#allocation2 + $0x18] sm:$0xff] %vm583, %v762
          %909 = vst.msk [vmem:[#allocation2 + $0x20] sm:$0xff] %vm583, %v767
          %910 = vst.msk [vmem:[#allocation2 + $0x28] sm:$0xff] %vm583, %v772
          %911 = vst.msk [vmem:[#allocation2 + $0x30] sm:$0xff] %vm583, %v777
          %912 = vst.msk [vmem:[#allocation2 + $0x38] sm:$0xff] %vm583, %v782
          %913 = vst.msk [vmem:[#allocation2 + $0x40] sm:$0xff] %vm583, %v787
          %914 = vst.msk [vmem:[#allocation2 + $0x48] sm:$0xff] %vm583, %v792
          %915 = vst.msk [vmem:[#allocation2 + $0x50] sm:$0xff] %vm583, %v797
          %916 = vst.msk [vmem:[#allocation2 + $0x58] sm:$0xff] %vm583, %v802
          %917 = vst.msk [vmem:[#allocation2 + $0x60] sm:$0xff] %vm583, %v807
          %918 = vst.msk [vmem:[#allocation2 + $0x68] sm:$0xff] %vm583, %v812
          %919 = vst.msk [vmem:[#allocation2 + $0x70] sm:$0xff] %vm583, %v817
          %920 = vst.msk [vmem:[#allocation2 + $0x78] sm:$0xff] %vm583, %v822
          %921 = vst.msk [vmem:[#allocation2 + $0x80] sm:$0xff] %vm583, %v827
          %922 = vst.msk [vmem:[#allocation2 + $0x88] sm:$0xff] %vm583, %v832
          %923 = vst.msk [vmem:[#allocation2 + $0x90] sm:$0xff] %vm583, %v837
          %924 = vst.msk [vmem:[#allocation2 + $0x98] sm:$0xff] %vm583, %v842
          %925 = vst.msk [vmem:[#allocation2 + $0xa0] sm:$0xff] %vm583, %v847
          %926 = vst.msk [vmem:[#allocation2 + $0xa8] sm:$0xff] %vm583, %v852
          %927 = vst.msk [vmem:[#allocation2 + $0xb0] sm:$0xff] %vm583, %v857
          %928 = vst.msk [vmem:[#allocation2 + $0xb8] sm:$0xff] %vm583, %v862
          %929 = vst.msk [vmem:[#allocation2 + $0xc0] sm:$0xff] %vm583, %v867
          %930 = vst.msk [vmem:[#allocation2 + $0xc8] sm:$0xff] %vm583, %v872
          %931 = vst.msk [vmem:[#allocation2 + $0xd0] sm:$0xff] %vm583, %v877
          %932 = vst.msk [vmem:[#allocation2 + $0xd8] sm:$0xff] %vm583, %v882
          %933 = vst.msk [vmem:[#allocation2 + $0xe0] sm:$0xff] %vm583, %v887
          %934 = vst.msk [vmem:[#allocation2 + $0xe8] sm:$0xff] %vm583, %v892
          %935 = vst.msk [vmem:[#allocation2 + $0xf0] sm:$0xff] %vm583, %v897
          %936 = vst.msk [vmem:[#allocation2 + $0xf8] sm:$0xff] %vm583, %v902
          %vm937 = vcmask 7168
          %938 = vst.msk [vmem:[#allocation3] sm:$0xff] %vm937, -inf
          %939 = vst.msk [vmem:[#allocation3 + $0x8] sm:$0xff] %vm937, -inf
          %940 = vst.msk [vmem:[#allocation3 + $0x10] sm:$0xff] %vm937, -inf
          %941 = vst.msk [vmem:[#allocation3 + $0x18] sm:$0xff] %vm937, -inf
          %942 = vst.msk [vmem:[#allocation3 + $0x20] sm:$0xff] %vm937, -inf
          %943 = vst.msk [vmem:[#allocation3 + $0x28] sm:$0xff] %vm937, -inf
          %944 = vst.msk [vmem:[#allocation3 + $0x30] sm:$0xff] %vm937, -inf
          %945 = vst.msk [vmem:[#allocation3 + $0x38] sm:$0xff] %vm937, -inf
          %946 = vst.msk [vmem:[#allocation3 + $0x40] sm:$0xff] %vm937, -inf
          %947 = vst.msk [vmem:[#allocation3 + $0x48] sm:$0xff] %vm937, -inf
          %948 = vst.msk [vmem:[#allocation3 + $0x50] sm:$0xff] %vm937, -inf
          %949 = vst.msk [vmem:[#allocation3 + $0x58] sm:$0xff] %vm937, -inf
          %950 = vst.msk [vmem:[#allocation3 + $0x60] sm:$0xff] %vm937, -inf
          %951 = vst.msk [vmem:[#allocation3 + $0x68] sm:$0xff] %vm937, -inf
          %952 = vst.msk [vmem:[#allocation3 + $0x70] sm:$0xff] %vm937, -inf
          %953 = vst.msk [vmem:[#allocation3 + $0x78] sm:$0xff] %vm937, -inf
          %954 = vst.msk [vmem:[#allocation3 + $0x80] sm:$0xff] %vm937, -inf
          %955 = vst.msk [vmem:[#allocation3 + $0x88] sm:$0xff] %vm937, -inf
          %956 = vst.msk [vmem:[#allocation3 + $0x90] sm:$0xff] %vm937, -inf
          %957 = vst.msk [vmem:[#allocation3 + $0x98] sm:$0xff] %vm937, -inf
          %958 = vst.msk [vmem:[#allocation3 + $0xa0] sm:$0xff] %vm937, -inf
          %959 = vst.msk [vmem:[#allocation3 + $0xa8] sm:$0xff] %vm937, -inf
          %960 = vst.msk [vmem:[#allocation3 + $0xb0] sm:$0xff] %vm937, -inf
          %961 = vst.msk [vmem:[#allocation3 + $0xb8] sm:$0xff] %vm937, -inf
          %962 = vst.msk [vmem:[#allocation3 + $0xc0] sm:$0xff] %vm937, -inf
          %963 = vst.msk [vmem:[#allocation3 + $0xc8] sm:$0xff] %vm937, -inf
          %964 = vst.msk [vmem:[#allocation3 + $0xd0] sm:$0xff] %vm937, -inf
          %965 = vst.msk [vmem:[#allocation3 + $0xd8] sm:$0xff] %vm937, -inf
          %966 = vst.msk [vmem:[#allocation3 + $0xe0] sm:$0xff] %vm937, -inf
          %967 = vst.msk [vmem:[#allocation3 + $0xe8] sm:$0xff] %vm937, -inf
          %968 = vst.msk [vmem:[#allocation3 + $0xf0] sm:$0xff] %vm937, -inf
          %969 = vst.msk [vmem:[#allocation3 + $0xf8] sm:$0xff] %vm937, -inf
          %970 = vst.msk [vmem:[#allocation4] sm:$0xff] %vm937, 0.0
          %971 = vst.msk [vmem:[#allocation4 + $0x8] sm:$0xff] %vm937, 0.0
          %972 = vst.msk [vmem:[#allocation4 + $0x10] sm:$0xff] %vm937, 0.0
          %973 = vst.msk [vmem:[#allocation4 + $0x18] sm:$0xff] %vm937, 0.0
          %974 = vst.msk [vmem:[#allocation4 + $0x20] sm:$0xff] %vm937, 0.0
          %975 = vst.msk [vmem:[#allocation4 + $0x28] sm:$0xff] %vm937, 0.0
          %976 = vst.msk [vmem:[#allocation4 + $0x30] sm:$0xff] %vm937, 0.0
          %977 = vst.msk [vmem:[#allocation4 + $0x38] sm:$0xff] %vm937, 0.0
          %978 = vst.msk [vmem:[#allocation4 + $0x40] sm:$0xff] %vm937, 0.0
          %979 = vst.msk [vmem:[#allocation4 + $0x48] sm:$0xff] %vm937, 0.0
          %980 = vst.msk [vmem:[#allocation4 + $0x50] sm:$0xff] %vm937, 0.0
          %981 = vst.msk [vmem:[#allocation4 + $0x58] sm:$0xff] %vm937, 0.0
          %982 = vst.msk [vmem:[#allocation4 + $0x60] sm:$0xff] %vm937, 0.0
          %983 = vst.msk [vmem:[#allocation4 + $0x68] sm:$0xff] %vm937, 0.0
          %984 = vst.msk [vmem:[#allocation4 + $0x70] sm:$0xff] %vm937, 0.0
          %985 = vst.msk [vmem:[#allocation4 + $0x78] sm:$0xff] %vm937, 0.0
          %986 = vst.msk [vmem:[#allocation4 + $0x80] sm:$0xff] %vm937, 0.0
          %987 = vst.msk [vmem:[#allocation4 + $0x88] sm:$0xff] %vm937, 0.0
          %988 = vst.msk [vmem:[#allocation4 + $0x90] sm:$0xff] %vm937, 0.0
          %989 = vst.msk [vmem:[#allocation4 + $0x98] sm:$0xff] %vm937, 0.0
          %990 = vst.msk [vmem:[#allocation4 + $0xa0] sm:$0xff] %vm937, 0.0
          %991 = vst.msk [vmem:[#allocation4 + $0xa8] sm:$0xff] %vm937, 0.0
          %992 = vst.msk [vmem:[#allocation4 + $0xb0] sm:$0xff] %vm937, 0.0
          %993 = vst.msk [vmem:[#allocation4 + $0xb8] sm:$0xff] %vm937, 0.0
          %994 = vst.msk [vmem:[#allocation4 + $0xc0] sm:$0xff] %vm937, 0.0
          %995 = vst.msk [vmem:[#allocation4 + $0xc8] sm:$0xff] %vm937, 0.0
          %996 = vst.msk [vmem:[#allocation4 + $0xd0] sm:$0xff] %vm937, 0.0
          %997 = vst.msk [vmem:[#allocation4 + $0xd8] sm:$0xff] %vm937, 0.0
          %998 = vst.msk [vmem:[#allocation4 + $0xe0] sm:$0xff] %vm937, 0.0
          %999 = vst.msk [vmem:[#allocation4 + $0xe8] sm:$0xff] %vm937, 0.0
          %1000 = vst.msk [vmem:[#allocation4 + $0xf0] sm:$0xff] %vm937, 0.0
          %1001 = vst.msk [vmem:[#allocation4 + $0xf8] sm:$0xff] %vm937, 0.0
          %1002 = vst.msk [vmem:[#allocation5] sm:$0xff] %vm583, 0.0
          %1003 = vst.msk [vmem:[#allocation5 + $0x8] sm:$0xff] %vm583, 0.0
          %1004 = vst.msk [vmem:[#allocation5 + $0x10] sm:$0xff] %vm583, 0.0
          %1005 = vst.msk [vmem:[#allocation5 + $0x18] sm:$0xff] %vm583, 0.0
          %1006 = vst.msk [vmem:[#allocation5 + $0x20] sm:$0xff] %vm583, 0.0
          %1007 = vst.msk [vmem:[#allocation5 + $0x28] sm:$0xff] %vm583, 0.0
          %1008 = vst.msk [vmem:[#allocation5 + $0x30] sm:$0xff] %vm583, 0.0
          %1009 = vst.msk [vmem:[#allocation5 + $0x38] sm:$0xff] %vm583, 0.0
          %1010 = vst.msk [vmem:[#allocation5 + $0x40] sm:$0xff] %vm583, 0.0
          %1011 = vst.msk [vmem:[#allocation5 + $0x48] sm:$0xff] %vm583, 0.0
          %1012 = vst.msk [vmem:[#allocation5 + $0x50] sm:$0xff] %vm583, 0.0
          %1013 = vst.msk [vmem:[#allocation5 + $0x58] sm:$0xff] %vm583, 0.0
          %1014 = vst.msk [vmem:[#allocation5 + $0x60] sm:$0xff] %vm583, 0.0
          %1015 = vst.msk [vmem:[#allocation5 + $0x68] sm:$0xff] %vm583, 0.0
          %1016 = vst.msk [vmem:[#allocation5 + $0x70] sm:$0xff] %vm583, 0.0
          %1017 = vst.msk [vmem:[#allocation5 + $0x78] sm:$0xff] %vm583, 0.0
          %1018 = vst.msk [vmem:[#allocation5 + $0x80] sm:$0xff] %vm583, 0.0
          %1019 = vst.msk [vmem:[#allocation5 + $0x88] sm:$0xff] %vm583, 0.0
          %1020 = vst.msk [vmem:[#allocation5 + $0x90] sm:$0xff] %vm583, 0.0
          %1021 = vst.msk [vmem:[#allocation5 + $0x98] sm:$0xff] %vm583, 0.0
          %1022 = vst.msk [vmem:[#allocation5 + $0xa0] sm:$0xff] %vm583, 0.0
          %1023 = vst.msk [vmem:[#allocation5 + $0xa8] sm:$0xff] %vm583, 0.0
          %1024 = vst.msk [vmem:[#allocation5 + $0xb0] sm:$0xff] %vm583, 0.0
          %1025 = vst.msk [vmem:[#allocation5 + $0xb8] sm:$0xff] %vm583, 0.0
          %1026 = vst.msk [vmem:[#allocation5 + $0xc0] sm:$0xff] %vm583, 0.0
          %1027 = vst.msk [vmem:[#allocation5 + $0xc8] sm:$0xff] %vm583, 0.0
          %1028 = vst.msk [vmem:[#allocation5 + $0xd0] sm:$0xff] %vm583, 0.0
          %1029 = vst.msk [vmem:[#allocation5 + $0xd8] sm:$0xff] %vm583, 0.0
          %1030 = vst.msk [vmem:[#allocation5 + $0xe0] sm:$0xff] %vm583, 0.0
          %1031 = vst.msk [vmem:[#allocation5 + $0xe8] sm:$0xff] %vm583, 0.0
          %1032 = vst.msk [vmem:[#allocation5 + $0xf0] sm:$0xff] %vm583, 0.0
          %1033 = vst.msk [vmem:[#allocation5 + $0xf8] sm:$0xff] %vm583, 0.0
        $region90: #{tpu_custom_call.1} parent=81 // pred_fallthru
          _
        %v1034 = vld [vmem:[%s537] sm:$0xff]
        %v1035 = vld [vmem:[%s537 + $0x8] sm:$0xff]
        %v1036 = vld [vmem:[%s537 + $0x10] sm:$0xff]
        %v1037 = vld [vmem:[%s537 + $0x18] sm:$0xff]
        %v1038 = vld [vmem:[%s537 + $0x20] sm:$0xff]
        %v1039 = vld [vmem:[%s537 + $0x28] sm:$0xff]
        %v1040 = vld [vmem:[%s537 + $0x30] sm:$0xff]
        %v1041 = vld [vmem:[%s537 + $0x38] sm:$0xff]
        %v1042 = vld [vmem:[%s537 + $0x40] sm:$0xff]
        %v1043 = vld [vmem:[%s537 + $0x48] sm:$0xff]
        %v1044 = vld [vmem:[%s537 + $0x50] sm:$0xff]
        %v1045 = vld [vmem:[%s537 + $0x58] sm:$0xff]
        %v1046 = vld [vmem:[%s537 + $0x60] sm:$0xff]
        %v1047 = vld [vmem:[%s537 + $0x68] sm:$0xff]
        %v1048 = vld [vmem:[%s537 + $0x70] sm:$0xff]
        %v1049 = vld [vmem:[%s537 + $0x78] sm:$0xff]
        %v1050 = vld [vmem:[%s537 + $0x80] sm:$0xff]
        %v1051 = vld [vmem:[%s537 + $0x88] sm:$0xff]
        %v1052 = vld [vmem:[%s537 + $0x90] sm:$0xff]
        %v1053 = vld [vmem:[%s537 + $0x98] sm:$0xff]
        %v1054 = vld [vmem:[%s537 + $0xa0] sm:$0xff]
        %v1055 = vld [vmem:[%s537 + $0xa8] sm:$0xff]
        %v1056 = vld [vmem:[%s537 + $0xb0] sm:$0xff]
        %v1057 = vld [vmem:[%s537 + $0xb8] sm:$0xff]
        %v1058 = vld [vmem:[%s537 + $0xc0] sm:$0xff]
        %v1059 = vld [vmem:[%s537 + $0xc8] sm:$0xff]
        %v1060 = vld [vmem:[%s537 + $0xd0] sm:$0xff]
        %v1061 = vld [vmem:[%s537 + $0xd8] sm:$0xff]
        %v1062 = vld [vmem:[%s537 + $0xe0] sm:$0xff]
        %v1063 = vld [vmem:[%s537 + $0xe8] sm:$0xff]
        %v1064 = vld [vmem:[%s537 + $0xf0] sm:$0xff]
        %v1065 = vld [vmem:[%s537 + $0xf8] sm:$0xff]
        %v1066 = vld [vmem:[%s4] sm:$0xff]
        %v1067 = vld [vmem:[%s4 + $0x8] sm:$0xff]
        %v1068 = vld [vmem:[%s4 + $0x10] sm:$0xff]
        %v1069 = vld [vmem:[%s4 + $0x18] sm:$0xff]
        %vm1070 = vcmask 261120
        %v1072 = vsel %vm1070, %v1034, 0
        %v1075 = vsel %vm1070, %v1035, 0
        %v1078 = vsel %vm1070, %v1036, 0
        %v1081 = vsel %vm1070, %v1037, 0
        %v1084 = vsel %vm1070, %v1038, 0
        %v1087 = vsel %vm1070, %v1039, 0
        %v1090 = vsel %vm1070, %v1040, 0
        %v1093 = vsel %vm1070, %v1041, 0
        %v1096 = vsel %vm1070, %v1042, 0
        %v1099 = vsel %vm1070, %v1043, 0
        %v1102 = vsel %vm1070, %v1044, 0
        %v1105 = vsel %vm1070, %v1045, 0
        %v1108 = vsel %vm1070, %v1046, 0
        %v1111 = vsel %vm1070, %v1047, 0
        %v1114 = vsel %vm1070, %v1048, 0
        %v1117 = vsel %vm1070, %v1049, 0
        %v1120 = vsel %vm1070, %v1050, 0
        %v1123 = vsel %vm1070, %v1051, 0
        %v1126 = vsel %vm1070, %v1052, 0
        %v1129 = vsel %vm1070, %v1053, 0
        %v1132 = vsel %vm1070, %v1054, 0
        %v1135 = vsel %vm1070, %v1055, 0
        %v1138 = vsel %vm1070, %v1056, 0
        %v1141 = vsel %vm1070, %v1057, 0
        %v1144 = vsel %vm1070, %v1058, 0
        %v1147 = vsel %vm1070, %v1059, 0
        %v1150 = vsel %vm1070, %v1060, 0
        %v1153 = vsel %vm1070, %v1061, 0
        %v1156 = vsel %vm1070, %v1062, 0
        %v1159 = vsel %vm1070, %v1063, 0
        %v1162 = vsel %vm1070, %v1064, 0
        %v1165 = vsel %vm1070, %v1065, 0
        %1167 = vmatprep.subr.mxu0 0.0
        %1168 = vmatpush1.msra.mxu0 0.0
        %1169 = vmatprep.subr.mxu0 0.0
        %1170 = vmatpush1.msra.mxu0 0.0
        %1171 = vmatprep.subr.mxu0 0.0
        %1172 = vmatpush1.msra.mxu0 0.0
        %1173 = vmatprep.subr.mxu0 0.0
        %1174 = vmatpush1.msra.mxu0 0.0
        %1175 = vmatprep.subr.mxu0 0.0
        %1176 = vmatpush1.msra.mxu0 0.0
        %1177 = vmatprep.subr.mxu0 0.0
        %1178 = vmatpush1.msra.mxu0 0.0
        %1179 = vmatprep.subr.mxu0 0.0
        %1180 = vmatpush1.msra.mxu0 0.0
        %1181 = vmatprep.subr.mxu0 0.0
        %1182 = vmatpush1.msra.mxu0 0.0
        %1183 = vmatprep.subr.mxu0 0.0
        %1184 = vmatpush1.msra.mxu0 0.0
        %1185 = vmatprep.subr.mxu0 0.0
        %1186 = vmatpush1.msra.mxu0 0.0
        %1187 = vmatprep.subr.mxu0 0.0
        %1188 = vmatpush1.msra.mxu0 0.0
        %1189 = vmatprep.subr.mxu0 0.0
        %1190 = vmatpush1.msra.mxu0 0.0
        %1191 = vmatprep.subr.mxu0 0.0
        %1192 = vmatpush1.msra.mxu0 %v1069
        %1193 = vmatprep.subr.mxu0 0.0
        %1194 = vmatpush1.msra.mxu0 %v1068
        %1195 = vmatprep.subr.mxu0 0.0
        %1196 = vmatpush1.msra.mxu0 %v1067
        %1197 = vmatprep.subr.mxu0 0.0
        %1198 = vmatpush1.msra.mxu0 %v1066
        %1199 = vmatprep.subr.mxu0 0.0
        %1200 = vmatpush2.msra.mxu0 0.0
        %1201 = vmatprep.subr.mxu0 0.0
        %1202 = vmatpush2.msra.mxu0 0.0
        %1203 = vmatprep.subr.mxu0 0.0
        %1204 = vmatpush2.msra.mxu0 0.0
        %1205 = vmatprep.subr.mxu0 0.0
        %1206 = vmatpush2.msra.mxu0 0.0
        %1207 = vmatprep.subr.mxu0 0.0
        %1208 = vmatpush2.msra.mxu0 0.0
        %1209 = vmatprep.subr.mxu0 0.0
        %1210 = vmatpush2.msra.mxu0 0.0
        %1211 = vmatprep.subr.mxu0 0.0
        %1212 = vmatpush2.msra.mxu0 0.0
        %1213 = vmatprep.subr.mxu0 0.0
        %1214 = vmatpush2.msra.mxu0 0.0
        %1215 = vmatprep.subr.mxu0 0.0
        %1216 = vmatpush2.msra.mxu0 0.0
        %1217 = vmatprep.subr.mxu0 0.0
        %1218 = vmatpush2.msra.mxu0 0.0
        %1219 = vmatprep.subr.mxu0 0.0
        %1220 = vmatpush2.msra.mxu0 0.0
        %1221 = vmatprep.subr.mxu0 0.0
        %1222 = vmatpush2.msra.mxu0 0.0
        %1223 = vmatprep.subr.mxu0 0.0
        %1224 = vmatpush2.msra.mxu0 0.0
        %1225 = vmatprep.subr.mxu0 0.0
        %1226 = vmatpush2.msra.mxu0 0.0
        %1227 = vmatprep.subr.mxu0 0.0
        %1228 = vmatpush2.msra.mxu0 0.0
        %1229 = vmatprep.subr.mxu0 0.0
        %1230 = vmatpush2.msra.mxu0 0.0
        %1231 = vmatprep.mubr.f32.mxu0 0.0
        %1232 = vmatmul.mubr.f32.gmra.mxu0 %v1072
        %v1233 = vpop.f32.mrf.mxu0
        %v1234 = vadd.f32 0.0, %v1233
        %v1235 = vpop.f32.mrf.mxu0
        %1236 = vmatprep.mubr.f32.mxu0 0.0
        %1237 = vmatmul.mubr.f32.gmra.mxu0 %v1075
        %v1238 = vpop.f32.mrf.mxu0
        %v1239 = vadd.f32 0.0, %v1238
        %v1240 = vpop.f32.mrf.mxu0
        %1241 = vmatprep.mubr.f32.mxu0 0.0
        %1242 = vmatmul.mubr.f32.gmra.mxu0 %v1078
        %v1243 = vpop.f32.mrf.mxu0
        %v1244 = vadd.f32 0.0, %v1243
        %v1245 = vpop.f32.mrf.mxu0
        %1246 = vmatprep.mubr.f32.mxu0 0.0
        %1247 = vmatmul.mubr.f32.gmra.mxu0 %v1081
        %v1248 = vpop.f32.mrf.mxu0
        %v1249 = vadd.f32 0.0, %v1248
        %v1250 = vpop.f32.mrf.mxu0
        %1251 = vmatprep.mubr.f32.mxu0 0.0
        %1252 = vmatmul.mubr.f32.gmra.mxu0 %v1084
        %v1253 = vpop.f32.mrf.mxu0
        %v1254 = vadd.f32 0.0, %v1253
        %v1255 = vpop.f32.mrf.mxu0
        %1256 = vmatprep.mubr.f32.mxu0 0.0
        %1257 = vmatmul.mubr.f32.gmra.mxu0 %v1087
        %v1258 = vpop.f32.mrf.mxu0
        %v1259 = vadd.f32 0.0, %v1258
        %v1260 = vpop.f32.mrf.mxu0
        %1261 = vmatprep.mubr.f32.mxu0 0.0
        %1262 = vmatmul.mubr.f32.gmra.mxu0 %v1090
        %v1263 = vpop.f32.mrf.mxu0
        %v1264 = vadd.f32 0.0, %v1263
        %v1265 = vpop.f32.mrf.mxu0
        %1266 = vmatprep.mubr.f32.mxu0 0.0
        %1267 = vmatmul.mubr.f32.gmra.mxu0 %v1093
        %v1268 = vpop.f32.mrf.mxu0
        %v1269 = vadd.f32 0.0, %v1268
        %v1270 = vpop.f32.mrf.mxu0
        %1271 = vmatprep.mubr.f32.mxu0 0.0
        %1272 = vmatmul.mubr.f32.gmra.mxu0 %v1096
        %v1273 = vpop.f32.mrf.mxu0
        %v1274 = vadd.f32 0.0, %v1273
        %v1275 = vpop.f32.mrf.mxu0
        %1276 = vmatprep.mubr.f32.mxu0 0.0
        %1277 = vmatmul.mubr.f32.gmra.mxu0 %v1099
        %v1278 = vpop.f32.mrf.mxu0
        %v1279 = vadd.f32 0.0, %v1278
        %v1280 = vpop.f32.mrf.mxu0
        %1281 = vmatprep.mubr.f32.mxu0 0.0
        %1282 = vmatmul.mubr.f32.gmra.mxu0 %v1102
        %v1283 = vpop.f32.mrf.mxu0
        %v1284 = vadd.f32 0.0, %v1283
        %v1285 = vpop.f32.mrf.mxu0
        %1286 = vmatprep.mubr.f32.mxu0 0.0
        %1287 = vmatmul.mubr.f32.gmra.mxu0 %v1105
        %v1288 = vpop.f32.mrf.mxu0
        %v1289 = vadd.f32 0.0, %v1288
        %v1290 = vpop.f32.mrf.mxu0
        %1291 = vmatprep.mubr.f32.mxu0 0.0
        %1292 = vmatmul.mubr.f32.gmra.mxu0 %v1108
        %v1293 = vpop.f32.mrf.mxu0
        %v1294 = vadd.f32 0.0, %v1293
        %v1295 = vpop.f32.mrf.mxu0
        %1296 = vmatprep.mubr.f32.mxu0 0.0
        %1297 = vmatmul.mubr.f32.gmra.mxu0 %v1111
        %v1298 = vpop.f32.mrf.mxu0
        %v1299 = vadd.f32 0.0, %v1298
        %v1300 = vpop.f32.mrf.mxu0
        %1301 = vmatprep.mubr.f32.mxu0 0.0
        %1302 = vmatmul.mubr.f32.gmra.mxu0 %v1114
        %v1303 = vpop.f32.mrf.mxu0
        %v1304 = vadd.f32 0.0, %v1303
        %v1305 = vpop.f32.mrf.mxu0
        %1306 = vmatprep.mubr.f32.mxu0 0.0
        %1307 = vmatmul.mubr.f32.gmra.mxu0 %v1117
        %v1308 = vpop.f32.mrf.mxu0
        %v1309 = vadd.f32 0.0, %v1308
        %v1310 = vpop.f32.mrf.mxu0
        %1311 = vmatprep.mubr.f32.mxu0 0.0
        %1312 = vmatmul.mubr.f32.gmra.mxu0 %v1120
        %v1313 = vpop.f32.mrf.mxu0
        %v1314 = vadd.f32 0.0, %v1313
        %v1315 = vpop.f32.mrf.mxu0
        %1316 = vmatprep.mubr.f32.mxu0 0.0
        %1317 = vmatmul.mubr.f32.gmra.mxu0 %v1123
        %v1318 = vpop.f32.mrf.mxu0
        %v1319 = vadd.f32 0.0, %v1318
        %v1320 = vpop.f32.mrf.mxu0
        %1321 = vmatprep.mubr.f32.mxu0 0.0
        %1322 = vmatmul.mubr.f32.gmra.mxu0 %v1126
        %v1323 = vpop.f32.mrf.mxu0
        %v1324 = vadd.f32 0.0, %v1323
        %v1325 = vpop.f32.mrf.mxu0
        %1326 = vmatprep.mubr.f32.mxu0 0.0
        %1327 = vmatmul.mubr.f32.gmra.mxu0 %v1129
        %v1328 = vpop.f32.mrf.mxu0
        %v1329 = vadd.f32 0.0, %v1328
        %v1330 = vpop.f32.mrf.mxu0
        %1331 = vmatprep.mubr.f32.mxu0 0.0
        %1332 = vmatmul.mubr.f32.gmra.mxu0 %v1132
        %v1333 = vpop.f32.mrf.mxu0
        %v1334 = vadd.f32 0.0, %v1333
        %v1335 = vpop.f32.mrf.mxu0
        %1336 = vmatprep.mubr.f32.mxu0 0.0
        %1337 = vmatmul.mubr.f32.gmra.mxu0 %v1135
        %v1338 = vpop.f32.mrf.mxu0
        %v1339 = vadd.f32 0.0, %v1338
        %v1340 = vpop.f32.mrf.mxu0
        %1341 = vmatprep.mubr.f32.mxu0 0.0
        %1342 = vmatmul.mubr.f32.gmra.mxu0 %v1138
        %v1343 = vpop.f32.mrf.mxu0
        %v1344 = vadd.f32 0.0, %v1343
        %v1345 = vpop.f32.mrf.mxu0
        %1346 = vmatprep.mubr.f32.mxu0 0.0
        %1347 = vmatmul.mubr.f32.gmra.mxu0 %v1141
        %v1348 = vpop.f32.mrf.mxu0
        %v1349 = vadd.f32 0.0, %v1348
        %v1350 = vpop.f32.mrf.mxu0
        %1351 = vmatprep.mubr.f32.mxu0 0.0
        %1352 = vmatmul.mubr.f32.gmra.mxu0 %v1144
        %v1353 = vpop.f32.mrf.mxu0
        %v1354 = vadd.f32 0.0, %v1353
        %v1355 = vpop.f32.mrf.mxu0
        %1356 = vmatprep.mubr.f32.mxu0 0.0
        %1357 = vmatmul.mubr.f32.gmra.mxu0 %v1147
        %v1358 = vpop.f32.mrf.mxu0
        %v1359 = vadd.f32 0.0, %v1358
        %v1360 = vpop.f32.mrf.mxu0
        %1361 = vmatprep.mubr.f32.mxu0 0.0
        %1362 = vmatmul.mubr.f32.gmra.mxu0 %v1150
        %v1363 = vpop.f32.mrf.mxu0
        %v1364 = vadd.f32 0.0, %v1363
        %v1365 = vpop.f32.mrf.mxu0
        %1366 = vmatprep.mubr.f32.mxu0 0.0
        %1367 = vmatmul.mubr.f32.gmra.mxu0 %v1153
        %v1368 = vpop.f32.mrf.mxu0
        %v1369 = vadd.f32 0.0, %v1368
        %v1370 = vpop.f32.mrf.mxu0
        %1371 = vmatprep.mubr.f32.mxu0 0.0
        %1372 = vmatmul.mubr.f32.gmra.mxu0 %v1156
        %v1373 = vpop.f32.mrf.mxu0
        %v1374 = vadd.f32 0.0, %v1373
        %v1375 = vpop.f32.mrf.mxu0
        %1376 = vmatprep.mubr.f32.mxu0 0.0
        %1377 = vmatmul.mubr.f32.gmra.mxu0 %v1159
        %v1378 = vpop.f32.mrf.mxu0
        %v1379 = vadd.f32 0.0, %v1378
        %v1380 = vpop.f32.mrf.mxu0
        %1381 = vmatprep.mubr.f32.mxu0 0.0
        %1382 = vmatmul.mubr.f32.gmra.mxu0 %v1162
        %v1383 = vpop.f32.mrf.mxu0
        %v1384 = vadd.f32 0.0, %v1383
        %v1385 = vpop.f32.mrf.mxu0
        %1386 = vmatprep.mubr.f32.mxu0 0.0
        %1387 = vmatmul.mubr.f32.gmra.mxu0 %v1165
        %v1388 = vpop.f32.mrf.mxu0
        %v1389 = vadd.f32 0.0, %v1388
        %v1390 = vpop.f32.mrf.mxu0
        %1391 = vdwg.mxu0
        %v1392 = vld [vmem:[#allocation2] sm:$0xff]
        %v1393 = vld [vmem:[#allocation2 + $0x8] sm:$0xff]
        %v1394 = vld [vmem:[#allocation2 + $0x10] sm:$0xff]
        %v1395 = vld [vmem:[#allocation2 + $0x18] sm:$0xff]
        %v1396 = vld [vmem:[#allocation2 + $0x20] sm:$0xff]
        %v1397 = vld [vmem:[#allocation2 + $0x28] sm:$0xff]
        %v1398 = vld [vmem:[#allocation2 + $0x30] sm:$0xff]
        %v1399 = vld [vmem:[#allocation2 + $0x38] sm:$0xff]
        %v1400 = vld [vmem:[#allocation2 + $0x40] sm:$0xff]
        %v1401 = vld [vmem:[#allocation2 + $0x48] sm:$0xff]
        %v1402 = vld [vmem:[#allocation2 + $0x50] sm:$0xff]
        %v1403 = vld [vmem:[#allocation2 + $0x58] sm:$0xff]
        %v1404 = vld [vmem:[#allocation2 + $0x60] sm:$0xff]
        %v1405 = vld [vmem:[#allocation2 + $0x68] sm:$0xff]
        %v1406 = vld [vmem:[#allocation2 + $0x70] sm:$0xff]
        %v1407 = vld [vmem:[#allocation2 + $0x78] sm:$0xff]
        %v1408 = vld [vmem:[#allocation2 + $0x80] sm:$0xff]
        %v1409 = vld [vmem:[#allocation2 + $0x88] sm:$0xff]
        %v1410 = vld [vmem:[#allocation2 + $0x90] sm:$0xff]
        %v1411 = vld [vmem:[#allocation2 + $0x98] sm:$0xff]
        %v1412 = vld [vmem:[#allocation2 + $0xa0] sm:$0xff]
        %v1413 = vld [vmem:[#allocation2 + $0xa8] sm:$0xff]
        %v1414 = vld [vmem:[#allocation2 + $0xb0] sm:$0xff]
        %v1415 = vld [vmem:[#allocation2 + $0xb8] sm:$0xff]
        %v1416 = vld [vmem:[#allocation2 + $0xc0] sm:$0xff]
        %v1417 = vld [vmem:[#allocation2 + $0xc8] sm:$0xff]
        %v1418 = vld [vmem:[#allocation2 + $0xd0] sm:$0xff]
        %v1419 = vld [vmem:[#allocation2 + $0xd8] sm:$0xff]
        %v1420 = vld [vmem:[#allocation2 + $0xe0] sm:$0xff]
        %v1421 = vld [vmem:[#allocation2 + $0xe8] sm:$0xff]
        %v1422 = vld [vmem:[#allocation2 + $0xf0] sm:$0xff]
        %v1423 = vld [vmem:[#allocation2 + $0xf8] sm:$0xff]
        %v1425 = vsel %vm1070, %v1392, 0
        %v1428 = vsel %vm1070, %v1393, 0
        %v1431 = vsel %vm1070, %v1394, 0
        %v1434 = vsel %vm1070, %v1395, 0
        %v1437 = vsel %vm1070, %v1396, 0
        %v1440 = vsel %vm1070, %v1397, 0
        %v1443 = vsel %vm1070, %v1398, 0
        %v1446 = vsel %vm1070, %v1399, 0
        %v1449 = vsel %vm1070, %v1400, 0
        %v1452 = vsel %vm1070, %v1401, 0
        %v1455 = vsel %vm1070, %v1402, 0
        %v1458 = vsel %vm1070, %v1403, 0
        %v1461 = vsel %vm1070, %v1404, 0
        %v1464 = vsel %vm1070, %v1405, 0
        %v1467 = vsel %vm1070, %v1406, 0
        %v1470 = vsel %vm1070, %v1407, 0
        %v1473 = vsel %vm1070, %v1408, 0
        %v1476 = vsel %vm1070, %v1409, 0
        %v1479 = vsel %vm1070, %v1410, 0
        %v1482 = vsel %vm1070, %v1411, 0
        %v1485 = vsel %vm1070, %v1412, 0
        %v1488 = vsel %vm1070, %v1413, 0
        %v1491 = vsel %vm1070, %v1414, 0
        %v1494 = vsel %vm1070, %v1415, 0
        %v1497 = vsel %vm1070, %v1416, 0
        %v1500 = vsel %vm1070, %v1417, 0
        %v1503 = vsel %vm1070, %v1418, 0
        %v1506 = vsel %vm1070, %v1419, 0
        %v1509 = vsel %vm1070, %v1420, 0
        %v1512 = vsel %vm1070, %v1421, 0
        %v1515 = vsel %vm1070, %v1422, 0
        %v1518 = vsel %vm1070, %v1423, 0
        %v1521 = vsel %vm1070, %v1234, 0
        %v1524 = vsel %vm1070, %v1239, 0
        %v1527 = vsel %vm1070, %v1244, 0
        %v1530 = vsel %vm1070, %v1249, 0
        %v1533 = vsel %vm1070, %v1254, 0
        %v1536 = vsel %vm1070, %v1259, 0
        %v1539 = vsel %vm1070, %v1264, 0
        %v1542 = vsel %vm1070, %v1269, 0
        %v1545 = vsel %vm1070, %v1274, 0
        %v1548 = vsel %vm1070, %v1279, 0
        %v1551 = vsel %vm1070, %v1284, 0
        %v1554 = vsel %vm1070, %v1289, 0
        %v1557 = vsel %vm1070, %v1294, 0
        %v1560 = vsel %vm1070, %v1299, 0
        %v1563 = vsel %vm1070, %v1304, 0
        %v1566 = vsel %vm1070, %v1309, 0
        %v1569 = vsel %vm1070, %v1314, 0
        %v1572 = vsel %vm1070, %v1319, 0
        %v1575 = vsel %vm1070, %v1324, 0
        %v1578 = vsel %vm1070, %v1329, 0
        %v1581 = vsel %vm1070, %v1334, 0
        %v1584 = vsel %vm1070, %v1339, 0
        %v1587 = vsel %vm1070, %v1344, 0
        %v1590 = vsel %vm1070, %v1349, 0
        %v1593 = vsel %vm1070, %v1354, 0
        %v1596 = vsel %vm1070, %v1359, 0
        %v1599 = vsel %vm1070, %v1364, 0
        %v1602 = vsel %vm1070, %v1369, 0
        %v1605 = vsel %vm1070, %v1374, 0
        %v1608 = vsel %vm1070, %v1379, 0
        %v1611 = vsel %vm1070, %v1384, 0
        %v1614 = vsel %vm1070, %v1389, 0
        %1616 = vmatprep.subr.mxu0 0.0
        %1617 = vmatpush1.xpose.msra.mxu0 %v1566
        %1618 = vmatprep.subr.mxu0 0.0
        %1619 = vmatpush1.xpose.msra.mxu0 %v1563
        %1620 = vmatprep.subr.mxu0 0.0
        %1621 = vmatpush1.xpose.msra.mxu0 %v1560
        %1622 = vmatprep.subr.mxu0 0.0
        %1623 = vmatpush1.xpose.msra.mxu0 %v1557
        %1624 = vmatprep.subr.mxu0 0.0
        %1625 = vmatpush1.xpose.msra.mxu0 %v1554
        %1626 = vmatprep.subr.mxu0 0.0
        %1627 = vmatpush1.xpose.msra.mxu0 %v1551
        %1628 = vmatprep.subr.mxu0 0.0
        %1629 = vmatpush1.xpose.msra.mxu0 %v1548
        %1630 = vmatprep.subr.mxu0 0.0
        %1631 = vmatpush1.xpose.msra.mxu0 %v1545
        %1632 = vmatprep.subr.mxu0 0.0
        %1633 = vmatpush1.xpose.msra.mxu0 %v1542
        %1634 = vmatprep.subr.mxu0 0.0
        %1635 = vmatpush1.xpose.msra.mxu0 %v1539
        %1636 = vmatprep.subr.mxu0 0.0
        %1637 = vmatpush1.xpose.msra.mxu0 %v1536
        %1638 = vmatprep.subr.mxu0 0.0
        %1639 = vmatpush1.xpose.msra.mxu0 %v1533
        %1640 = vmatprep.subr.mxu0 0.0
        %1641 = vmatpush1.xpose.msra.mxu0 %v1530
        %1642 = vmatprep.subr.mxu0 0.0
        %1643 = vmatpush1.xpose.msra.mxu0 %v1527
        %1644 = vmatprep.subr.mxu0 0.0
        %1645 = vmatpush1.xpose.msra.mxu0 %v1524
        %1646 = vmatprep.subr.mxu0 0.0
        %1647 = vmatpush1.xpose.msra.mxu0 %v1521
        %1648 = vmatprep.subr.mxu0 0.0
        %1649 = vmatpush2.xpose.msra.mxu0 %v1614
        %1650 = vmatprep.subr.mxu0 0.0
        %1651 = vmatpush2.xpose.msra.mxu0 %v1611
        %1652 = vmatprep.subr.mxu0 0.0
        %1653 = vmatpush2.xpose.msra.mxu0 %v1608
        %1654 = vmatprep.subr.mxu0 0.0
        %1655 = vmatpush2.xpose.msra.mxu0 %v1605
        %1656 = vmatprep.subr.mxu0 0.0
        %1657 = vmatpush2.xpose.msra.mxu0 %v1602
        %1658 = vmatprep.subr.mxu0 0.0
        %1659 = vmatpush2.xpose.msra.mxu0 %v1599
        %1660 = vmatprep.subr.mxu0 0.0
        %1661 = vmatpush2.xpose.msra.mxu0 %v1596
        %1662 = vmatprep.subr.mxu0 0.0
        %1663 = vmatpush2.xpose.msra.mxu0 %v1593
        %1664 = vmatprep.subr.mxu0 0.0
        %1665 = vmatpush2.xpose.msra.mxu0 %v1590
        %1666 = vmatprep.subr.mxu0 0.0
        %1667 = vmatpush2.xpose.msra.mxu0 %v1587
        %1668 = vmatprep.subr.mxu0 0.0
        %1669 = vmatpush2.xpose.msra.mxu0 %v1584
        %1670 = vmatprep.subr.mxu0 0.0
        %1671 = vmatpush2.xpose.msra.mxu0 %v1581
        %1672 = vmatprep.subr.mxu0 0.0
        %1673 = vmatpush2.xpose.msra.mxu0 %v1578
        %1674 = vmatprep.subr.mxu0 0.0
        %1675 = vmatpush2.xpose.msra.mxu0 %v1575
        %1676 = vmatprep.subr.mxu0 0.0
        %1677 = vmatpush2.xpose.msra.mxu0 %v1572
        %1678 = vmatprep.subr.mxu0 0.0
        %1679 = vmatpush2.xpose.msra.mxu0 %v1569
        %1680 = vmatprep.mubr.f32.mxu0 0.0
        %1681 = vmatmul.mubr.f32.gmra.mxu0 %v1425
        %v1682 = vpop.f32.mrf.mxu0
        %v1683 = vadd.f32 0.0, %v1682
        %v1684 = vpop.f32.mrf.mxu0
        %v1685 = vadd.f32 0.0, %v1684
        %1686 = vmatprep.mubr.f32.mxu0 0.0
        %1687 = vmatmul.mubr.f32.gmra.mxu0 %v1428
        %v1688 = vpop.f32.mrf.mxu0
        %v1689 = vadd.f32 0.0, %v1688
        %v1690 = vpop.f32.mrf.mxu0
        %v1691 = vadd.f32 0.0, %v1690
        %1692 = vmatprep.mubr.f32.mxu0 0.0
        %1693 = vmatmul.mubr.f32.gmra.mxu0 %v1431
        %v1694 = vpop.f32.mrf.mxu0
        %v1695 = vadd.f32 0.0, %v1694
        %v1696 = vpop.f32.mrf.mxu0
        %v1697 = vadd.f32 0.0, %v1696
        %1698 = vmatprep.mubr.f32.mxu0 0.0
        %1699 = vmatmul.mubr.f32.gmra.mxu0 %v1434
        %v1700 = vpop.f32.mrf.mxu0
        %v1701 = vadd.f32 0.0, %v1700
        %v1702 = vpop.f32.mrf.mxu0
        %v1703 = vadd.f32 0.0, %v1702
        %1704 = vmatprep.mubr.f32.mxu0 0.0
        %1705 = vmatmul.mubr.f32.gmra.mxu0 %v1437
        %v1706 = vpop.f32.mrf.mxu0
        %v1707 = vadd.f32 0.0, %v1706
        %v1708 = vpop.f32.mrf.mxu0
        %v1709 = vadd.f32 0.0, %v1708
        %1710 = vmatprep.mubr.f32.mxu0 0.0
        %1711 = vmatmul.mubr.f32.gmra.mxu0 %v1440
        %v1712 = vpop.f32.mrf.mxu0
        %v1713 = vadd.f32 0.0, %v1712
        %v1714 = vpop.f32.mrf.mxu0
        %v1715 = vadd.f32 0.0, %v1714
        %1716 = vmatprep.mubr.f32.mxu0 0.0
        %1717 = vmatmul.mubr.f32.gmra.mxu0 %v1443
        %v1718 = vpop.f32.mrf.mxu0
        %v1719 = vadd.f32 0.0, %v1718
        %v1720 = vpop.f32.mrf.mxu0
        %v1721 = vadd.f32 0.0, %v1720
        %1722 = vmatprep.mubr.f32.mxu0 0.0
        %1723 = vmatmul.mubr.f32.gmra.mxu0 %v1446
        %v1724 = vpop.f32.mrf.mxu0
        %v1725 = vadd.f32 0.0, %v1724
        %v1726 = vpop.f32.mrf.mxu0
        %v1727 = vadd.f32 0.0, %v1726
        %1728 = vmatprep.mubr.f32.mxu0 0.0
        %1729 = vmatmul.mubr.f32.gmra.mxu0 %v1449
        %v1730 = vpop.f32.mrf.mxu0
        %v1731 = vadd.f32 0.0, %v1730
        %v1732 = vpop.f32.mrf.mxu0
        %v1733 = vadd.f32 0.0, %v1732
        %1734 = vmatprep.mubr.f32.mxu0 0.0
        %1735 = vmatmul.mubr.f32.gmra.mxu0 %v1452
        %v1736 = vpop.f32.mrf.mxu0
        %v1737 = vadd.f32 0.0, %v1736
        %v1738 = vpop.f32.mrf.mxu0
        %v1739 = vadd.f32 0.0, %v1738
        %1740 = vmatprep.mubr.f32.mxu0 0.0
        %1741 = vmatmul.mubr.f32.gmra.mxu0 %v1455
        %v1742 = vpop.f32.mrf.mxu0
        %v1743 = vadd.f32 0.0, %v1742
        %v1744 = vpop.f32.mrf.mxu0
        %v1745 = vadd.f32 0.0, %v1744
        %1746 = vmatprep.mubr.f32.mxu0 0.0
        %1747 = vmatmul.mubr.f32.gmra.mxu0 %v1458
        %v1748 = vpop.f32.mrf.mxu0
        %v1749 = vadd.f32 0.0, %v1748
        %v1750 = vpop.f32.mrf.mxu0
        %v1751 = vadd.f32 0.0, %v1750
        %1752 = vmatprep.mubr.f32.mxu0 0.0
        %1753 = vmatmul.mubr.f32.gmra.mxu0 %v1461
        %v1754 = vpop.f32.mrf.mxu0
        %v1755 = vadd.f32 0.0, %v1754
        %v1756 = vpop.f32.mrf.mxu0
        %v1757 = vadd.f32 0.0, %v1756
        %1758 = vmatprep.mubr.f32.mxu0 0.0
        %1759 = vmatmul.mubr.f32.gmra.mxu0 %v1464
        %v1760 = vpop.f32.mrf.mxu0
        %v1761 = vadd.f32 0.0, %v1760
        %v1762 = vpop.f32.mrf.mxu0
        %v1763 = vadd.f32 0.0, %v1762
        %1764 = vmatprep.mubr.f32.mxu0 0.0
        %1765 = vmatmul.mubr.f32.gmra.mxu0 %v1467
        %v1766 = vpop.f32.mrf.mxu0
        %v1767 = vadd.f32 0.0, %v1766
        %v1768 = vpop.f32.mrf.mxu0
        %v1769 = vadd.f32 0.0, %v1768
        %1770 = vmatprep.mubr.f32.mxu0 0.0
        %1771 = vmatmul.mubr.f32.gmra.mxu0 %v1470
        %v1772 = vpop.f32.mrf.mxu0
        %v1773 = vadd.f32 0.0, %v1772
        %v1774 = vpop.f32.mrf.mxu0
        %v1775 = vadd.f32 0.0, %v1774
        %1776 = vmatprep.mubr.f32.mxu0 0.0
        %1777 = vmatmul.mubr.f32.gmra.mxu0 %v1473
        %v1778 = vpop.f32.mrf.mxu0
        %v1779 = vadd.f32 0.0, %v1778
        %v1780 = vpop.f32.mrf.mxu0
        %v1781 = vadd.f32 0.0, %v1780
        %1782 = vmatprep.mubr.f32.mxu0 0.0
        %1783 = vmatmul.mubr.f32.gmra.mxu0 %v1476
        %v1784 = vpop.f32.mrf.mxu0
        %v1785 = vadd.f32 0.0, %v1784
        %v1786 = vpop.f32.mrf.mxu0
        %v1787 = vadd.f32 0.0, %v1786
        %1788 = vmatprep.mubr.f32.mxu0 0.0
        %1789 = vmatmul.mubr.f32.gmra.mxu0 %v1479
        %v1790 = vpop.f32.mrf.mxu0
        %v1791 = vadd.f32 0.0, %v1790
        %v1792 = vpop.f32.mrf.mxu0
        %v1793 = vadd.f32 0.0, %v1792
        %1794 = vmatprep.mubr.f32.mxu0 0.0
        %1795 = vmatmul.mubr.f32.gmra.mxu0 %v1482
        %v1796 = vpop.f32.mrf.mxu0
        %v1797 = vadd.f32 0.0, %v1796
        %v1798 = vpop.f32.mrf.mxu0
        %v1799 = vadd.f32 0.0, %v1798
        %1800 = vmatprep.mubr.f32.mxu0 0.0
        %1801 = vmatmul.mubr.f32.gmra.mxu0 %v1485
        %v1802 = vpop.f32.mrf.mxu0
        %v1803 = vadd.f32 0.0, %v1802
        %v1804 = vpop.f32.mrf.mxu0
        %v1805 = vadd.f32 0.0, %v1804
        %1806 = vmatprep.mubr.f32.mxu0 0.0
        %1807 = vmatmul.mubr.f32.gmra.mxu0 %v1488
        %v1808 = vpop.f32.mrf.mxu0
        %v1809 = vadd.f32 0.0, %v1808
        %v1810 = vpop.f32.mrf.mxu0
        %v1811 = vadd.f32 0.0, %v1810
        %1812 = vmatprep.mubr.f32.mxu0 0.0
        %1813 = vmatmul.mubr.f32.gmra.mxu0 %v1491
        %v1814 = vpop.f32.mrf.mxu0
        %v1815 = vadd.f32 0.0, %v1814
        %v1816 = vpop.f32.mrf.mxu0
        %v1817 = vadd.f32 0.0, %v1816
        %1818 = vmatprep.mubr.f32.mxu0 0.0
        %1819 = vmatmul.mubr.f32.gmra.mxu0 %v1494
        %v1820 = vpop.f32.mrf.mxu0
        %v1821 = vadd.f32 0.0, %v1820
        %v1822 = vpop.f32.mrf.mxu0
        %v1823 = vadd.f32 0.0, %v1822
        %1824 = vmatprep.mubr.f32.mxu0 0.0
        %1825 = vmatmul.mubr.f32.gmra.mxu0 %v1497
        %v1826 = vpop.f32.mrf.mxu0
        %v1827 = vadd.f32 0.0, %v1826
        %v1828 = vpop.f32.mrf.mxu0
        %v1829 = vadd.f32 0.0, %v1828
        %1830 = vmatprep.mubr.f32.mxu0 0.0
        %1831 = vmatmul.mubr.f32.gmra.mxu0 %v1500
        %v1832 = vpop.f32.mrf.mxu0
        %v1833 = vadd.f32 0.0, %v1832
        %v1834 = vpop.f32.mrf.mxu0
        %v1835 = vadd.f32 0.0, %v1834
        %1836 = vmatprep.mubr.f32.mxu0 0.0
        %1837 = vmatmul.mubr.f32.gmra.mxu0 %v1503
        %v1838 = vpop.f32.mrf.mxu0
        %v1839 = vadd.f32 0.0, %v1838
        %v1840 = vpop.f32.mrf.mxu0
        %v1841 = vadd.f32 0.0, %v1840
        %1842 = vmatprep.mubr.f32.mxu0 0.0
        %1843 = vmatmul.mubr.f32.gmra.mxu0 %v1506
        %v1844 = vpop.f32.mrf.mxu0
        %v1845 = vadd.f32 0.0, %v1844
        %v1846 = vpop.f32.mrf.mxu0
        %v1847 = vadd.f32 0.0, %v1846
        %1848 = vmatprep.mubr.f32.mxu0 0.0
        %1849 = vmatmul.mubr.f32.gmra.mxu0 %v1509
        %v1850 = vpop.f32.mrf.mxu0
        %v1851 = vadd.f32 0.0, %v1850
        %v1852 = vpop.f32.mrf.mxu0
        %v1853 = vadd.f32 0.0, %v1852
        %1854 = vmatprep.mubr.f32.mxu0 0.0
        %1855 = vmatmul.mubr.f32.gmra.mxu0 %v1512
        %v1856 = vpop.f32.mrf.mxu0
        %v1857 = vadd.f32 0.0, %v1856
        %v1858 = vpop.f32.mrf.mxu0
        %v1859 = vadd.f32 0.0, %v1858
        %1860 = vmatprep.mubr.f32.mxu0 0.0
        %1861 = vmatmul.mubr.f32.gmra.mxu0 %v1515
        %v1862 = vpop.f32.mrf.mxu0
        %v1863 = vadd.f32 0.0, %v1862
        %v1864 = vpop.f32.mrf.mxu0
        %v1865 = vadd.f32 0.0, %v1864
        %1866 = vmatprep.mubr.f32.mxu0 0.0
        %1867 = vmatmul.mubr.f32.gmra.mxu0 %v1518
        %v1868 = vpop.f32.mrf.mxu0
        %v1869 = vadd.f32 0.0, %v1868
        %v1870 = vpop.f32.mrf.mxu0
        %v1871 = vadd.f32 0.0, %v1870
        %1872 = vdwg.mxu0
        %v1873 = vld [vmem:[%s472] sm:$0xff]
        %v1874 = vld [vmem:[%s472 + $0x8] sm:$0xff]
        %v1875 = vld [vmem:[%s472 + $0x10] sm:$0xff]
        %v1876 = vld [vmem:[%s472 + $0x18] sm:$0xff]
        %v1877 = vld [vmem:[%s472 + $0x20] sm:$0xff]
        %v1878 = vld [vmem:[%s472 + $0x28] sm:$0xff]
        %v1879 = vld [vmem:[%s472 + $0x30] sm:$0xff]
        %v1880 = vld [vmem:[%s472 + $0x38] sm:$0xff]
        %v1881 = vld [vmem:[%s472 + $0x40] sm:$0xff]
        %v1882 = vld [vmem:[%s472 + $0x48] sm:$0xff]
        %v1883 = vld [vmem:[%s472 + $0x50] sm:$0xff]
        %v1884 = vld [vmem:[%s472 + $0x58] sm:$0xff]
        %v1885 = vld [vmem:[%s472 + $0x60] sm:$0xff]
        %v1886 = vld [vmem:[%s472 + $0x68] sm:$0xff]
        %v1887 = vld [vmem:[%s472 + $0x70] sm:$0xff]
        %v1888 = vld [vmem:[%s472 + $0x78] sm:$0xff]
        %v1889 = vld [vmem:[%s472 + $0x80] sm:$0xff]
        %v1890 = vld [vmem:[%s472 + $0x88] sm:$0xff]
        %v1891 = vld [vmem:[%s472 + $0x90] sm:$0xff]
        %v1892 = vld [vmem:[%s472 + $0x98] sm:$0xff]
        %v1893 = vld [vmem:[%s472 + $0xa0] sm:$0xff]
        %v1894 = vld [vmem:[%s472 + $0xa8] sm:$0xff]
        %v1895 = vld [vmem:[%s472 + $0xb0] sm:$0xff]
        %v1896 = vld [vmem:[%s472 + $0xb8] sm:$0xff]
        %v1897 = vld [vmem:[%s472 + $0xc0] sm:$0xff]
        %v1898 = vld [vmem:[%s472 + $0xc8] sm:$0xff]
        %v1899 = vld [vmem:[%s472 + $0xd0] sm:$0xff]
        %v1900 = vld [vmem:[%s472 + $0xd8] sm:$0xff]
        %v1901 = vld [vmem:[%s472 + $0xe0] sm:$0xff]
        %v1902 = vld [vmem:[%s472 + $0xe8] sm:$0xff]
        %v1903 = vld [vmem:[%s472 + $0xf0] sm:$0xff]
        %v1904 = vld [vmem:[%s472 + $0xf8] sm:$0xff]
        %v1905 = vunpack.c.l.bf16 %v1873
        %v1906 = vunpack.c.h.bf16 %v1873
        %v1907 = vunpack.c.l.bf16 %v1874
        %v1908 = vunpack.c.h.bf16 %v1874
        %v1909 = vunpack.c.l.bf16 %v1875
        %v1910 = vunpack.c.h.bf16 %v1875
        %v1911 = vunpack.c.l.bf16 %v1876
        %v1912 = vunpack.c.h.bf16 %v1876
        %v1913 = vunpack.c.l.bf16 %v1877
        %v1914 = vunpack.c.h.bf16 %v1877
        %v1915 = vunpack.c.l.bf16 %v1878
        %v1916 = vunpack.c.h.bf16 %v1878
        %v1917 = vunpack.c.l.bf16 %v1879
        %v1918 = vunpack.c.h.bf16 %v1879
        %v1919 = vunpack.c.l.bf16 %v1880
        %v1920 = vunpack.c.h.bf16 %v1880
        %v1921 = vunpack.c.l.bf16 %v1881
        %v1922 = vunpack.c.h.bf16 %v1881
        %v1923 = vunpack.c.l.bf16 %v1882
        %v1924 = vunpack.c.h.bf16 %v1882
        %v1925 = vunpack.c.l.bf16 %v1883
        %v1926 = vunpack.c.h.bf16 %v1883
        %v1927 = vunpack.c.l.bf16 %v1884
        %v1928 = vunpack.c.h.bf16 %v1884
        %v1929 = vunpack.c.l.bf16 %v1885
        %v1930 = vunpack.c.h.bf16 %v1885
        %v1931 = vunpack.c.l.bf16 %v1886
        %v1932 = vunpack.c.h.bf16 %v1886
        %v1933 = vunpack.c.l.bf16 %v1887
        %v1934 = vunpack.c.h.bf16 %v1887
        %v1935 = vunpack.c.l.bf16 %v1888
        %v1936 = vunpack.c.h.bf16 %v1888
        %v1937 = vunpack.c.l.bf16 %v1889
        %v1938 = vunpack.c.h.bf16 %v1889
        %v1939 = vunpack.c.l.bf16 %v1890
        %v1940 = vunpack.c.h.bf16 %v1890
        %v1941 = vunpack.c.l.bf16 %v1891
        %v1942 = vunpack.c.h.bf16 %v1891
        %v1943 = vunpack.c.l.bf16 %v1892
        %v1944 = vunpack.c.h.bf16 %v1892
        %v1945 = vunpack.c.l.bf16 %v1893
        %v1946 = vunpack.c.h.bf16 %v1893
        %v1947 = vunpack.c.l.bf16 %v1894
        %v1948 = vunpack.c.h.bf16 %v1894
        %v1949 = vunpack.c.l.bf16 %v1895
        %v1950 = vunpack.c.h.bf16 %v1895
        %v1951 = vunpack.c.l.bf16 %v1896
        %v1952 = vunpack.c.h.bf16 %v1896
        %v1953 = vunpack.c.l.bf16 %v1897
        %v1954 = vunpack.c.h.bf16 %v1897
        %v1955 = vunpack.c.l.bf16 %v1898
        %v1956 = vunpack.c.h.bf16 %v1898
        %v1957 = vunpack.c.l.bf16 %v1899
        %v1958 = vunpack.c.h.bf16 %v1899
        %v1959 = vunpack.c.l.bf16 %v1900
        %v1960 = vunpack.c.h.bf16 %v1900
        %v1961 = vunpack.c.l.bf16 %v1901
        %v1962 = vunpack.c.h.bf16 %v1901
        %v1963 = vunpack.c.l.bf16 %v1902
        %v1964 = vunpack.c.h.bf16 %v1902
        %v1965 = vunpack.c.l.bf16 %v1903
        %v1966 = vunpack.c.h.bf16 %v1903
        %v1967 = vunpack.c.l.bf16 %v1904
        %v1968 = vunpack.c.h.bf16 %v1904
        %vm1969 = vcmp.lt.f32.partialorder %v1683, %v1905
        %vm1970 = vcmp.lt.f32.partialorder %v1685, %v1906
        %vm1971 = vcmp.lt.f32.partialorder %v1689, %v1907
        %vm1972 = vcmp.lt.f32.partialorder %v1691, %v1908
        %vm1973 = vcmp.lt.f32.partialorder %v1695, %v1909
        %vm1974 = vcmp.lt.f32.partialorder %v1697, %v1910
        %vm1975 = vcmp.lt.f32.partialorder %v1701, %v1911
        %vm1976 = vcmp.lt.f32.partialorder %v1703, %v1912
        %vm1977 = vcmp.lt.f32.partialorder %v1707, %v1913
        %vm1978 = vcmp.lt.f32.partialorder %v1709, %v1914
        %vm1979 = vcmp.lt.f32.partialorder %v1713, %v1915
        %vm1980 = vcmp.lt.f32.partialorder %v1715, %v1916
        %vm1981 = vcmp.lt.f32.partialorder %v1719, %v1917
        %vm1982 = vcmp.lt.f32.partialorder %v1721, %v1918
        %vm1983 = vcmp.lt.f32.partialorder %v1725, %v1919
        %vm1984 = vcmp.lt.f32.partialorder %v1727, %v1920
        %vm1985 = vcmp.lt.f32.partialorder %v1731, %v1921
        %vm1986 = vcmp.lt.f32.partialorder %v1733, %v1922
        %vm1987 = vcmp.lt.f32.partialorder %v1737, %v1923
        %vm1988 = vcmp.lt.f32.partialorder %v1739, %v1924
        %vm1989 = vcmp.lt.f32.partialorder %v1743, %v1925
        %vm1990 = vcmp.lt.f32.partialorder %v1745, %v1926
        %vm1991 = vcmp.lt.f32.partialorder %v1749, %v1927
        %vm1992 = vcmp.lt.f32.partialorder %v1751, %v1928
        %vm1993 = vcmp.lt.f32.partialorder %v1755, %v1929
        %vm1994 = vcmp.lt.f32.partialorder %v1757, %v1930
        %vm1995 = vcmp.lt.f32.partialorder %v1761, %v1931
        %vm1996 = vcmp.lt.f32.partialorder %v1763, %v1932
        %vm1997 = vcmp.lt.f32.partialorder %v1767, %v1933
        %vm1998 = vcmp.lt.f32.partialorder %v1769, %v1934
        %vm1999 = vcmp.lt.f32.partialorder %v1773, %v1935
        %vm2000 = vcmp.lt.f32.partialorder %v1775, %v1936
        %vm2001 = vcmp.lt.f32.partialorder %v1779, %v1937
        %vm2002 = vcmp.lt.f32.partialorder %v1781, %v1938
        %vm2003 = vcmp.lt.f32.partialorder %v1785, %v1939
        %vm2004 = vcmp.lt.f32.partialorder %v1787, %v1940
        %vm2005 = vcmp.lt.f32.partialorder %v1791, %v1941
        %vm2006 = vcmp.lt.f32.partialorder %v1793, %v1942
        %vm2007 = vcmp.lt.f32.partialorder %v1797, %v1943
        %vm2008 = vcmp.lt.f32.partialorder %v1799, %v1944
        %vm2009 = vcmp.lt.f32.partialorder %v1803, %v1945
        %vm2010 = vcmp.lt.f32.partialorder %v1805, %v1946
        %vm2011 = vcmp.lt.f32.partialorder %v1809, %v1947
        %vm2012 = vcmp.lt.f32.partialorder %v1811, %v1948
        %vm2013 = vcmp.lt.f32.partialorder %v1815, %v1949
        %vm2014 = vcmp.lt.f32.partialorder %v1817, %v1950
        %vm2015 = vcmp.lt.f32.partialorder %v1821, %v1951
        %vm2016 = vcmp.lt.f32.partialorder %v1823, %v1952
        %vm2017 = vcmp.lt.f32.partialorder %v1827, %v1953
        %vm2018 = vcmp.lt.f32.partialorder %v1829, %v1954
        %vm2019 = vcmp.lt.f32.partialorder %v1833, %v1955
        %vm2020 = vcmp.lt.f32.partialorder %v1835, %v1956
        %vm2021 = vcmp.lt.f32.partialorder %v1839, %v1957
        %vm2022 = vcmp.lt.f32.partialorder %v1841, %v1958
        %vm2023 = vcmp.lt.f32.partialorder %v1845, %v1959
        %vm2024 = vcmp.lt.f32.partialorder %v1847, %v1960
        %vm2025 = vcmp.lt.f32.partialorder %v1851, %v1961
        %vm2026 = vcmp.lt.f32.partialorder %v1853, %v1962
        %vm2027 = vcmp.lt.f32.partialorder %v1857, %v1963
        %vm2028 = vcmp.lt.f32.partialorder %v1859, %v1964
        %vm2029 = vcmp.lt.f32.partialorder %v1863, %v1965
        %vm2030 = vcmp.lt.f32.partialorder %v1865, %v1966
        %vm2031 = vcmp.lt.f32.partialorder %v1869, %v1967
        %vm2032 = vcmp.lt.f32.partialorder %v1871, %v1968
        %v2033 = vsub.f32 %v1683, 100.0
        %v2034 = vsub.f32 %v1685, 100.0
        %v2035 = vsub.f32 %v1689, 100.0
        %v2036 = vsub.f32 %v1691, 100.0
        %v2037 = vsub.f32 %v1695, 100.0
        %v2038 = vsub.f32 %v1697, 100.0
        %v2039 = vsub.f32 %v1701, 100.0
        %v2040 = vsub.f32 %v1703, 100.0
        %v2041 = vsub.f32 %v1707, 100.0
        %v2042 = vsub.f32 %v1709, 100.0
        %v2043 = vsub.f32 %v1713, 100.0
        %v2044 = vsub.f32 %v1715, 100.0
        %v2045 = vsub.f32 %v1719, 100.0
        %v2046 = vsub.f32 %v1721, 100.0
        %v2047 = vsub.f32 %v1725, 100.0
        %v2048 = vsub.f32 %v1727, 100.0
        %v2049 = vsub.f32 %v1731, 100.0
        %v2050 = vsub.f32 %v1733, 100.0
        %v2051 = vsub.f32 %v1737, 100.0
        %v2052 = vsub.f32 %v1739, 100.0
        %v2053 = vsub.f32 %v1743, 100.0
        %v2054 = vsub.f32 %v1745, 100.0
        %v2055 = vsub.f32 %v1749, 100.0
        %v2056 = vsub.f32 %v1751, 100.0
        %v2057 = vsub.f32 %v1755, 100.0
        %v2058 = vsub.f32 %v1757, 100.0
        %v2059 = vsub.f32 %v1761, 100.0
        %v2060 = vsub.f32 %v1763, 100.0
        %v2061 = vsub.f32 %v1767, 100.0
        %v2062 = vsub.f32 %v1769, 100.0
        %v2063 = vsub.f32 %v1773, 100.0
        %v2064 = vsub.f32 %v1775, 100.0
        %v2065 = vsub.f32 %v1779, 100.0
        %v2066 = vsub.f32 %v1781, 100.0
        %v2067 = vsub.f32 %v1785, 100.0
        %v2068 = vsub.f32 %v1787, 100.0
        %v2069 = vsub.f32 %v1791, 100.0
        %v2070 = vsub.f32 %v1793, 100.0
        %v2071 = vsub.f32 %v1797, 100.0
        %v2072 = vsub.f32 %v1799, 100.0
        %v2073 = vsub.f32 %v1803, 100.0
        %v2074 = vsub.f32 %v1805, 100.0
        %v2075 = vsub.f32 %v1809, 100.0
        %v2076 = vsub.f32 %v1811, 100.0
        %v2077 = vsub.f32 %v1815, 100.0
        %v2078 = vsub.f32 %v1817, 100.0
        %v2079 = vsub.f32 %v1821, 100.0
        %v2080 = vsub.f32 %v1823, 100.0
        %v2081 = vsub.f32 %v1827, 100.0
        %v2082 = vsub.f32 %v1829, 100.0
        %v2083 = vsub.f32 %v1833, 100.0
        %v2084 = vsub.f32 %v1835, 100.0
        %v2085 = vsub.f32 %v1839, 100.0
        %v2086 = vsub.f32 %v1841, 100.0
        %v2087 = vsub.f32 %v1845, 100.0
        %v2088 = vsub.f32 %v1847, 100.0
        %v2089 = vsub.f32 %v1851, 100.0
        %v2090 = vsub.f32 %v1853, 100.0
        %v2091 = vsub.f32 %v1857, 100.0
        %v2092 = vsub.f32 %v1859, 100.0
        %v2093 = vsub.f32 %v1863, 100.0
        %v2094 = vsub.f32 %v1865, 100.0
        %v2095 = vsub.f32 %v1869, 100.0
        %v2096 = vsub.f32 %v1871, 100.0
        %v2097 = vsel %vm1969, %v2033, %v1683
        %v2098 = vsel %vm1970, %v2034, %v1685
        %v2099 = vsel %vm1971, %v2035, %v1689
        %v2100 = vsel %vm1972, %v2036, %v1691
        %v2101 = vsel %vm1973, %v2037, %v1695
        %v2102 = vsel %vm1974, %v2038, %v1697
        %v2103 = vsel %vm1975, %v2039, %v1701
        %v2104 = vsel %vm1976, %v2040, %v1703
        %v2105 = vsel %vm1977, %v2041, %v1707
        %v2106 = vsel %vm1978, %v2042, %v1709
        %v2107 = vsel %vm1979, %v2043, %v1713
        %v2108 = vsel %vm1980, %v2044, %v1715
        %v2109 = vsel %vm1981, %v2045, %v1719
        %v2110 = vsel %vm1982, %v2046, %v1721
        %v2111 = vsel %vm1983, %v2047, %v1725
        %v2112 = vsel %vm1984, %v2048, %v1727
        %v2113 = vsel %vm1985, %v2049, %v1731
        %v2114 = vsel %vm1986, %v2050, %v1733
        %v2115 = vsel %vm1987, %v2051, %v1737
        %v2116 = vsel %vm1988, %v2052, %v1739
        %v2117 = vsel %vm1989, %v2053, %v1743
        %v2118 = vsel %vm1990, %v2054, %v1745
        %v2119 = vsel %vm1991, %v2055, %v1749
        %v2120 = vsel %vm1992, %v2056, %v1751
        %v2121 = vsel %vm1993, %v2057, %v1755
        %v2122 = vsel %vm1994, %v2058, %v1757
        %v2123 = vsel %vm1995, %v2059, %v1761
        %v2124 = vsel %vm1996, %v2060, %v1763
        %v2125 = vsel %vm1997, %v2061, %v1767
        %v2126 = vsel %vm1998, %v2062, %v1769
        %v2127 = vsel %vm1999, %v2063, %v1773
        %v2128 = vsel %vm2000, %v2064, %v1775
        %v2129 = vsel %vm2001, %v2065, %v1779
        %v2130 = vsel %vm2002, %v2066, %v1781
        %v2131 = vsel %vm2003, %v2067, %v1785
        %v2132 = vsel %vm2004, %v2068, %v1787
        %v2133 = vsel %vm2005, %v2069, %v1791
        %v2134 = vsel %vm2006, %v2070, %v1793
        %v2135 = vsel %vm2007, %v2071, %v1797
        %v2136 = vsel %vm2008, %v2072, %v1799
        %v2137 = vsel %vm2009, %v2073, %v1803
        %v2138 = vsel %vm2010, %v2074, %v1805
        %v2139 = vsel %vm2011, %v2075, %v1809
        %v2140 = vsel %vm2012, %v2076, %v1811
        %v2141 = vsel %vm2013, %v2077, %v1815
        %v2142 = vsel %vm2014, %v2078, %v1817
        %v2143 = vsel %vm2015, %v2079, %v1821
        %v2144 = vsel %vm2016, %v2080, %v1823
        %v2145 = vsel %vm2017, %v2081, %v1827
        %v2146 = vsel %vm2018, %v2082, %v1829
        %v2147 = vsel %vm2019, %v2083, %v1833
        %v2148 = vsel %vm2020, %v2084, %v1835
        %v2149 = vsel %vm2021, %v2085, %v1839
        %v2150 = vsel %vm2022, %v2086, %v1841
        %v2151 = vsel %vm2023, %v2087, %v1845
        %v2152 = vsel %vm2024, %v2088, %v1847
        %v2153 = vsel %vm2025, %v2089, %v1851
        %v2154 = vsel %vm2026, %v2090, %v1853
        %v2155 = vsel %vm2027, %v2091, %v1857
        %v2156 = vsel %vm2028, %v2092, %v1859
        %v2157 = vsel %vm2029, %v2093, %v1863
        %v2158 = vsel %vm2030, %v2094, %v1865
        %v2159 = vsel %vm2031, %v2095, %v1869
        %v2160 = vsel %vm2032, %v2096, %v1871
        %v2161 = vld [vmem:[#allocation3] sm:$0xff]
        %v2162 = vld [vmem:[#allocation3 + $0x8] sm:$0xff]
        %v2163 = vld [vmem:[#allocation3 + $0x10] sm:$0xff]
        %v2164 = vld [vmem:[#allocation3 + $0x18] sm:$0xff]
        %v2165 = vld [vmem:[#allocation3 + $0x20] sm:$0xff]
        %v2166 = vld [vmem:[#allocation3 + $0x28] sm:$0xff]
        %v2167 = vld [vmem:[#allocation3 + $0x30] sm:$0xff]
        %v2168 = vld [vmem:[#allocation3 + $0x38] sm:$0xff]
        %v2169 = vld [vmem:[#allocation3 + $0x40] sm:$0xff]
        %v2170 = vld [vmem:[#allocation3 + $0x48] sm:$0xff]
        %v2171 = vld [vmem:[#allocation3 + $0x50] sm:$0xff]
        %v2172 = vld [vmem:[#allocation3 + $0x58] sm:$0xff]
        %v2173 = vld [vmem:[#allocation3 + $0x60] sm:$0xff]
        %v2174 = vld [vmem:[#allocation3 + $0x68] sm:$0xff]
        %v2175 = vld [vmem:[#allocation3 + $0x70] sm:$0xff]
        %v2176 = vld [vmem:[#allocation3 + $0x78] sm:$0xff]
        %v2177 = vld [vmem:[#allocation3 + $0x80] sm:$0xff]
        %v2178 = vld [vmem:[#allocation3 + $0x88] sm:$0xff]
        %v2179 = vld [vmem:[#allocation3 + $0x90] sm:$0xff]
        %v2180 = vld [vmem:[#allocation3 + $0x98] sm:$0xff]
        %v2181 = vld [vmem:[#allocation3 + $0xa0] sm:$0xff]
        %v2182 = vld [vmem:[#allocation3 + $0xa8] sm:$0xff]
        %v2183 = vld [vmem:[#allocation3 + $0xb0] sm:$0xff]
        %v2184 = vld [vmem:[#allocation3 + $0xb8] sm:$0xff]
        %v2185 = vld [vmem:[#allocation3 + $0xc0] sm:$0xff]
        %v2186 = vld [vmem:[#allocation3 + $0xc8] sm:$0xff]
        %v2187 = vld [vmem:[#allocation3 + $0xd0] sm:$0xff]
        %v2188 = vld [vmem:[#allocation3 + $0xd8] sm:$0xff]
        %v2189 = vld [vmem:[#allocation3 + $0xe0] sm:$0xff]
        %v2190 = vld [vmem:[#allocation3 + $0xe8] sm:$0xff]
        %v2191 = vld [vmem:[#allocation3 + $0xf0] sm:$0xff]
        %v2192 = vld [vmem:[#allocation3 + $0xf8] sm:$0xff]
        %v2193 = vmax.f32 %v2097, %v2098
        %2194 = vmax.xlane.f32.xlu0 %v2193
        %v2195 = vpop.xlane.xlu0 %2194
        %v2196 = vmax.f32 %v2099, %v2100
        %2197 = vmax.xlane.f32.xlu0 %v2196
        %v2198 = vpop.xlane.xlu0 %2197
        %v2199 = vmax.f32 %v2101, %v2102
        %2200 = vmax.xlane.f32.xlu0 %v2199
        %v2201 = vpop.xlane.xlu0 %2200
        %v2202 = vmax.f32 %v2103, %v2104
        %2203 = vmax.xlane.f32.xlu0 %v2202
        %v2204 = vpop.xlane.xlu0 %2203
        %v2205 = vmax.f32 %v2105, %v2106
        %2206 = vmax.xlane.f32.xlu0 %v2205
        %v2207 = vpop.xlane.xlu0 %2206
        %v2208 = vmax.f32 %v2107, %v2108
        %2209 = vmax.xlane.f32.xlu0 %v2208
        %v2210 = vpop.xlane.xlu0 %2209
        %v2211 = vmax.f32 %v2109, %v2110
        %2212 = vmax.xlane.f32.xlu0 %v2211
        %v2213 = vpop.xlane.xlu0 %2212
        %v2214 = vmax.f32 %v2111, %v2112
        %2215 = vmax.xlane.f32.xlu0 %v2214
        %v2216 = vpop.xlane.xlu0 %2215
        %v2217 = vmax.f32 %v2113, %v2114
        %2218 = vmax.xlane.f32.xlu0 %v2217
        %v2219 = vpop.xlane.xlu0 %2218
        %v2220 = vmax.f32 %v2115, %v2116
        %2221 = vmax.xlane.f32.xlu0 %v2220
        %v2222 = vpop.xlane.xlu0 %2221
        %v2223 = vmax.f32 %v2117, %v2118
        %2224 = vmax.xlane.f32.xlu0 %v2223
        %v2225 = vpop.xlane.xlu0 %2224
        %v2226 = vmax.f32 %v2119, %v2120
        %2227 = vmax.xlane.f32.xlu0 %v2226
        %v2228 = vpop.xlane.xlu0 %2227
        %v2229 = vmax.f32 %v2121, %v2122
        %2230 = vmax.xlane.f32.xlu0 %v2229
        %v2231 = vpop.xlane.xlu0 %2230
        %v2232 = vmax.f32 %v2123, %v2124
        %2233 = vmax.xlane.f32.xlu0 %v2232
        %v2234 = vpop.xlane.xlu0 %2233
        %v2235 = vmax.f32 %v2125, %v2126
        %2236 = vmax.xlane.f32.xlu0 %v2235
        %v2237 = vpop.xlane.xlu0 %2236
        %v2238 = vmax.f32 %v2127, %v2128
        %2239 = vmax.xlane.f32.xlu0 %v2238
        %v2240 = vpop.xlane.xlu0 %2239
        %v2241 = vmax.f32 %v2129, %v2130
        %2242 = vmax.xlane.f32.xlu0 %v2241
        %v2243 = vpop.xlane.xlu0 %2242
        %v2244 = vmax.f32 %v2131, %v2132
        %2245 = vmax.xlane.f32.xlu0 %v2244
        %v2246 = vpop.xlane.xlu0 %2245
        %v2247 = vmax.f32 %v2133, %v2134
        %2248 = vmax.xlane.f32.xlu0 %v2247
        %v2249 = vpop.xlane.xlu0 %2248
        %v2250 = vmax.f32 %v2135, %v2136
        %2251 = vmax.xlane.f32.xlu0 %v2250
        %v2252 = vpop.xlane.xlu0 %2251
        %v2253 = vmax.f32 %v2137, %v2138
        %2254 = vmax.xlane.f32.xlu0 %v2253
        %v2255 = vpop.xlane.xlu0 %2254
        %v2256 = vmax.f32 %v2139, %v2140
        %2257 = vmax.xlane.f32.xlu0 %v2256
        %v2258 = vpop.xlane.xlu0 %2257
        %v2259 = vmax.f32 %v2141, %v2142
        %2260 = vmax.xlane.f32.xlu0 %v2259
        %v2261 = vpop.xlane.xlu0 %2260
        %v2262 = vmax.f32 %v2143, %v2144
        %2263 = vmax.xlane.f32.xlu0 %v2262
        %v2264 = vpop.xlane.xlu0 %2263
        %v2265 = vmax.f32 %v2145, %v2146
        %2266 = vmax.xlane.f32.xlu0 %v2265
        %v2267 = vpop.xlane.xlu0 %2266
        %v2268 = vmax.f32 %v2147, %v2148
        %2269 = vmax.xlane.f32.xlu0 %v2268
        %v2270 = vpop.xlane.xlu0 %2269
        %v2271 = vmax.f32 %v2149, %v2150
        %2272 = vmax.xlane.f32.xlu0 %v2271
        %v2273 = vpop.xlane.xlu0 %2272
        %v2274 = vmax.f32 %v2151, %v2152
        %2275 = vmax.xlane.f32.xlu0 %v2274
        %v2276 = vpop.xlane.xlu0 %2275
        %v2277 = vmax.f32 %v2153, %v2154
        %2278 = vmax.xlane.f32.xlu0 %v2277
        %v2279 = vpop.xlane.xlu0 %2278
        %v2280 = vmax.f32 %v2155, %v2156
        %2281 = vmax.xlane.f32.xlu0 %v2280
        %v2282 = vpop.xlane.xlu0 %2281
        %v2283 = vmax.f32 %v2157, %v2158
        %2284 = vmax.xlane.f32.xlu0 %v2283
        %v2285 = vpop.xlane.xlu0 %2284
        %v2286 = vmax.f32 %v2159, %v2160
        %2287 = vmax.xlane.f32.xlu0 %v2286
        %v2288 = vpop.xlane.xlu0 %2287
        %v2289 = vmax.f32 %v2161, %v2195
        %v2290 = vmax.f32 %v2162, %v2198
        %v2291 = vmax.f32 %v2163, %v2201
        %v2292 = vmax.f32 %v2164, %v2204
        %v2293 = vmax.f32 %v2165, %v2207
        %v2294 = vmax.f32 %v2166, %v2210
        %v2295 = vmax.f32 %v2167, %v2213
        %v2296 = vmax.f32 %v2168, %v2216
        %v2297 = vmax.f32 %v2169, %v2219
        %v2298 = vmax.f32 %v2170, %v2222
        %v2299 = vmax.f32 %v2171, %v2225
        %v2300 = vmax.f32 %v2172, %v2228
        %v2301 = vmax.f32 %v2173, %v2231
        %v2302 = vmax.f32 %v2174, %v2234
        %v2303 = vmax.f32 %v2175, %v2237
        %v2304 = vmax.f32 %v2176, %v2240
        %v2305 = vmax.f32 %v2177, %v2243
        %v2306 = vmax.f32 %v2178, %v2246
        %v2307 = vmax.f32 %v2179, %v2249
        %v2308 = vmax.f32 %v2180, %v2252
        %v2309 = vmax.f32 %v2181, %v2255
        %v2310 = vmax.f32 %v2182, %v2258
        %v2311 = vmax.f32 %v2183, %v2261
        %v2312 = vmax.f32 %v2184, %v2264
        %v2313 = vmax.f32 %v2185, %v2267
        %v2314 = vmax.f32 %v2186, %v2270
        %v2315 = vmax.f32 %v2187, %v2273
        %v2316 = vmax.f32 %v2188, %v2276
        %v2317 = vmax.f32 %v2189, %v2279
        %v2318 = vmax.f32 %v2190, %v2282
        %v2319 = vmax.f32 %v2191, %v2285
        %v2320 = vmax.f32 %v2192, %v2288
        %v2321 = vsub.f32 %v2161, %v2289
        %v2322 = vsub.f32 %v2162, %v2290
        %v2323 = vsub.f32 %v2163, %v2291
        %v2324 = vsub.f32 %v2164, %v2292
        %v2325 = vsub.f32 %v2165, %v2293
        %v2326 = vsub.f32 %v2166, %v2294
        %v2327 = vsub.f32 %v2167, %v2295
        %v2328 = vsub.f32 %v2168, %v2296
        %v2329 = vsub.f32 %v2169, %v2297
        %v2330 = vsub.f32 %v2170, %v2298
        %v2331 = vsub.f32 %v2171, %v2299
        %v2332 = vsub.f32 %v2172, %v2300
        %v2333 = vsub.f32 %v2173, %v2301
        %v2334 = vsub.f32 %v2174, %v2302
        %v2335 = vsub.f32 %v2175, %v2303
        %v2336 = vsub.f32 %v2176, %v2304
        %v2337 = vsub.f32 %v2177, %v2305
        %v2338 = vsub.f32 %v2178, %v2306
        %v2339 = vsub.f32 %v2179, %v2307
        %v2340 = vsub.f32 %v2180, %v2308
        %v2341 = vsub.f32 %v2181, %v2309
        %v2342 = vsub.f32 %v2182, %v2310
        %v2343 = vsub.f32 %v2183, %v2311
        %v2344 = vsub.f32 %v2184, %v2312
        %v2345 = vsub.f32 %v2185, %v2313
        %v2346 = vsub.f32 %v2186, %v2314
        %v2347 = vsub.f32 %v2187, %v2315
        %v2348 = vsub.f32 %v2188, %v2316
        %v2349 = vsub.f32 %v2189, %v2317
        %v2350 = vsub.f32 %v2190, %v2318
        %v2351 = vsub.f32 %v2191, %v2319
        %v2352 = vsub.f32 %v2192, %v2320
        %v2353 = vmul.f32 %v2321, 1.442695
        %v2354 = vpow.pop %v2353
        %v2355 = vmul.f32 %v2322, 1.442695
        %v2356 = vpow.pop %v2355
        %v2357 = vmul.f32 %v2323, 1.442695
        %v2358 = vpow.pop %v2357
        %v2359 = vmul.f32 %v2324, 1.442695
        %v2360 = vpow.pop %v2359
        %v2361 = vmul.f32 %v2325, 1.442695
        %v2362 = vpow.pop %v2361
        %v2363 = vmul.f32 %v2326, 1.442695
        %v2364 = vpow.pop %v2363
        %v2365 = vmul.f32 %v2327, 1.442695
        %v2366 = vpow.pop %v2365
        %v2367 = vmul.f32 %v2328, 1.442695
        %v2368 = vpow.pop %v2367
        %v2369 = vmul.f32 %v2329, 1.442695
        %v2370 = vpow.pop %v2369
        %v2371 = vmul.f32 %v2330, 1.442695
        %v2372 = vpow.pop %v2371
        %v2373 = vmul.f32 %v2331, 1.442695
        %v2374 = vpow.pop %v2373
        %v2375 = vmul.f32 %v2332, 1.442695
        %v2376 = vpow.pop %v2375
        %v2377 = vmul.f32 %v2333, 1.442695
        %v2378 = vpow.pop %v2377
        %v2379 = vmul.f32 %v2334, 1.442695
        %v2380 = vpow.pop %v2379
        %v2381 = vmul.f32 %v2335, 1.442695
        %v2382 = vpow.pop %v2381
        %v2383 = vmul.f32 %v2336, 1.442695
        %v2384 = vpow.pop %v2383
        %v2385 = vmul.f32 %v2337, 1.442695
        %v2386 = vpow.pop %v2385
        %v2387 = vmul.f32 %v2338, 1.442695
        %v2388 = vpow.pop %v2387
        %v2389 = vmul.f32 %v2339, 1.442695
        %v2390 = vpow.pop %v2389
        %v2391 = vmul.f32 %v2340, 1.442695
        %v2392 = vpow.pop %v2391
        %v2393 = vmul.f32 %v2341, 1.442695
        %v2394 = vpow.pop %v2393
        %v2395 = vmul.f32 %v2342, 1.442695
        %v2396 = vpow.pop %v2395
        %v2397 = vmul.f32 %v2343, 1.442695
        %v2398 = vpow.pop %v2397
        %v2399 = vmul.f32 %v2344, 1.442695
        %v2400 = vpow.pop %v2399
        %v2401 = vmul.f32 %v2345, 1.442695
        %v2402 = vpow.pop %v2401
        %v2403 = vmul.f32 %v2346, 1.442695
        %v2404 = vpow.pop %v2403
        %v2405 = vmul.f32 %v2347, 1.442695
        %v2406 = vpow.pop %v2405
        %v2407 = vmul.f32 %v2348, 1.442695
        %v2408 = vpow.pop %v2407
        %v2409 = vmul.f32 %v2349, 1.442695
        %v2410 = vpow.pop %v2409
        %v2411 = vmul.f32 %v2350, 1.442695
        %v2412 = vpow.pop %v2411
        %v2413 = vmul.f32 %v2351, 1.442695
        %v2414 = vpow.pop %v2413
        %v2415 = vmul.f32 %v2352, 1.442695
        %v2416 = vpow.pop %v2415
        %2418 = vset.pattern.permute.xlu0 0
        %2419 = vperm.xlu0 %2418, %v2289
        %v2420 = vpop.permute.xlu0 %2419
        %2423 = vset.pattern.permute.xlu0 0
        %2424 = vperm.xlu0 %2423, %v2290
        %v2425 = vpop.permute.xlu0 %2424
        %2428 = vset.pattern.permute.xlu0 0
        %2429 = vperm.xlu0 %2428, %v2291
        %v2430 = vpop.permute.xlu0 %2429
        %2433 = vset.pattern.permute.xlu0 0
        %2434 = vperm.xlu0 %2433, %v2292
        %v2435 = vpop.permute.xlu0 %2434
        %2438 = vset.pattern.permute.xlu0 0
        %2439 = vperm.xlu0 %2438, %v2293
        %v2440 = vpop.permute.xlu0 %2439
        %2443 = vset.pattern.permute.xlu0 0
        %2444 = vperm.xlu0 %2443, %v2294
        %v2445 = vpop.permute.xlu0 %2444
        %2448 = vset.pattern.permute.xlu0 0
        %2449 = vperm.xlu0 %2448, %v2295
        %v2450 = vpop.permute.xlu0 %2449
        %2453 = vset.pattern.permute.xlu0 0
        %2454 = vperm.xlu0 %2453, %v2296
        %v2455 = vpop.permute.xlu0 %2454
        %2458 = vset.pattern.permute.xlu0 0
        %2459 = vperm.xlu0 %2458, %v2297
        %v2460 = vpop.permute.xlu0 %2459
        %2463 = vset.pattern.permute.xlu0 0
        %2464 = vperm.xlu0 %2463, %v2298
        %v2465 = vpop.permute.xlu0 %2464
        %2468 = vset.pattern.permute.xlu0 0
        %2469 = vperm.xlu0 %2468, %v2299
        %v2470 = vpop.permute.xlu0 %2469
        %2473 = vset.pattern.permute.xlu0 0
        %2474 = vperm.xlu0 %2473, %v2300
        %v2475 = vpop.permute.xlu0 %2474
        %2478 = vset.pattern.permute.xlu0 0
        %2479 = vperm.xlu0 %2478, %v2301
        %v2480 = vpop.permute.xlu0 %2479
        %2483 = vset.pattern.permute.xlu0 0
        %2484 = vperm.xlu0 %2483, %v2302
        %v2485 = vpop.permute.xlu0 %2484
        %2488 = vset.pattern.permute.xlu0 0
        %2489 = vperm.xlu0 %2488, %v2303
        %v2490 = vpop.permute.xlu0 %2489
        %2493 = vset.pattern.permute.xlu0 0
        %2494 = vperm.xlu0 %2493, %v2304
        %v2495 = vpop.permute.xlu0 %2494
        %2498 = vset.pattern.permute.xlu0 0
        %2499 = vperm.xlu0 %2498, %v2305
        %v2500 = vpop.permute.xlu0 %2499
        %2503 = vset.pattern.permute.xlu0 0
        %2504 = vperm.xlu0 %2503, %v2306
        %v2505 = vpop.permute.xlu0 %2504
        %2508 = vset.pattern.permute.xlu0 0
        %2509 = vperm.xlu0 %2508, %v2307
        %v2510 = vpop.permute.xlu0 %2509
        %2513 = vset.pattern.permute.xlu0 0
        %2514 = vperm.xlu0 %2513, %v2308
        %v2515 = vpop.permute.xlu0 %2514
        %2518 = vset.pattern.permute.xlu0 0
        %2519 = vperm.xlu0 %2518, %v2309
        %v2520 = vpop.permute.xlu0 %2519
        %2523 = vset.pattern.permute.xlu0 0
        %2524 = vperm.xlu0 %2523, %v2310
        %v2525 = vpop.permute.xlu0 %2524
        %2528 = vset.pattern.permute.xlu0 0
        %2529 = vperm.xlu0 %2528, %v2311
        %v2530 = vpop.permute.xlu0 %2529
        %2533 = vset.pattern.permute.xlu0 0
        %2534 = vperm.xlu0 %2533, %v2312
        %v2535 = vpop.permute.xlu0 %2534
        %2538 = vset.pattern.permute.xlu0 0
        %2539 = vperm.xlu0 %2538, %v2313
        %v2540 = vpop.permute.xlu0 %2539
        %2543 = vset.pattern.permute.xlu0 0
        %2544 = vperm.xlu0 %2543, %v2314
        %v2545 = vpop.permute.xlu0 %2544
        %2548 = vset.pattern.permute.xlu0 0
        %2549 = vperm.xlu0 %2548, %v2315
        %v2550 = vpop.permute.xlu0 %2549
        %2553 = vset.pattern.permute.xlu0 0
        %2554 = vperm.xlu0 %2553, %v2316
        %v2555 = vpop.permute.xlu0 %2554
        %2558 = vset.pattern.permute.xlu0 0
        %2559 = vperm.xlu0 %2558, %v2317
        %v2560 = vpop.permute.xlu0 %2559
        %2563 = vset.pattern.permute.xlu0 0
        %2564 = vperm.xlu0 %2563, %v2318
        %v2565 = vpop.permute.xlu0 %2564
        %2568 = vset.pattern.permute.xlu0 0
        %2569 = vperm.xlu0 %2568, %v2319
        %v2570 = vpop.permute.xlu0 %2569
        %2573 = vset.pattern.permute.xlu0 0
        %2574 = vperm.xlu0 %2573, %v2320
        %v2575 = vpop.permute.xlu0 %2574
        %v2577 = vsub.f32 %v2097, %v2420
        %v2578 = vsub.f32 %v2098, %v2420
        %v2579 = vsub.f32 %v2099, %v2425
        %v2580 = vsub.f32 %v2100, %v2425
        %v2581 = vsub.f32 %v2101, %v2430
        %v2582 = vsub.f32 %v2102, %v2430
        %v2583 = vsub.f32 %v2103, %v2435
        %v2584 = vsub.f32 %v2104, %v2435
        %v2585 = vsub.f32 %v2105, %v2440
        %v2586 = vsub.f32 %v2106, %v2440
        %v2587 = vsub.f32 %v2107, %v2445
        %v2588 = vsub.f32 %v2108, %v2445
        %v2589 = vsub.f32 %v2109, %v2450
        %v2590 = vsub.f32 %v2110, %v2450
        %v2591 = vsub.f32 %v2111, %v2455
        %v2592 = vsub.f32 %v2112, %v2455
        %v2593 = vsub.f32 %v2113, %v2460
        %v2594 = vsub.f32 %v2114, %v2460
        %v2595 = vsub.f32 %v2115, %v2465
        %v2596 = vsub.f32 %v2116, %v2465
        %v2597 = vsub.f32 %v2117, %v2470
        %v2598 = vsub.f32 %v2118, %v2470
        %v2599 = vsub.f32 %v2119, %v2475
        %v2600 = vsub.f32 %v2120, %v2475
        %v2601 = vsub.f32 %v2121, %v2480
        %v2602 = vsub.f32 %v2122, %v2480
        %v2603 = vsub.f32 %v2123, %v2485
        %v2604 = vsub.f32 %v2124, %v2485
        %v2605 = vsub.f32 %v2125, %v2490
        %v2606 = vsub.f32 %v2126, %v2490
        %v2607 = vsub.f32 %v2127, %v2495
        %v2608 = vsub.f32 %v2128, %v2495
        %v2609 = vsub.f32 %v2129, %v2500
        %v2610 = vsub.f32 %v2130, %v2500
        %v2611 = vsub.f32 %v2131, %v2505
        %v2612 = vsub.f32 %v2132, %v2505
        %v2613 = vsub.f32 %v2133, %v2510
        %v2614 = vsub.f32 %v2134, %v2510
        %v2615 = vsub.f32 %v2135, %v2515
        %v2616 = vsub.f32 %v2136, %v2515
        %v2617 = vsub.f32 %v2137, %v2520
        %v2618 = vsub.f32 %v2138, %v2520
        %v2619 = vsub.f32 %v2139, %v2525
        %v2620 = vsub.f32 %v2140, %v2525
        %v2621 = vsub.f32 %v2141, %v2530
        %v2622 = vsub.f32 %v2142, %v2530
        %v2623 = vsub.f32 %v2143, %v2535
        %v2624 = vsub.f32 %v2144, %v2535
        %v2625 = vsub.f32 %v2145, %v2540
        %v2626 = vsub.f32 %v2146, %v2540
        %v2627 = vsub.f32 %v2147, %v2545
        %v2628 = vsub.f32 %v2148, %v2545
        %v2629 = vsub.f32 %v2149, %v2550
        %v2630 = vsub.f32 %v2150, %v2550
        %v2631 = vsub.f32 %v2151, %v2555
        %v2632 = vsub.f32 %v2152, %v2555
        %v2633 = vsub.f32 %v2153, %v2560
        %v2634 = vsub.f32 %v2154, %v2560
        %v2635 = vsub.f32 %v2155, %v2565
        %v2636 = vsub.f32 %v2156, %v2565
        %v2637 = vsub.f32 %v2157, %v2570
        %v2638 = vsub.f32 %v2158, %v2570
        %v2639 = vsub.f32 %v2159, %v2575
        %v2640 = vsub.f32 %v2160, %v2575
        %v2641 = vmul.f32 %v2577, 1.442695
        %v2642 = vpow.pop %v2641
        %v2643 = vmul.f32 %v2578, 1.442695
        %v2644 = vpow.pop %v2643
        %v2645 = vmul.f32 %v2579, 1.442695
        %v2646 = vpow.pop %v2645
        %v2647 = vmul.f32 %v2580, 1.442695
        %v2648 = vpow.pop %v2647
        %v2649 = vmul.f32 %v2581, 1.442695
        %v2650 = vpow.pop %v2649
        %v2651 = vmul.f32 %v2582, 1.442695
        %v2652 = vpow.pop %v2651
        %v2653 = vmul.f32 %v2583, 1.442695
        %v2654 = vpow.pop %v2653
        %v2655 = vmul.f32 %v2584, 1.442695
        %v2656 = vpow.pop %v2655
        %v2657 = vmul.f32 %v2585, 1.442695
        %v2658 = vpow.pop %v2657
        %v2659 = vmul.f32 %v2586, 1.442695
        %v2660 = vpow.pop %v2659
        %v2661 = vmul.f32 %v2587, 1.442695
        %v2662 = vpow.pop %v2661
        %v2663 = vmul.f32 %v2588, 1.442695
        %v2664 = vpow.pop %v2663
        %v2665 = vmul.f32 %v2589, 1.442695
        %v2666 = vpow.pop %v2665
        %v2667 = vmul.f32 %v2590, 1.442695
        %v2668 = vpow.pop %v2667
        %v2669 = vmul.f32 %v2591, 1.442695
        %v2670 = vpow.pop %v2669
        %v2671 = vmul.f32 %v2592, 1.442695
        %v2672 = vpow.pop %v2671
        %v2673 = vmul.f32 %v2593, 1.442695
        %v2674 = vpow.pop %v2673
        %v2675 = vmul.f32 %v2594, 1.442695
        %v2676 = vpow.pop %v2675
        %v2677 = vmul.f32 %v2595, 1.442695
        %v2678 = vpow.pop %v2677
        %v2679 = vmul.f32 %v2596, 1.442695
        %v2680 = vpow.pop %v2679
        %v2681 = vmul.f32 %v2597, 1.442695
        %v2682 = vpow.pop %v2681
        %v2683 = vmul.f32 %v2598, 1.442695
        %v2684 = vpow.pop %v2683
        %v2685 = vmul.f32 %v2599, 1.442695
        %v2686 = vpow.pop %v2685
        %v2687 = vmul.f32 %v2600, 1.442695
        %v2688 = vpow.pop %v2687
        %v2689 = vmul.f32 %v2601, 1.442695
        %v2690 = vpow.pop %v2689
        %v2691 = vmul.f32 %v2602, 1.442695
        %v2692 = vpow.pop %v2691
        %v2693 = vmul.f32 %v2603, 1.442695
        %v2694 = vpow.pop %v2693
        %v2695 = vmul.f32 %v2604, 1.442695
        %v2696 = vpow.pop %v2695
        %v2697 = vmul.f32 %v2605, 1.442695
        %v2698 = vpow.pop %v2697
        %v2699 = vmul.f32 %v2606, 1.442695
        %v2700 = vpow.pop %v2699
        %v2701 = vmul.f32 %v2607, 1.442695
        %v2702 = vpow.pop %v2701
        %v2703 = vmul.f32 %v2608, 1.442695
        %v2704 = vpow.pop %v2703
        %v2705 = vmul.f32 %v2609, 1.442695
        %v2706 = vpow.pop %v2705
        %v2707 = vmul.f32 %v2610, 1.442695
        %v2708 = vpow.pop %v2707
        %v2709 = vmul.f32 %v2611, 1.442695
        %v2710 = vpow.pop %v2709
        %v2711 = vmul.f32 %v2612, 1.442695
        %v2712 = vpow.pop %v2711
        %v2713 = vmul.f32 %v2613, 1.442695
        %v2714 = vpow.pop %v2713
        %v2715 = vmul.f32 %v2614, 1.442695
        %v2716 = vpow.pop %v2715
        %v2717 = vmul.f32 %v2615, 1.442695
        %v2718 = vpow.pop %v2717
        %v2719 = vmul.f32 %v2616, 1.442695
        %v2720 = vpow.pop %v2719
        %v2721 = vmul.f32 %v2617, 1.442695
        %v2722 = vpow.pop %v2721
        %v2723 = vmul.f32 %v2618, 1.442695
        %v2724 = vpow.pop %v2723
        %v2725 = vmul.f32 %v2619, 1.442695
        %v2726 = vpow.pop %v2725
        %v2727 = vmul.f32 %v2620, 1.442695
        %v2728 = vpow.pop %v2727
        %v2729 = vmul.f32 %v2621, 1.442695
        %v2730 = vpow.pop %v2729
        %v2731 = vmul.f32 %v2622, 1.442695
        %v2732 = vpow.pop %v2731
        %v2733 = vmul.f32 %v2623, 1.442695
        %v2734 = vpow.pop %v2733
        %v2735 = vmul.f32 %v2624, 1.442695
        %v2736 = vpow.pop %v2735
        %v2737 = vmul.f32 %v2625, 1.442695
        %v2738 = vpow.pop %v2737
        %v2739 = vmul.f32 %v2626, 1.442695
        %v2740 = vpow.pop %v2739
        %v2741 = vmul.f32 %v2627, 1.442695
        %v2742 = vpow.pop %v2741
        %v2743 = vmul.f32 %v2628, 1.442695
        %v2744 = vpow.pop %v2743
        %v2745 = vmul.f32 %v2629, 1.442695
        %v2746 = vpow.pop %v2745
        %v2747 = vmul.f32 %v2630, 1.442695
        %v2748 = vpow.pop %v2747
        %v2749 = vmul.f32 %v2631, 1.442695
        %v2750 = vpow.pop %v2749
        %v2751 = vmul.f32 %v2632, 1.442695
        %v2752 = vpow.pop %v2751
        %v2753 = vmul.f32 %v2633, 1.442695
        %v2754 = vpow.pop %v2753
        %v2755 = vmul.f32 %v2634, 1.442695
        %v2756 = vpow.pop %v2755
        %v2757 = vmul.f32 %v2635, 1.442695
        %v2758 = vpow.pop %v2757
        %v2759 = vmul.f32 %v2636, 1.442695
        %v2760 = vpow.pop %v2759
        %v2761 = vmul.f32 %v2637, 1.442695
        %v2762 = vpow.pop %v2761
        %v2763 = vmul.f32 %v2638, 1.442695
        %v2764 = vpow.pop %v2763
        %v2765 = vmul.f32 %v2639, 1.442695
        %v2766 = vpow.pop %v2765
        %v2767 = vmul.f32 %v2640, 1.442695
        %v2768 = vpow.pop %v2767
        %v2769 = vld [vmem:[#allocation4] sm:$0xff]
        %v2770 = vld [vmem:[#allocation4 + $0x8] sm:$0xff]
        %v2771 = vld [vmem:[#allocation4 + $0x10] sm:$0xff]
        %v2772 = vld [vmem:[#allocation4 + $0x18] sm:$0xff]
        %v2773 = vld [vmem:[#allocation4 + $0x20] sm:$0xff]
        %v2774 = vld [vmem:[#allocation4 + $0x28] sm:$0xff]
        %v2775 = vld [vmem:[#allocation4 + $0x30] sm:$0xff]
        %v2776 = vld [vmem:[#allocation4 + $0x38] sm:$0xff]
        %v2777 = vld [vmem:[#allocation4 + $0x40] sm:$0xff]
        %v2778 = vld [vmem:[#allocation4 + $0x48] sm:$0xff]
        %v2779 = vld [vmem:[#allocation4 + $0x50] sm:$0xff]
        %v2780 = vld [vmem:[#allocation4 + $0x58] sm:$0xff]
        %v2781 = vld [vmem:[#allocation4 + $0x60] sm:$0xff]
        %v2782 = vld [vmem:[#allocation4 + $0x68] sm:$0xff]
        %v2783 = vld [vmem:[#allocation4 + $0x70] sm:$0xff]
        %v2784 = vld [vmem:[#allocation4 + $0x78] sm:$0xff]
        %v2785 = vld [vmem:[#allocation4 + $0x80] sm:$0xff]
        %v2786 = vld [vmem:[#allocation4 + $0x88] sm:$0xff]
        %v2787 = vld [vmem:[#allocation4 + $0x90] sm:$0xff]
        %v2788 = vld [vmem:[#allocation4 + $0x98] sm:$0xff]
        %v2789 = vld [vmem:[#allocation4 + $0xa0] sm:$0xff]
        %v2790 = vld [vmem:[#allocation4 + $0xa8] sm:$0xff]
        %v2791 = vld [vmem:[#allocation4 + $0xb0] sm:$0xff]
        %v2792 = vld [vmem:[#allocation4 + $0xb8] sm:$0xff]
        %v2793 = vld [vmem:[#allocation4 + $0xc0] sm:$0xff]
        %v2794 = vld [vmem:[#allocation4 + $0xc8] sm:$0xff]
        %v2795 = vld [vmem:[#allocation4 + $0xd0] sm:$0xff]
        %v2796 = vld [vmem:[#allocation4 + $0xd8] sm:$0xff]
        %v2797 = vld [vmem:[#allocation4 + $0xe0] sm:$0xff]
        %v2798 = vld [vmem:[#allocation4 + $0xe8] sm:$0xff]
        %v2799 = vld [vmem:[#allocation4 + $0xf0] sm:$0xff]
        %v2800 = vld [vmem:[#allocation4 + $0xf8] sm:$0xff]
        %v2801 = vmul.f32 %v2354, %v2769
        %v2802 = vmul.f32 %v2356, %v2770
        %v2803 = vmul.f32 %v2358, %v2771
        %v2804 = vmul.f32 %v2360, %v2772
        %v2805 = vmul.f32 %v2362, %v2773
        %v2806 = vmul.f32 %v2364, %v2774
        %v2807 = vmul.f32 %v2366, %v2775
        %v2808 = vmul.f32 %v2368, %v2776
        %v2809 = vmul.f32 %v2370, %v2777
        %v2810 = vmul.f32 %v2372, %v2778
        %v2811 = vmul.f32 %v2374, %v2779
        %v2812 = vmul.f32 %v2376, %v2780
        %v2813 = vmul.f32 %v2378, %v2781
        %v2814 = vmul.f32 %v2380, %v2782
        %v2815 = vmul.f32 %v2382, %v2783
        %v2816 = vmul.f32 %v2384, %v2784
        %v2817 = vmul.f32 %v2386, %v2785
        %v2818 = vmul.f32 %v2388, %v2786
        %v2819 = vmul.f32 %v2390, %v2787
        %v2820 = vmul.f32 %v2392, %v2788
        %v2821 = vmul.f32 %v2394, %v2789
        %v2822 = vmul.f32 %v2396, %v2790
        %v2823 = vmul.f32 %v2398, %v2791
        %v2824 = vmul.f32 %v2400, %v2792
        %v2825 = vmul.f32 %v2402, %v2793
        %v2826 = vmul.f32 %v2404, %v2794
        %v2827 = vmul.f32 %v2406, %v2795
        %v2828 = vmul.f32 %v2408, %v2796
        %v2829 = vmul.f32 %v2410, %v2797
        %v2830 = vmul.f32 %v2412, %v2798
        %v2831 = vmul.f32 %v2414, %v2799
        %v2832 = vmul.f32 %v2416, %v2800
        %v2833 = vadd.f32 %v2642, %v2644
        %2834 = vadd.xlane.f32.xlu0 %v2833
        %v2835 = vpop.xlane.xlu0 %2834
        %v2836 = vadd.f32 %v2646, %v2648
        %2837 = vadd.xlane.f32.xlu0 %v2836
        %v2838 = vpop.xlane.xlu0 %2837
        %v2839 = vadd.f32 %v2650, %v2652
        %2840 = vadd.xlane.f32.xlu0 %v2839
        %v2841 = vpop.xlane.xlu0 %2840
        %v2842 = vadd.f32 %v2654, %v2656
        %2843 = vadd.xlane.f32.xlu0 %v2842
        %v2844 = vpop.xlane.xlu0 %2843
        %v2845 = vadd.f32 %v2658, %v2660
        %2846 = vadd.xlane.f32.xlu0 %v2845
        %v2847 = vpop.xlane.xlu0 %2846
        %v2848 = vadd.f32 %v2662, %v2664
        %2849 = vadd.xlane.f32.xlu0 %v2848
        %v2850 = vpop.xlane.xlu0 %2849
        %v2851 = vadd.f32 %v2666, %v2668
        %2852 = vadd.xlane.f32.xlu0 %v2851
        %v2853 = vpop.xlane.xlu0 %2852
        %v2854 = vadd.f32 %v2670, %v2672
        %2855 = vadd.xlane.f32.xlu0 %v2854
        %v2856 = vpop.xlane.xlu0 %2855
        %v2857 = vadd.f32 %v2674, %v2676
        %2858 = vadd.xlane.f32.xlu0 %v2857
        %v2859 = vpop.xlane.xlu0 %2858
        %v2860 = vadd.f32 %v2678, %v2680
        %2861 = vadd.xlane.f32.xlu0 %v2860
        %v2862 = vpop.xlane.xlu0 %2861
        %v2863 = vadd.f32 %v2682, %v2684
        %2864 = vadd.xlane.f32.xlu0 %v2863
        %v2865 = vpop.xlane.xlu0 %2864
        %v2866 = vadd.f32 %v2686, %v2688
        %2867 = vadd.xlane.f32.xlu0 %v2866
        %v2868 = vpop.xlane.xlu0 %2867
        %v2869 = vadd.f32 %v2690, %v2692
        %2870 = vadd.xlane.f32.xlu0 %v2869
        %v2871 = vpop.xlane.xlu0 %2870
        %v2872 = vadd.f32 %v2694, %v2696
        %2873 = vadd.xlane.f32.xlu0 %v2872
        %v2874 = vpop.xlane.xlu0 %2873
        %v2875 = vadd.f32 %v2698, %v2700
        %2876 = vadd.xlane.f32.xlu0 %v2875
        %v2877 = vpop.xlane.xlu0 %2876
        %v2878 = vadd.f32 %v2702, %v2704
        %2879 = vadd.xlane.f32.xlu0 %v2878
        %v2880 = vpop.xlane.xlu0 %2879
        %v2881 = vadd.f32 %v2706, %v2708
        %2882 = vadd.xlane.f32.xlu0 %v2881
        %v2883 = vpop.xlane.xlu0 %2882
        %v2884 = vadd.f32 %v2710, %v2712
        %2885 = vadd.xlane.f32.xlu0 %v2884
        %v2886 = vpop.xlane.xlu0 %2885
        %v2887 = vadd.f32 %v2714, %v2716
        %2888 = vadd.xlane.f32.xlu0 %v2887
        %v2889 = vpop.xlane.xlu0 %2888
        %v2890 = vadd.f32 %v2718, %v2720
        %2891 = vadd.xlane.f32.xlu0 %v2890
        %v2892 = vpop.xlane.xlu0 %2891
        %v2893 = vadd.f32 %v2722, %v2724
        %2894 = vadd.xlane.f32.xlu0 %v2893
        %v2895 = vpop.xlane.xlu0 %2894
        %v2896 = vadd.f32 %v2726, %v2728
        %2897 = vadd.xlane.f32.xlu0 %v2896
        %v2898 = vpop.xlane.xlu0 %2897
        %v2899 = vadd.f32 %v2730, %v2732
        %2900 = vadd.xlane.f32.xlu0 %v2899
        %v2901 = vpop.xlane.xlu0 %2900
        %v2902 = vadd.f32 %v2734, %v2736
        %2903 = vadd.xlane.f32.xlu0 %v2902
        %v2904 = vpop.xlane.xlu0 %2903
        %v2905 = vadd.f32 %v2738, %v2740
        %2906 = vadd.xlane.f32.xlu0 %v2905
        %v2907 = vpop.xlane.xlu0 %2906
        %v2908 = vadd.f32 %v2742, %v2744
        %2909 = vadd.xlane.f32.xlu0 %v2908
        %v2910 = vpop.xlane.xlu0 %2909
        %v2911 = vadd.f32 %v2746, %v2748
        %2912 = vadd.xlane.f32.xlu0 %v2911
        %v2913 = vpop.xlane.xlu0 %2912
        %v2914 = vadd.f32 %v2750, %v2752
        %2915 = vadd.xlane.f32.xlu0 %v2914
        %v2916 = vpop.xlane.xlu0 %2915
        %v2917 = vadd.f32 %v2754, %v2756
        %2918 = vadd.xlane.f32.xlu0 %v2917
        %v2919 = vpop.xlane.xlu0 %2918
        %v2920 = vadd.f32 %v2758, %v2760
        %2921 = vadd.xlane.f32.xlu0 %v2920
        %v2922 = vpop.xlane.xlu0 %2921
        %v2923 = vadd.f32 %v2762, %v2764
        %2924 = vadd.xlane.f32.xlu0 %v2923
        %v2925 = vpop.xlane.xlu0 %2924
        %v2926 = vadd.f32 %v2766, %v2768
        %2927 = vadd.xlane.f32.xlu0 %v2926
        %v2928 = vpop.xlane.xlu0 %2927
        %v2929 = vadd.f32 %v2801, %v2835
        %v2930 = vadd.f32 %v2802, %v2838
        %v2931 = vadd.f32 %v2803, %v2841
        %v2932 = vadd.f32 %v2804, %v2844
        %v2933 = vadd.f32 %v2805, %v2847
        %v2934 = vadd.f32 %v2806, %v2850
        %v2935 = vadd.f32 %v2807, %v2853
        %v2936 = vadd.f32 %v2808, %v2856
        %v2937 = vadd.f32 %v2809, %v2859
        %v2938 = vadd.f32 %v2810, %v2862
        %v2939 = vadd.f32 %v2811, %v2865
        %v2940 = vadd.f32 %v2812, %v2868
        %v2941 = vadd.f32 %v2813, %v2871
        %v2942 = vadd.f32 %v2814, %v2874
        %v2943 = vadd.f32 %v2815, %v2877
        %v2944 = vadd.f32 %v2816, %v2880
        %v2945 = vadd.f32 %v2817, %v2883
        %v2946 = vadd.f32 %v2818, %v2886
        %v2947 = vadd.f32 %v2819, %v2889
        %v2948 = vadd.f32 %v2820, %v2892
        %v2949 = vadd.f32 %v2821, %v2895
        %v2950 = vadd.f32 %v2822, %v2898
        %v2951 = vadd.f32 %v2823, %v2901
        %v2952 = vadd.f32 %v2824, %v2904
        %v2953 = vadd.f32 %v2825, %v2907
        %v2954 = vadd.f32 %v2826, %v2910
        %v2955 = vadd.f32 %v2827, %v2913
        %v2956 = vadd.f32 %v2828, %v2916
        %v2957 = vadd.f32 %v2829, %v2919
        %v2958 = vadd.f32 %v2830, %v2922
        %v2959 = vadd.f32 %v2831, %v2925
        %v2960 = vadd.f32 %v2832, %v2928
        %vm2961 = vcmask 7168
        %2962 = vst.msk [vmem:[#allocation4] sm:$0xff] %vm2961, %v2929
        %2963 = vst.msk [vmem:[#allocation4 + $0x8] sm:$0xff] %vm2961, %v2930
        %2964 = vst.msk [vmem:[#allocation4 + $0x10] sm:$0xff] %vm2961, %v2931
        %2965 = vst.msk [vmem:[#allocation4 + $0x18] sm:$0xff] %vm2961, %v2932
        %2966 = vst.msk [vmem:[#allocation4 + $0x20] sm:$0xff] %vm2961, %v2933
        %2967 = vst.msk [vmem:[#allocation4 + $0x28] sm:$0xff] %vm2961, %v2934
        %2968 = vst.msk [vmem:[#allocation4 + $0x30] sm:$0xff] %vm2961, %v2935
        %2969 = vst.msk [vmem:[#allocation4 + $0x38] sm:$0xff] %vm2961, %v2936
        %2970 = vst.msk [vmem:[#allocation4 + $0x40] sm:$0xff] %vm2961, %v2937
        %2971 = vst.msk [vmem:[#allocation4 + $0x48] sm:$0xff] %vm2961, %v2938
        %2972 = vst.msk [vmem:[#allocation4 + $0x50] sm:$0xff] %vm2961, %v2939
        %2973 = vst.msk [vmem:[#allocation4 + $0x58] sm:$0xff] %vm2961, %v2940
        %2974 = vst.msk [vmem:[#allocation4 + $0x60] sm:$0xff] %vm2961, %v2941
        %2975 = vst.msk [vmem:[#allocation4 + $0x68] sm:$0xff] %vm2961, %v2942
        %2976 = vst.msk [vmem:[#allocation4 + $0x70] sm:$0xff] %vm2961, %v2943
        %2977 = vst.msk [vmem:[#allocation4 + $0x78] sm:$0xff] %vm2961, %v2944
        %2978 = vst.msk [vmem:[#allocation4 + $0x80] sm:$0xff] %vm2961, %v2945
        %2979 = vst.msk [vmem:[#allocation4 + $0x88] sm:$0xff] %vm2961, %v2946
        %2980 = vst.msk [vmem:[#allocation4 + $0x90] sm:$0xff] %vm2961, %v2947
        %2981 = vst.msk [vmem:[#allocation4 + $0x98] sm:$0xff] %vm2961, %v2948
        %2982 = vst.msk [vmem:[#allocation4 + $0xa0] sm:$0xff] %vm2961, %v2949
        %2983 = vst.msk [vmem:[#allocation4 + $0xa8] sm:$0xff] %vm2961, %v2950
        %2984 = vst.msk [vmem:[#allocation4 + $0xb0] sm:$0xff] %vm2961, %v2951
        %2985 = vst.msk [vmem:[#allocation4 + $0xb8] sm:$0xff] %vm2961, %v2952
        %2986 = vst.msk [vmem:[#allocation4 + $0xc0] sm:$0xff] %vm2961, %v2953
        %2987 = vst.msk [vmem:[#allocation4 + $0xc8] sm:$0xff] %vm2961, %v2954
        %2988 = vst.msk [vmem:[#allocation4 + $0xd0] sm:$0xff] %vm2961, %v2955
        %2989 = vst.msk [vmem:[#allocation4 + $0xd8] sm:$0xff] %vm2961, %v2956
        %2990 = vst.msk [vmem:[#allocation4 + $0xe0] sm:$0xff] %vm2961, %v2957
        %2991 = vst.msk [vmem:[#allocation4 + $0xe8] sm:$0xff] %vm2961, %v2958
        %2992 = vst.msk [vmem:[#allocation4 + $0xf0] sm:$0xff] %vm2961, %v2959
        %2993 = vst.msk [vmem:[#allocation4 + $0xf8] sm:$0xff] %vm2961, %v2960
        %v2994 = vld [vmem:[#allocation5] sm:$0xff]
        %v2995 = vld [vmem:[#allocation5 + $0x8] sm:$0xff]
        %v2996 = vld [vmem:[#allocation5 + $0x10] sm:$0xff]
        %v2997 = vld [vmem:[#allocation5 + $0x18] sm:$0xff]
        %v2998 = vld [vmem:[#allocation5 + $0x20] sm:$0xff]
        %v2999 = vld [vmem:[#allocation5 + $0x28] sm:$0xff]
        %v3000 = vld [vmem:[#allocation5 + $0x30] sm:$0xff]
        %v3001 = vld [vmem:[#allocation5 + $0x38] sm:$0xff]
        %v3002 = vld [vmem:[#allocation5 + $0x40] sm:$0xff]
        %v3003 = vld [vmem:[#allocation5 + $0x48] sm:$0xff]
        %v3004 = vld [vmem:[#allocation5 + $0x50] sm:$0xff]
        %v3005 = vld [vmem:[#allocation5 + $0x58] sm:$0xff]
        %v3006 = vld [vmem:[#allocation5 + $0x60] sm:$0xff]
        %v3007 = vld [vmem:[#allocation5 + $0x68] sm:$0xff]
        %v3008 = vld [vmem:[#allocation5 + $0x70] sm:$0xff]
        %v3009 = vld [vmem:[#allocation5 + $0x78] sm:$0xff]
        %v3010 = vld [vmem:[#allocation5 + $0x80] sm:$0xff]
        %v3011 = vld [vmem:[#allocation5 + $0x88] sm:$0xff]
        %v3012 = vld [vmem:[#allocation5 + $0x90] sm:$0xff]
        %v3013 = vld [vmem:[#allocation5 + $0x98] sm:$0xff]
        %v3014 = vld [vmem:[#allocation5 + $0xa0] sm:$0xff]
        %v3015 = vld [vmem:[#allocation5 + $0xa8] sm:$0xff]
        %v3016 = vld [vmem:[#allocation5 + $0xb0] sm:$0xff]
        %v3017 = vld [vmem:[#allocation5 + $0xb8] sm:$0xff]
        %v3018 = vld [vmem:[#allocation5 + $0xc0] sm:$0xff]
        %v3019 = vld [vmem:[#allocation5 + $0xc8] sm:$0xff]
        %v3020 = vld [vmem:[#allocation5 + $0xd0] sm:$0xff]
        %v3021 = vld [vmem:[#allocation5 + $0xd8] sm:$0xff]
        %v3022 = vld [vmem:[#allocation5 + $0xe0] sm:$0xff]
        %v3023 = vld [vmem:[#allocation5 + $0xe8] sm:$0xff]
        %v3024 = vld [vmem:[#allocation5 + $0xf0] sm:$0xff]
        %v3025 = vld [vmem:[#allocation5 + $0xf8] sm:$0xff]
        %3027 = vset.pattern.permute.xlu0 0
        %3028 = vperm.xlu0 %3027, %v2354
        %v3029 = vpop.permute.xlu0 %3028
        %3032 = vset.pattern.permute.xlu0 0
        %3033 = vperm.xlu0 %3032, %v2356
        %v3034 = vpop.permute.xlu0 %3033
        %3037 = vset.pattern.permute.xlu0 0
        %3038 = vperm.xlu0 %3037, %v2358
        %v3039 = vpop.permute.xlu0 %3038
        %3042 = vset.pattern.permute.xlu0 0
        %3043 = vperm.xlu0 %3042, %v2360
        %v3044 = vpop.permute.xlu0 %3043
        %3047 = vset.pattern.permute.xlu0 0
        %3048 = vperm.xlu0 %3047, %v2362
        %v3049 = vpop.permute.xlu0 %3048
        %3052 = vset.pattern.permute.xlu0 0
        %3053 = vperm.xlu0 %3052, %v2364
        %v3054 = vpop.permute.xlu0 %3053
        %3057 = vset.pattern.permute.xlu0 0
        %3058 = vperm.xlu0 %3057, %v2366
        %v3059 = vpop.permute.xlu0 %3058
        %3062 = vset.pattern.permute.xlu0 0
        %3063 = vperm.xlu0 %3062, %v2368
        %v3064 = vpop.permute.xlu0 %3063
        %3067 = vset.pattern.permute.xlu0 0
        %3068 = vperm.xlu0 %3067, %v2370
        %v3069 = vpop.permute.xlu0 %3068
        %3072 = vset.pattern.permute.xlu0 0
        %3073 = vperm.xlu0 %3072, %v2372
        %v3074 = vpop.permute.xlu0 %3073
        %3077 = vset.pattern.permute.xlu0 0
        %3078 = vperm.xlu0 %3077, %v2374
        %v3079 = vpop.permute.xlu0 %3078
        %3082 = vset.pattern.permute.xlu0 0
        %3083 = vperm.xlu0 %3082, %v2376
        %v3084 = vpop.permute.xlu0 %3083
        %3087 = vset.pattern.permute.xlu0 0
        %3088 = vperm.xlu0 %3087, %v2378
        %v3089 = vpop.permute.xlu0 %3088
        %3092 = vset.pattern.permute.xlu0 0
        %3093 = vperm.xlu0 %3092, %v2380
        %v3094 = vpop.permute.xlu0 %3093
        %3097 = vset.pattern.permute.xlu0 0
        %3098 = vperm.xlu0 %3097, %v2382
        %v3099 = vpop.permute.xlu0 %3098
        %3102 = vset.pattern.permute.xlu0 0
        %3103 = vperm.xlu0 %3102, %v2384
        %v3104 = vpop.permute.xlu0 %3103
        %3107 = vset.pattern.permute.xlu0 0
        %3108 = vperm.xlu0 %3107, %v2386
        %v3109 = vpop.permute.xlu0 %3108
        %3112 = vset.pattern.permute.xlu0 0
        %3113 = vperm.xlu0 %3112, %v2388
        %v3114 = vpop.permute.xlu0 %3113
        %3117 = vset.pattern.permute.xlu0 0
        %3118 = vperm.xlu0 %3117, %v2390
        %v3119 = vpop.permute.xlu0 %3118
        %3122 = vset.pattern.permute.xlu0 0
        %3123 = vperm.xlu0 %3122, %v2392
        %v3124 = vpop.permute.xlu0 %3123
        %3127 = vset.pattern.permute.xlu0 0
        %3128 = vperm.xlu0 %3127, %v2394
        %v3129 = vpop.permute.xlu0 %3128
        %3132 = vset.pattern.permute.xlu0 0
        %3133 = vperm.xlu0 %3132, %v2396
        %v3134 = vpop.permute.xlu0 %3133
        %3137 = vset.pattern.permute.xlu0 0
        %3138 = vperm.xlu0 %3137, %v2398
        %v3139 = vpop.permute.xlu0 %3138
        %3142 = vset.pattern.permute.xlu0 0
        %3143 = vperm.xlu0 %3142, %v2400
        %v3144 = vpop.permute.xlu0 %3143
        %3147 = vset.pattern.permute.xlu0 0
        %3148 = vperm.xlu0 %3147, %v2402
        %v3149 = vpop.permute.xlu0 %3148
        %3152 = vset.pattern.permute.xlu0 0
        %3153 = vperm.xlu0 %3152, %v2404
        %v3154 = vpop.permute.xlu0 %3153
        %3157 = vset.pattern.permute.xlu0 0
        %3158 = vperm.xlu0 %3157, %v2406
        %v3159 = vpop.permute.xlu0 %3158
        %3162 = vset.pattern.permute.xlu0 0
        %3163 = vperm.xlu0 %3162, %v2408
        %v3164 = vpop.permute.xlu0 %3163
        %3167 = vset.pattern.permute.xlu0 0
        %3168 = vperm.xlu0 %3167, %v2410
        %v3169 = vpop.permute.xlu0 %3168
        %3172 = vset.pattern.permute.xlu0 0
        %3173 = vperm.xlu0 %3172, %v2412
        %v3174 = vpop.permute.xlu0 %3173
        %3177 = vset.pattern.permute.xlu0 0
        %3178 = vperm.xlu0 %3177, %v2414
        %v3179 = vpop.permute.xlu0 %3178
        %3182 = vset.pattern.permute.xlu0 0
        %3183 = vperm.xlu0 %3182, %v2416
        %v3184 = vpop.permute.xlu0 %3183
        %v3186 = vmul.f32 %v3029, %v2994
        %v3187 = vmul.f32 %v3034, %v2995
        %v3188 = vmul.f32 %v3039, %v2996
        %v3189 = vmul.f32 %v3044, %v2997
        %v3190 = vmul.f32 %v3049, %v2998
        %v3191 = vmul.f32 %v3054, %v2999
        %v3192 = vmul.f32 %v3059, %v3000
        %v3193 = vmul.f32 %v3064, %v3001
        %v3194 = vmul.f32 %v3069, %v3002
        %v3195 = vmul.f32 %v3074, %v3003
        %v3196 = vmul.f32 %v3079, %v3004
        %v3197 = vmul.f32 %v3084, %v3005
        %v3198 = vmul.f32 %v3089, %v3006
        %v3199 = vmul.f32 %v3094, %v3007
        %v3200 = vmul.f32 %v3099, %v3008
        %v3201 = vmul.f32 %v3104, %v3009
        %v3202 = vmul.f32 %v3109, %v3010
        %v3203 = vmul.f32 %v3114, %v3011
        %v3204 = vmul.f32 %v3119, %v3012
        %v3205 = vmul.f32 %v3124, %v3013
        %v3206 = vmul.f32 %v3129, %v3014
        %v3207 = vmul.f32 %v3134, %v3015
        %v3208 = vmul.f32 %v3139, %v3016
        %v3209 = vmul.f32 %v3144, %v3017
        %v3210 = vmul.f32 %v3149, %v3018
        %v3211 = vmul.f32 %v3154, %v3019
        %v3212 = vmul.f32 %v3159, %v3020
        %v3213 = vmul.f32 %v3164, %v3021
        %v3214 = vmul.f32 %v3169, %v3022
        %v3215 = vmul.f32 %v3174, %v3023
        %v3216 = vmul.f32 %v3179, %v3024
        %v3217 = vmul.f32 %v3184, %v3025
        %v3218 = vpack.c.bf16 %v2646, %v2642
        %v3219 = vpack.c.bf16 %v2648, %v2644
        %v3220 = vpack.c.bf16 %v2654, %v2650
        %v3221 = vpack.c.bf16 %v2656, %v2652
        %v3222 = vpack.c.bf16 %v2662, %v2658
        %v3223 = vpack.c.bf16 %v2664, %v2660
        %v3224 = vpack.c.bf16 %v2670, %v2666
        %v3225 = vpack.c.bf16 %v2672, %v2668
        %v3226 = vpack.c.bf16 %v2678, %v2674
        %v3227 = vpack.c.bf16 %v2680, %v2676
        %v3228 = vpack.c.bf16 %v2686, %v2682
        %v3229 = vpack.c.bf16 %v2688, %v2684
        %v3230 = vpack.c.bf16 %v2694, %v2690
        %v3231 = vpack.c.bf16 %v2696, %v2692
        %v3232 = vpack.c.bf16 %v2702, %v2698
        %v3233 = vpack.c.bf16 %v2704, %v2700
        %v3234 = vpack.c.bf16 %v2710, %v2706
        %v3235 = vpack.c.bf16 %v2712, %v2708
        %v3236 = vpack.c.bf16 %v2718, %v2714
        %v3237 = vpack.c.bf16 %v2720, %v2716
        %v3238 = vpack.c.bf16 %v2726, %v2722
        %v3239 = vpack.c.bf16 %v2728, %v2724
        %v3240 = vpack.c.bf16 %v2734, %v2730
        %v3241 = vpack.c.bf16 %v2736, %v2732
        %v3242 = vpack.c.bf16 %v2742, %v2738
        %v3243 = vpack.c.bf16 %v2744, %v2740
        %v3244 = vpack.c.bf16 %v2750, %v2746
        %v3245 = vpack.c.bf16 %v2752, %v2748
        %v3246 = vpack.c.bf16 %v2758, %v2754
        %v3247 = vpack.c.bf16 %v2760, %v2756
        %v3248 = vpack.c.bf16 %v2766, %v2762
        %v3249 = vpack.c.bf16 %v2768, %v2764
        %v3250 = vpack.c.bf16 %v1239, %v1234
        %v3251 = vpack.c.bf16 %v1249, %v1244
        %v3252 = vpack.c.bf16 %v1259, %v1254
        %v3253 = vpack.c.bf16 %v1269, %v1264
        %v3254 = vpack.c.bf16 %v1279, %v1274
        %v3255 = vpack.c.bf16 %v1289, %v1284
        %v3256 = vpack.c.bf16 %v1299, %v1294
        %v3257 = vpack.c.bf16 %v1309, %v1304
        %v3258 = vpack.c.bf16 %v1319, %v1314
        %v3259 = vpack.c.bf16 %v1329, %v1324
        %v3260 = vpack.c.bf16 %v1339, %v1334
        %v3261 = vpack.c.bf16 %v1349, %v1344
        %v3262 = vpack.c.bf16 %v1359, %v1354
        %v3263 = vpack.c.bf16 %v1369, %v1364
        %v3264 = vpack.c.bf16 %v1379, %v1374
        %v3265 = vpack.c.bf16 %v1389, %v1384
        %3282 = vrot.lane.b32.xlu0 %v3250, 96
        %v3283 = vpop.permute.xlu0 %3282
        %3284 = vrot.lane.b32.xlu0 %v3251, 96
        %v3285 = vpop.permute.xlu0 %3284
        %3286 = vrot.lane.b32.xlu0 %v3252, 96
        %v3287 = vpop.permute.xlu0 %3286
        %3288 = vrot.lane.b32.xlu0 %v3253, 96
        %v3289 = vpop.permute.xlu0 %3288
        %3290 = vrot.lane.b32.xlu0 %v3254, 96
        %v3291 = vpop.permute.xlu0 %3290
        %3292 = vrot.lane.b32.xlu0 %v3255, 96
        %v3293 = vpop.permute.xlu0 %3292
        %3294 = vrot.lane.b32.xlu0 %v3256, 96
        %v3295 = vpop.permute.xlu0 %3294
        %3296 = vrot.lane.b32.xlu0 %v3257, 96
        %v3297 = vpop.permute.xlu0 %3296
        %3298 = vrot.lane.b32.xlu0 %v3258, 96
        %v3299 = vpop.permute.xlu0 %3298
        %3300 = vrot.lane.b32.xlu0 %v3259, 96
        %v3301 = vpop.permute.xlu0 %3300
        %3302 = vrot.lane.b32.xlu0 %v3260, 96
        %v3303 = vpop.permute.xlu0 %3302
        %3304 = vrot.lane.b32.xlu0 %v3261, 96
        %v3305 = vpop.permute.xlu0 %3304
        %3306 = vrot.lane.b32.xlu0 %v3262, 96
        %v3307 = vpop.permute.xlu0 %3306
        %3308 = vrot.lane.b32.xlu0 %v3263, 96
        %v3309 = vpop.permute.xlu0 %3308
        %3310 = vrot.lane.b32.xlu0 %v3264, 96
        %v3311 = vpop.permute.xlu0 %3310
        %3312 = vrot.lane.b32.xlu0 %v3265, 96
        %v3313 = vpop.permute.xlu0 %3312
        %3330 = vmatprep.subr.bf16.mxu0 0
        %3331 = vmatpush1.bf16.msra.mxu0 %v3297
        %3332 = vmatprep.subr.bf16.mxu0 0
        %3333 = vmatpush1.bf16.msra.mxu0 %v3295
        %3334 = vmatprep.subr.bf16.mxu0 0
        %3335 = vmatpush1.bf16.msra.mxu0 %v3293
        %3336 = vmatprep.subr.bf16.mxu0 0
        %3337 = vmatpush1.bf16.msra.mxu0 %v3291
        %3338 = vmatprep.subr.bf16.mxu0 0
        %3339 = vmatpush1.bf16.msra.mxu0 %v3289
        %3340 = vmatprep.subr.bf16.mxu0 0
        %3341 = vmatpush1.bf16.msra.mxu0 %v3287
        %3342 = vmatprep.subr.bf16.mxu0 0
        %3343 = vmatpush1.bf16.msra.mxu0 %v3285
        %3344 = vmatprep.subr.bf16.mxu0 0
        %3345 = vmatpush1.bf16.msra.mxu0 %v3283
        %3346 = vmatprep.subr.bf16.mxu0 0
        %3347 = vmatpush2.bf16.msra.mxu0 %v3313
        %3348 = vmatprep.subr.bf16.mxu0 0
        %3349 = vmatpush2.bf16.msra.mxu0 %v3311
        %3350 = vmatprep.subr.bf16.mxu0 0
        %3351 = vmatpush2.bf16.msra.mxu0 %v3309
        %3352 = vmatprep.subr.bf16.mxu0 0
        %3353 = vmatpush2.bf16.msra.mxu0 %v3307
        %3354 = vmatprep.subr.bf16.mxu0 0
        %3355 = vmatpush2.bf16.msra.mxu0 %v3305
        %3356 = vmatprep.subr.bf16.mxu0 0
        %3357 = vmatpush2.bf16.msra.mxu0 %v3303
        %3358 = vmatprep.subr.bf16.mxu0 0
        %3359 = vmatpush2.bf16.msra.mxu0 %v3301
        %3360 = vmatprep.subr.bf16.mxu0 0
        %3361 = vmatpush2.bf16.msra.mxu0 %v3299
        %3362 = vmatprep.mubr.bf16.mxu0 %v3219
        %3363 = vmatmul.mubr.bf16.gmra.mxu0 %v3218
        %v3364 = vpop.f32.mrf.mxu0
        %v3365 = vadd.f32 0.0, %v3364
        %v3366 = vpop.f32.mrf.mxu0
        %v3367 = vpop.f32.mrf.mxu0
        %v3368 = vadd.f32 0.0, %v3367
        %v3369 = vpop.f32.mrf.mxu0
        %3370 = vmatprep.mubr.bf16.mxu0 %v3221
        %3371 = vmatmul.mubr.bf16.gmra.mxu0 %v3220
        %v3372 = vpop.f32.mrf.mxu0
        %v3373 = vadd.f32 0.0, %v3372
        %v3374 = vpop.f32.mrf.mxu0
        %v3375 = vpop.f32.mrf.mxu0
        %v3376 = vadd.f32 0.0, %v3375
        %v3377 = vpop.f32.mrf.mxu0
        %3378 = vmatprep.mubr.bf16.mxu0 %v3223
        %3379 = vmatmul.mubr.bf16.gmra.mxu0 %v3222
        %v3380 = vpop.f32.mrf.mxu0
        %v3381 = vadd.f32 0.0, %v3380
        %v3382 = vpop.f32.mrf.mxu0
        %v3383 = vpop.f32.mrf.mxu0
        %v3384 = vadd.f32 0.0, %v3383
        %v3385 = vpop.f32.mrf.mxu0
        %3386 = vmatprep.mubr.bf16.mxu0 %v3225
        %3387 = vmatmul.mubr.bf16.gmra.mxu0 %v3224
        %v3388 = vpop.f32.mrf.mxu0
        %v3389 = vadd.f32 0.0, %v3388
        %v3390 = vpop.f32.mrf.mxu0
        %v3391 = vpop.f32.mrf.mxu0
        %v3392 = vadd.f32 0.0, %v3391
        %v3393 = vpop.f32.mrf.mxu0
        %3394 = vmatprep.mubr.bf16.mxu0 %v3227
        %3395 = vmatmul.mubr.bf16.gmra.mxu0 %v3226
        %v3396 = vpop.f32.mrf.mxu0
        %v3397 = vadd.f32 0.0, %v3396
        %v3398 = vpop.f32.mrf.mxu0
        %v3399 = vpop.f32.mrf.mxu0
        %v3400 = vadd.f32 0.0, %v3399
        %v3401 = vpop.f32.mrf.mxu0
        %3402 = vmatprep.mubr.bf16.mxu0 %v3229
        %3403 = vmatmul.mubr.bf16.gmra.mxu0 %v3228
        %v3404 = vpop.f32.mrf.mxu0
        %v3405 = vadd.f32 0.0, %v3404
        %v3406 = vpop.f32.mrf.mxu0
        %v3407 = vpop.f32.mrf.mxu0
        %v3408 = vadd.f32 0.0, %v3407
        %v3409 = vpop.f32.mrf.mxu0
        %3410 = vmatprep.mubr.bf16.mxu0 %v3231
        %3411 = vmatmul.mubr.bf16.gmra.mxu0 %v3230
        %v3412 = vpop.f32.mrf.mxu0
        %v3413 = vadd.f32 0.0, %v3412
        %v3414 = vpop.f32.mrf.mxu0
        %v3415 = vpop.f32.mrf.mxu0
        %v3416 = vadd.f32 0.0, %v3415
        %v3417 = vpop.f32.mrf.mxu0
        %3418 = vmatprep.mubr.bf16.mxu0 %v3233
        %3419 = vmatmul.mubr.bf16.gmra.mxu0 %v3232
        %v3420 = vpop.f32.mrf.mxu0
        %v3421 = vadd.f32 0.0, %v3420
        %v3422 = vpop.f32.mrf.mxu0
        %v3423 = vpop.f32.mrf.mxu0
        %v3424 = vadd.f32 0.0, %v3423
        %v3425 = vpop.f32.mrf.mxu0
        %3426 = vmatprep.mubr.bf16.mxu0 %v3235
        %3427 = vmatmul.mubr.bf16.gmra.mxu0 %v3234
        %v3428 = vpop.f32.mrf.mxu0
        %v3429 = vadd.f32 0.0, %v3428
        %v3430 = vpop.f32.mrf.mxu0
        %v3431 = vpop.f32.mrf.mxu0
        %v3432 = vadd.f32 0.0, %v3431
        %v3433 = vpop.f32.mrf.mxu0
        %3434 = vmatprep.mubr.bf16.mxu0 %v3237
        %3435 = vmatmul.mubr.bf16.gmra.mxu0 %v3236
        %v3436 = vpop.f32.mrf.mxu0
        %v3437 = vadd.f32 0.0, %v3436
        %v3438 = vpop.f32.mrf.mxu0
        %v3439 = vpop.f32.mrf.mxu0
        %v3440 = vadd.f32 0.0, %v3439
        %v3441 = vpop.f32.mrf.mxu0
        %3442 = vmatprep.mubr.bf16.mxu0 %v3239
        %3443 = vmatmul.mubr.bf16.gmra.mxu0 %v3238
        %v3444 = vpop.f32.mrf.mxu0
        %v3445 = vadd.f32 0.0, %v3444
        %v3446 = vpop.f32.mrf.mxu0
        %v3447 = vpop.f32.mrf.mxu0
        %v3448 = vadd.f32 0.0, %v3447
        %v3449 = vpop.f32.mrf.mxu0
        %3450 = vmatprep.mubr.bf16.mxu0 %v3241
        %3451 = vmatmul.mubr.bf16.gmra.mxu0 %v3240
        %v3452 = vpop.f32.mrf.mxu0
        %v3453 = vadd.f32 0.0, %v3452
        %v3454 = vpop.f32.mrf.mxu0
        %v3455 = vpop.f32.mrf.mxu0
        %v3456 = vadd.f32 0.0, %v3455
        %v3457 = vpop.f32.mrf.mxu0
        %3458 = vmatprep.mubr.bf16.mxu0 %v3243
        %3459 = vmatmul.mubr.bf16.gmra.mxu0 %v3242
        %v3460 = vpop.f32.mrf.mxu0
        %v3461 = vadd.f32 0.0, %v3460
        %v3462 = vpop.f32.mrf.mxu0
        %v3463 = vpop.f32.mrf.mxu0
        %v3464 = vadd.f32 0.0, %v3463
        %v3465 = vpop.f32.mrf.mxu0
        %3466 = vmatprep.mubr.bf16.mxu0 %v3245
        %3467 = vmatmul.mubr.bf16.gmra.mxu0 %v3244
        %v3468 = vpop.f32.mrf.mxu0
        %v3469 = vadd.f32 0.0, %v3468
        %v3470 = vpop.f32.mrf.mxu0
        %v3471 = vpop.f32.mrf.mxu0
        %v3472 = vadd.f32 0.0, %v3471
        %v3473 = vpop.f32.mrf.mxu0
        %3474 = vmatprep.mubr.bf16.mxu0 %v3247
        %3475 = vmatmul.mubr.bf16.gmra.mxu0 %v3246
        %v3476 = vpop.f32.mrf.mxu0
        %v3477 = vadd.f32 0.0, %v3476
        %v3478 = vpop.f32.mrf.mxu0
        %v3479 = vpop.f32.mrf.mxu0
        %v3480 = vadd.f32 0.0, %v3479
        %v3481 = vpop.f32.mrf.mxu0
        %3482 = vmatprep.mubr.bf16.mxu0 %v3249
        %3483 = vmatmul.mubr.bf16.gmra.mxu0 %v3248
        %v3484 = vpop.f32.mrf.mxu0
        %v3485 = vadd.f32 0.0, %v3484
        %v3486 = vpop.f32.mrf.mxu0
        %v3487 = vpop.f32.mrf.mxu0
        %v3488 = vadd.f32 0.0, %v3487
        %v3489 = vpop.f32.mrf.mxu0
        %3490 = vdwg.mxu0
        %v3491 = vadd.f32 %v3186, %v3365
        %v3492 = vadd.f32 %v3187, %v3368
        %v3493 = vadd.f32 %v3188, %v3373
        %v3494 = vadd.f32 %v3189, %v3376
        %v3495 = vadd.f32 %v3190, %v3381
        %v3496 = vadd.f32 %v3191, %v3384
        %v3497 = vadd.f32 %v3192, %v3389
        %v3498 = vadd.f32 %v3193, %v3392
        %v3499 = vadd.f32 %v3194, %v3397
        %v3500 = vadd.f32 %v3195, %v3400
        %v3501 = vadd.f32 %v3196, %v3405
        %v3502 = vadd.f32 %v3197, %v3408
        %v3503 = vadd.f32 %v3198, %v3413
        %v3504 = vadd.f32 %v3199, %v3416
        %v3505 = vadd.f32 %v3200, %v3421
        %v3506 = vadd.f32 %v3201, %v3424
        %v3507 = vadd.f32 %v3202, %v3429
        %v3508 = vadd.f32 %v3203, %v3432
        %v3509 = vadd.f32 %v3204, %v3437
        %v3510 = vadd.f32 %v3205, %v3440
        %v3511 = vadd.f32 %v3206, %v3445
        %v3512 = vadd.f32 %v3207, %v3448
        %v3513 = vadd.f32 %v3208, %v3453
        %v3514 = vadd.f32 %v3209, %v3456
        %v3515 = vadd.f32 %v3210, %v3461
        %v3516 = vadd.f32 %v3211, %v3464
        %v3517 = vadd.f32 %v3212, %v3469
        %v3518 = vadd.f32 %v3213, %v3472
        %v3519 = vadd.f32 %v3214, %v3477
        %v3520 = vadd.f32 %v3215, %v3480
        %v3521 = vadd.f32 %v3216, %v3485
        %v3522 = vadd.f32 %v3217, %v3488
        %3523 = vst.msk [vmem:[#allocation5] sm:$0xff] %vm1070, %v3491
        %3524 = vst.msk [vmem:[#allocation5 + $0x8] sm:$0xff] %vm1070, %v3492
        %3525 = vst.msk [vmem:[#allocation5 + $0x10] sm:$0xff] %vm1070, %v3493
        %3526 = vst.msk [vmem:[#allocation5 + $0x18] sm:$0xff] %vm1070, %v3494
        %3527 = vst.msk [vmem:[#allocation5 + $0x20] sm:$0xff] %vm1070, %v3495
        %3528 = vst.msk [vmem:[#allocation5 + $0x28] sm:$0xff] %vm1070, %v3496
        %3529 = vst.msk [vmem:[#allocation5 + $0x30] sm:$0xff] %vm1070, %v3497
        %3530 = vst.msk [vmem:[#allocation5 + $0x38] sm:$0xff] %vm1070, %v3498
        %3531 = vst.msk [vmem:[#allocation5 + $0x40] sm:$0xff] %vm1070, %v3499
        %3532 = vst.msk [vmem:[#allocation5 + $0x48] sm:$0xff] %vm1070, %v3500
        %3533 = vst.msk [vmem:[#allocation5 + $0x50] sm:$0xff] %vm1070, %v3501
        %3534 = vst.msk [vmem:[#allocation5 + $0x58] sm:$0xff] %vm1070, %v3502
        %3535 = vst.msk [vmem:[#allocation5 + $0x60] sm:$0xff] %vm1070, %v3503
        %3536 = vst.msk [vmem:[#allocation5 + $0x68] sm:$0xff] %vm1070, %v3504
        %3537 = vst.msk [vmem:[#allocation5 + $0x70] sm:$0xff] %vm1070, %v3505
        %3538 = vst.msk [vmem:[#allocation5 + $0x78] sm:$0xff] %vm1070, %v3506
        %3539 = vst.msk [vmem:[#allocation5 + $0x80] sm:$0xff] %vm1070, %v3507
        %3540 = vst.msk [vmem:[#allocation5 + $0x88] sm:$0xff] %vm1070, %v3508
        %3541 = vst.msk [vmem:[#allocation5 + $0x90] sm:$0xff] %vm1070, %v3509
        %3542 = vst.msk [vmem:[#allocation5 + $0x98] sm:$0xff] %vm1070, %v3510
        %3543 = vst.msk [vmem:[#allocation5 + $0xa0] sm:$0xff] %vm1070, %v3511
        %3544 = vst.msk [vmem:[#allocation5 + $0xa8] sm:$0xff] %vm1070, %v3512
        %3545 = vst.msk [vmem:[#allocation5 + $0xb0] sm:$0xff] %vm1070, %v3513
        %3546 = vst.msk [vmem:[#allocation5 + $0xb8] sm:$0xff] %vm1070, %v3514
        %3547 = vst.msk [vmem:[#allocation5 + $0xc0] sm:$0xff] %vm1070, %v3515
        %3548 = vst.msk [vmem:[#allocation5 + $0xc8] sm:$0xff] %vm1070, %v3516
        %3549 = vst.msk [vmem:[#allocation5 + $0xd0] sm:$0xff] %vm1070, %v3517
        %3550 = vst.msk [vmem:[#allocation5 + $0xd8] sm:$0xff] %vm1070, %v3518
        %3551 = vst.msk [vmem:[#allocation5 + $0xe0] sm:$0xff] %vm1070, %v3519
        %3552 = vst.msk [vmem:[#allocation5 + $0xe8] sm:$0xff] %vm1070, %v3520
        %3553 = vst.msk [vmem:[#allocation5 + $0xf0] sm:$0xff] %vm1070, %v3521
        %3554 = vst.msk [vmem:[#allocation5 + $0xf8] sm:$0xff] %vm1070, %v3522
        %3555 = vst.msk [vmem:[#allocation3] sm:$0xff] %vm2961, %v2289
        %3556 = vst.msk [vmem:[#allocation3 + $0x8] sm:$0xff] %vm2961, %v2290
        %3557 = vst.msk [vmem:[#allocation3 + $0x10] sm:$0xff] %vm2961, %v2291
        %3558 = vst.msk [vmem:[#allocation3 + $0x18] sm:$0xff] %vm2961, %v2292
        %3559 = vst.msk [vmem:[#allocation3 + $0x20] sm:$0xff] %vm2961, %v2293
        %3560 = vst.msk [vmem:[#allocation3 + $0x28] sm:$0xff] %vm2961, %v2294
        %3561 = vst.msk [vmem:[#allocation3 + $0x30] sm:$0xff] %vm2961, %v2295
        %3562 = vst.msk [vmem:[#allocation3 + $0x38] sm:$0xff] %vm2961, %v2296
        %3563 = vst.msk [vmem:[#allocation3 + $0x40] sm:$0xff] %vm2961, %v2297
        %3564 = vst.msk [vmem:[#allocation3 + $0x48] sm:$0xff] %vm2961, %v2298
        %3565 = vst.msk [vmem:[#allocation3 + $0x50] sm:$0xff] %vm2961, %v2299
        %3566 = vst.msk [vmem:[#allocation3 + $0x58] sm:$0xff] %vm2961, %v2300
        %3567 = vst.msk [vmem:[#allocation3 + $0x60] sm:$0xff] %vm2961, %v2301
        %3568 = vst.msk [vmem:[#allocation3 + $0x68] sm:$0xff] %vm2961, %v2302
        %3569 = vst.msk [vmem:[#allocation3 + $0x70] sm:$0xff] %vm2961, %v2303
        %3570 = vst.msk [vmem:[#allocation3 + $0x78] sm:$0xff] %vm2961, %v2304
        %3571 = vst.msk [vmem:[#allocation3 + $0x80] sm:$0xff] %vm2961, %v2305
        %3572 = vst.msk [vmem:[#allocation3 + $0x88] sm:$0xff] %vm2961, %v2306
        %3573 = vst.msk [vmem:[#allocation3 + $0x90] sm:$0xff] %vm2961, %v2307
        %3574 = vst.msk [vmem:[#allocation3 + $0x98] sm:$0xff] %vm2961, %v2308
        %3575 = vst.msk [vmem:[#allocation3 + $0xa0] sm:$0xff] %vm2961, %v2309
        %3576 = vst.msk [vmem:[#allocation3 + $0xa8] sm:$0xff] %vm2961, %v2310
        %3577 = vst.msk [vmem:[#allocation3 + $0xb0] sm:$0xff] %vm2961, %v2311
        %3578 = vst.msk [vmem:[#allocation3 + $0xb8] sm:$0xff] %vm2961, %v2312
        %3579 = vst.msk [vmem:[#allocation3 + $0xc0] sm:$0xff] %vm2961, %v2313
        %3580 = vst.msk [vmem:[#allocation3 + $0xc8] sm:$0xff] %vm2961, %v2314
        %3581 = vst.msk [vmem:[#allocation3 + $0xd0] sm:$0xff] %vm2961, %v2315
        %3582 = vst.msk [vmem:[#allocation3 + $0xd8] sm:$0xff] %vm2961, %v2316
        %3583 = vst.msk [vmem:[#allocation3 + $0xe0] sm:$0xff] %vm2961, %v2317
        %3584 = vst.msk [vmem:[#allocation3 + $0xe8] sm:$0xff] %vm2961, %v2318
        %3585 = vst.msk [vmem:[#allocation3 + $0xf0] sm:$0xff] %vm2961, %v2319
        %3586 = vst.msk [vmem:[#allocation3 + $0xf8] sm:$0xff] %vm2961, %v2320
        %p3587 = scmp.eq.s32.totalorder %s28, 1
        // Predicated region
        $region91: #{tpu_custom_call.1} parent=81 // pred_check
          %p3588 = pneg %p3587
        $region92: #{tpu_custom_call.1} parent=81 // pred_check_branch
          %3590 = sbr.rel (%p3588) target = $region94
        $region93: #{tpu_custom_call.1} parent=81 // pred_region
          %v3591 = vld [vmem:[#allocation5] sm:$0xff]
          %v3592 = vld [vmem:[#allocation5 + $0x8] sm:$0xff]
          %v3593 = vld [vmem:[#allocation5 + $0x10] sm:$0xff]
          %v3594 = vld [vmem:[#allocation5 + $0x18] sm:$0xff]
          %v3595 = vld [vmem:[#allocation5 + $0x20] sm:$0xff]
          %v3596 = vld [vmem:[#allocation5 + $0x28] sm:$0xff]
          %v3597 = vld [vmem:[#allocation5 + $0x30] sm:$0xff]
          %v3598 = vld [vmem:[#allocation5 + $0x38] sm:$0xff]
          %v3599 = vld [vmem:[#allocation5 + $0x40] sm:$0xff]
          %v3600 = vld [vmem:[#allocation5 + $0x48] sm:$0xff]
          %v3601 = vld [vmem:[#allocation5 + $0x50] sm:$0xff]
          %v3602 = vld [vmem:[#allocation5 + $0x58] sm:$0xff]
          %v3603 = vld [vmem:[#allocation5 + $0x60] sm:$0xff]
          %v3604 = vld [vmem:[#allocation5 + $0x68] sm:$0xff]
          %v3605 = vld [vmem:[#allocation5 + $0x70] sm:$0xff]
          %v3606 = vld [vmem:[#allocation5 + $0x78] sm:$0xff]
          %v3607 = vld [vmem:[#allocation5 + $0x80] sm:$0xff]
          %v3608 = vld [vmem:[#allocation5 + $0x88] sm:$0xff]
          %v3609 = vld [vmem:[#allocation5 + $0x90] sm:$0xff]
          %v3610 = vld [vmem:[#allocation5 + $0x98] sm:$0xff]
          %v3611 = vld [vmem:[#allocation5 + $0xa0] sm:$0xff]
          %v3612 = vld [vmem:[#allocation5 + $0xa8] sm:$0xff]
          %v3613 = vld [vmem:[#allocation5 + $0xb0] sm:$0xff]
          %v3614 = vld [vmem:[#allocation5 + $0xb8] sm:$0xff]
          %v3615 = vld [vmem:[#allocation5 + $0xc0] sm:$0xff]
          %v3616 = vld [vmem:[#allocation5 + $0xc8] sm:$0xff]
          %v3617 = vld [vmem:[#allocation5 + $0xd0] sm:$0xff]
          %v3618 = vld [vmem:[#allocation5 + $0xd8] sm:$0xff]
          %v3619 = vld [vmem:[#allocation5 + $0xe0] sm:$0xff]
          %v3620 = vld [vmem:[#allocation5 + $0xe8] sm:$0xff]
          %v3621 = vld [vmem:[#allocation5 + $0xf0] sm:$0xff]
          %v3622 = vld [vmem:[#allocation5 + $0xf8] sm:$0xff]
          %v3623 = vld [vmem:[#allocation4] sm:$0xff]
          %v3624 = vld [vmem:[#allocation4 + $0x8] sm:$0xff]
          %v3625 = vld [vmem:[#allocation4 + $0x10] sm:$0xff]
          %v3626 = vld [vmem:[#allocation4 + $0x18] sm:$0xff]
          %v3627 = vld [vmem:[#allocation4 + $0x20] sm:$0xff]
          %v3628 = vld [vmem:[#allocation4 + $0x28] sm:$0xff]
          %v3629 = vld [vmem:[#allocation4 + $0x30] sm:$0xff]
          %v3630 = vld [vmem:[#allocation4 + $0x38] sm:$0xff]
          %v3631 = vld [vmem:[#allocation4 + $0x40] sm:$0xff]
          %v3632 = vld [vmem:[#allocation4 + $0x48] sm:$0xff]
          %v3633 = vld [vmem:[#allocation4 + $0x50] sm:$0xff]
          %v3634 = vld [vmem:[#allocation4 + $0x58] sm:$0xff]
          %v3635 = vld [vmem:[#allocation4 + $0x60] sm:$0xff]
          %v3636 = vld [vmem:[#allocation4 + $0x68] sm:$0xff]
          %v3637 = vld [vmem:[#allocation4 + $0x70] sm:$0xff]
          %v3638 = vld [vmem:[#allocation4 + $0x78] sm:$0xff]
          %v3639 = vld [vmem:[#allocation4 + $0x80] sm:$0xff]
          %v3640 = vld [vmem:[#allocation4 + $0x88] sm:$0xff]
          %v3641 = vld [vmem:[#allocation4 + $0x90] sm:$0xff]
          %v3642 = vld [vmem:[#allocation4 + $0x98] sm:$0xff]
          %v3643 = vld [vmem:[#allocation4 + $0xa0] sm:$0xff]
          %v3644 = vld [vmem:[#allocation4 + $0xa8] sm:$0xff]
          %v3645 = vld [vmem:[#allocation4 + $0xb0] sm:$0xff]
          %v3646 = vld [vmem:[#allocation4 + $0xb8] sm:$0xff]
          %v3647 = vld [vmem:[#allocation4 + $0xc0] sm:$0xff]
          %v3648 = vld [vmem:[#allocation4 + $0xc8] sm:$0xff]
          %v3649 = vld [vmem:[#allocation4 + $0xd0] sm:$0xff]
          %v3650 = vld [vmem:[#allocation4 + $0xd8] sm:$0xff]
          %v3651 = vld [vmem:[#allocation4 + $0xe0] sm:$0xff]
          %v3652 = vld [vmem:[#allocation4 + $0xe8] sm:$0xff]
          %v3653 = vld [vmem:[#allocation4 + $0xf0] sm:$0xff]
          %v3654 = vld [vmem:[#allocation4 + $0xf8] sm:$0xff]
          %3656 = vset.pattern.permute.xlu0 0
          %3657 = vperm.xlu0 %3656, %v3623
          %v3658 = vpop.permute.xlu0 %3657
          %3661 = vset.pattern.permute.xlu0 0
          %3662 = vperm.xlu0 %3661, %v3624
          %v3663 = vpop.permute.xlu0 %3662
          %3666 = vset.pattern.permute.xlu0 0
          %3667 = vperm.xlu0 %3666, %v3625
          %v3668 = vpop.permute.xlu0 %3667
          %3671 = vset.pattern.permute.xlu0 0
          %3672 = vperm.xlu0 %3671, %v3626
          %v3673 = vpop.permute.xlu0 %3672
          %3676 = vset.pattern.permute.xlu0 0
          %3677 = vperm.xlu0 %3676, %v3627
          %v3678 = vpop.permute.xlu0 %3677
          %3681 = vset.pattern.permute.xlu0 0
          %3682 = vperm.xlu0 %3681, %v3628
          %v3683 = vpop.permute.xlu0 %3682
          %3686 = vset.pattern.permute.xlu0 0
          %3687 = vperm.xlu0 %3686, %v3629
          %v3688 = vpop.permute.xlu0 %3687
          %3691 = vset.pattern.permute.xlu0 0
          %3692 = vperm.xlu0 %3691, %v3630
          %v3693 = vpop.permute.xlu0 %3692
          %3696 = vset.pattern.permute.xlu0 0
          %3697 = vperm.xlu0 %3696, %v3631
          %v3698 = vpop.permute.xlu0 %3697
          %3701 = vset.pattern.permute.xlu0 0
          %3702 = vperm.xlu0 %3701, %v3632
          %v3703 = vpop.permute.xlu0 %3702
          %3706 = vset.pattern.permute.xlu0 0
          %3707 = vperm.xlu0 %3706, %v3633
          %v3708 = vpop.permute.xlu0 %3707
          %3711 = vset.pattern.permute.xlu0 0
          %3712 = vperm.xlu0 %3711, %v3634
          %v3713 = vpop.permute.xlu0 %3712
          %3716 = vset.pattern.permute.xlu0 0
          %3717 = vperm.xlu0 %3716, %v3635
          %v3718 = vpop.permute.xlu0 %3717
          %3721 = vset.pattern.permute.xlu0 0
          %3722 = vperm.xlu0 %3721, %v3636
          %v3723 = vpop.permute.xlu0 %3722
          %3726 = vset.pattern.permute.xlu0 0
          %3727 = vperm.xlu0 %3726, %v3637
          %v3728 = vpop.permute.xlu0 %3727
          %3731 = vset.pattern.permute.xlu0 0
          %3732 = vperm.xlu0 %3731, %v3638
          %v3733 = vpop.permute.xlu0 %3732
          %3736 = vset.pattern.permute.xlu0 0
          %3737 = vperm.xlu0 %3736, %v3639
          %v3738 = vpop.permute.xlu0 %3737
          %3741 = vset.pattern.permute.xlu0 0
          %3742 = vperm.xlu0 %3741, %v3640
          %v3743 = vpop.permute.xlu0 %3742
          %3746 = vset.pattern.permute.xlu0 0
          %3747 = vperm.xlu0 %3746, %v3641
          %v3748 = vpop.permute.xlu0 %3747
          %3751 = vset.pattern.permute.xlu0 0
          %3752 = vperm.xlu0 %3751, %v3642
          %v3753 = vpop.permute.xlu0 %3752
          %3756 = vset.pattern.permute.xlu0 0
          %3757 = vperm.xlu0 %3756, %v3643
          %v3758 = vpop.permute.xlu0 %3757
          %3761 = vset.pattern.permute.xlu0 0
          %3762 = vperm.xlu0 %3761, %v3644
          %v3763 = vpop.permute.xlu0 %3762
          %3766 = vset.pattern.permute.xlu0 0
          %3767 = vperm.xlu0 %3766, %v3645
          %v3768 = vpop.permute.xlu0 %3767
          %3771 = vset.pattern.permute.xlu0 0
          %3772 = vperm.xlu0 %3771, %v3646
          %v3773 = vpop.permute.xlu0 %3772
          %3776 = vset.pattern.permute.xlu0 0
          %3777 = vperm.xlu0 %3776, %v3647
          %v3778 = vpop.permute.xlu0 %3777
          %3781 = vset.pattern.permute.xlu0 0
          %3782 = vperm.xlu0 %3781, %v3648
          %v3783 = vpop.permute.xlu0 %3782
          %3786 = vset.pattern.permute.xlu0 0
          %3787 = vperm.xlu0 %3786, %v3649
          %v3788 = vpop.permute.xlu0 %3787
          %3791 = vset.pattern.permute.xlu0 0
          %3792 = vperm.xlu0 %3791, %v3650
          %v3793 = vpop.permute.xlu0 %3792
          %3796 = vset.pattern.permute.xlu0 0
          %3797 = vperm.xlu0 %3796, %v3651
          %v3798 = vpop.permute.xlu0 %3797
          %3801 = vset.pattern.permute.xlu0 0
          %3802 = vperm.xlu0 %3801, %v3652
          %v3803 = vpop.permute.xlu0 %3802
          %3806 = vset.pattern.permute.xlu0 0
          %3807 = vperm.xlu0 %3806, %v3653
          %v3808 = vpop.permute.xlu0 %3807
          %3811 = vset.pattern.permute.xlu0 0
          %3812 = vperm.xlu0 %3811, %v3654
          %v3813 = vpop.permute.xlu0 %3812
          %v3815 = vrcp.pop %v3658
          %v3816 = vmul.f32 %v3591, %v3815
          %v3817 = vrcp.pop %v3663
          %v3818 = vmul.f32 %v3592, %v3817
          %v3819 = vrcp.pop %v3668
          %v3820 = vmul.f32 %v3593, %v3819
          %v3821 = vrcp.pop %v3673
          %v3822 = vmul.f32 %v3594, %v3821
          %v3823 = vrcp.pop %v3678
          %v3824 = vmul.f32 %v3595, %v3823
          %v3825 = vrcp.pop %v3683
          %v3826 = vmul.f32 %v3596, %v3825
          %v3827 = vrcp.pop %v3688
          %v3828 = vmul.f32 %v3597, %v3827
          %v3829 = vrcp.pop %v3693
          %v3830 = vmul.f32 %v3598, %v3829
          %v3831 = vrcp.pop %v3698
          %v3832 = vmul.f32 %v3599, %v3831
          %v3833 = vrcp.pop %v3703
          %v3834 = vmul.f32 %v3600, %v3833
          %v3835 = vrcp.pop %v3708
          %v3836 = vmul.f32 %v3601, %v3835
          %v3837 = vrcp.pop %v3713
          %v3838 = vmul.f32 %v3602, %v3837
          %v3839 = vrcp.pop %v3718
          %v3840 = vmul.f32 %v3603, %v3839
          %v3841 = vrcp.pop %v3723
          %v3842 = vmul.f32 %v3604, %v3841
          %v3843 = vrcp.pop %v3728
          %v3844 = vmul.f32 %v3605, %v3843
          %v3845 = vrcp.pop %v3733
          %v3846 = vmul.f32 %v3606, %v3845
          %v3847 = vrcp.pop %v3738
          %v3848 = vmul.f32 %v3607, %v3847
          %v3849 = vrcp.pop %v3743
          %v3850 = vmul.f32 %v3608, %v3849
          %v3851 = vrcp.pop %v3748
          %v3852 = vmul.f32 %v3609, %v3851
          %v3853 = vrcp.pop %v3753
          %v3854 = vmul.f32 %v3610, %v3853
          %v3855 = vrcp.pop %v3758
          %v3856 = vmul.f32 %v3611, %v3855
          %v3857 = vrcp.pop %v3763
          %v3858 = vmul.f32 %v3612, %v3857
          %v3859 = vrcp.pop %v3768
          %v3860 = vmul.f32 %v3613, %v3859
          %v3861 = vrcp.pop %v3773
          %v3862 = vmul.f32 %v3614, %v3861
          %v3863 = vrcp.pop %v3778
          %v3864 = vmul.f32 %v3615, %v3863
          %v3865 = vrcp.pop %v3783
          %v3866 = vmul.f32 %v3616, %v3865
          %v3867 = vrcp.pop %v3788
          %v3868 = vmul.f32 %v3617, %v3867
          %v3869 = vrcp.pop %v3793
          %v3870 = vmul.f32 %v3618, %v3869
          %v3871 = vrcp.pop %v3798
          %v3872 = vmul.f32 %v3619, %v3871
          %v3873 = vrcp.pop %v3803
          %v3874 = vmul.f32 %v3620, %v3873
          %v3875 = vrcp.pop %v3808
          %v3876 = vmul.f32 %v3621, %v3875
          %v3877 = vrcp.pop %v3813
          %v3878 = vmul.f32 %v3622, %v3877
          %v3879 = vld [vmem:[%s5] sm:$0xff]
          %v3880 = vld [vmem:[%s5 + $0x8] sm:$0xff]
          %v3881 = vld [vmem:[%s5 + $0x10] sm:$0xff]
          %v3882 = vld [vmem:[%s5 + $0x18] sm:$0xff]
          %v3883 = vld [vmem:[%s5 + $0x20] sm:$0xff]
          %v3884 = vld [vmem:[%s5 + $0x28] sm:$0xff]
          %v3885 = vld [vmem:[%s5 + $0x30] sm:$0xff]
          %v3886 = vld [vmem:[%s5 + $0x38] sm:$0xff]
          %v3887 = vld [vmem:[%s5 + $0x40] sm:$0xff]
          %v3888 = vld [vmem:[%s5 + $0x48] sm:$0xff]
          %v3889 = vld [vmem:[%s5 + $0x50] sm:$0xff]
          %v3890 = vld [vmem:[%s5 + $0x58] sm:$0xff]
          %v3891 = vld [vmem:[%s5 + $0x60] sm:$0xff]
          %v3892 = vld [vmem:[%s5 + $0x68] sm:$0xff]
          %v3893 = vld [vmem:[%s5 + $0x70] sm:$0xff]
          %v3894 = vld [vmem:[%s5 + $0x78] sm:$0xff]
          %3895 = vxpose.xlu0.b32.start [1/16] %v3816, 128
          %3896 = vxpose.xlu0.b32.cont [2/16] %v3818, 128
          %3897 = vxpose.xlu0.b32.cont [3/16] %v3820, 128
          %3898 = vxpose.xlu0.b32.cont [4/16] %v3822, 128
          %3899 = vxpose.xlu0.b32.cont [5/16] %v3824, 128
          %3900 = vxpose.xlu0.b32.cont [6/16] %v3826, 128
          %3901 = vxpose.xlu0.b32.cont [7/16] %v3828, 128
          %3902 = vxpose.xlu0.b32.cont [8/16] %v3830, 128
          %3903 = vxpose.xlu0.b32.cont [9/16] %v3832, 128
          %3904 = vxpose.xlu0.b32.cont [10/16] %v3834, 128
          %3905 = vxpose.xlu0.b32.cont [11/16] %v3836, 128
          %3906 = vxpose.xlu0.b32.cont [12/16] %v3838, 128
          %3907 = vxpose.xlu0.b32.cont [13/16] %v3840, 128
          %3908 = vxpose.xlu0.b32.cont [14/16] %v3842, 128
          %3909 = vxpose.xlu0.b32.cont [15/16] %v3844, 128
          %3910 = vxpose.xlu0.b32.end [16/16] %v3846, 128
          %v3911 = vpop.trf.xlu0
          %v3912 = vpop.trf.xlu0
          %v3913 = vpop.trf.xlu0
          %v3914 = vpop.trf.xlu0
          %v3915 = vpop.trf.xlu0
          %v3916 = vpop.trf.xlu0
          %v3917 = vpop.trf.xlu0
          %v3918 = vpop.trf.xlu0
          %v3919 = vpop.trf.xlu0
          %v3920 = vpop.trf.xlu0
          %v3921 = vpop.trf.xlu0
          %v3922 = vpop.trf.xlu0
          %v3923 = vpop.trf.xlu0
          %v3924 = vpop.trf.xlu0
          %v3925 = vpop.trf.xlu0
          %v3926 = vpop.trf.xlu0
          %3927 = vmatprep.subr.mxu0 0.0
          %3928 = vmatpush1.msra.mxu0 %v3894
          %3929 = vmatprep.subr.mxu0 0.0
          %3930 = vmatpush1.msra.mxu0 %v3893
          %3931 = vmatprep.subr.mxu0 0.0
          %3932 = vmatpush1.msra.mxu0 %v3892
          %3933 = vmatprep.subr.mxu0 0.0
          %3934 = vmatpush1.msra.mxu0 %v3891
          %3935 = vmatprep.subr.mxu0 0.0
          %3936 = vmatpush1.msra.mxu0 %v3890
          %3937 = vmatprep.subr.mxu0 0.0
          %3938 = vmatpush1.msra.mxu0 %v3889
          %3939 = vmatprep.subr.mxu0 0.0
          %3940 = vmatpush1.msra.mxu0 %v3888
          %3941 = vmatprep.subr.mxu0 0.0
          %3942 = vmatpush1.msra.mxu0 %v3887
          %3943 = vmatprep.subr.mxu0 0.0
          %3944 = vmatpush1.msra.mxu0 %v3886
          %3945 = vmatprep.subr.mxu0 0.0
          %3946 = vmatpush1.msra.mxu0 %v3885
          %3947 = vmatprep.subr.mxu0 0.0
          %3948 = vmatpush1.msra.mxu0 %v3884
          %3949 = vmatprep.subr.mxu0 0.0
          %3950 = vmatpush1.msra.mxu0 %v3883
          %3951 = vmatprep.subr.mxu0 0.0
          %3952 = vmatpush1.msra.mxu0 %v3882
          %3953 = vmatprep.subr.mxu0 0.0
          %3954 = vmatpush1.msra.mxu0 %v3881
          %3955 = vmatprep.subr.mxu0 0.0
          %3956 = vmatpush1.msra.mxu0 %v3880
          %3957 = vmatprep.subr.mxu0 0.0
          %3958 = vmatpush1.msra.mxu0 %v3879
          %3959 = vmatprep.subr.mxu0 0.0
          %3960 = vmatpush2.msra.mxu0 0.0
          %3961 = vmatprep.subr.mxu0 0.0
          %3962 = vmatpush2.msra.mxu0 0.0
          %3963 = vmatprep.subr.mxu0 0.0
          %3964 = vmatpush2.msra.mxu0 0.0
          %3965 = vmatprep.subr.mxu0 0.0
          %3966 = vmatpush2.msra.mxu0 0.0
          %3967 = vmatprep.subr.mxu0 0.0
          %3968 = vmatpush2.msra.mxu0 0.0
          %3969 = vmatprep.subr.mxu0 0.0
          %3970 = vmatpush2.msra.mxu0 0.0
          %3971 = vmatprep.subr.mxu0 0.0
          %3972 = vmatpush2.msra.mxu0 0.0
          %3973 = vmatprep.subr.mxu0 0.0
          %3974 = vmatpush2.msra.mxu0 0.0
          %3975 = vmatprep.subr.mxu0 0.0
          %3976 = vmatpush2.msra.mxu0 0.0
          %3977 = vmatprep.subr.mxu0 0.0
          %3978 = vmatpush2.msra.mxu0 0.0
          %3979 = vmatprep.subr.mxu0 0.0
          %3980 = vmatpush2.msra.mxu0 0.0
          %3981 = vmatprep.subr.mxu0 0.0
          %3982 = vmatpush2.msra.mxu0 0.0
          %3983 = vmatprep.subr.mxu0 0.0
          %3984 = vmatpush2.msra.mxu0 0.0
          %3985 = vmatprep.subr.mxu0 0.0
          %3986 = vmatpush2.msra.mxu0 0.0
          %3987 = vmatprep.subr.mxu0 0.0
          %3988 = vmatpush2.msra.mxu0 0.0
          %3989 = vmatprep.subr.mxu0 0.0
          %3990 = vmatpush2.msra.mxu0 0.0
          %3991 = vmatprep.mubr.f32.mxu0 0.0
          %3992 = vmatmul.mubr.f32.gmra.mxu0 %v3911
          %v3993 = vpop.f32.mrf.mxu0
          %v3994 = vadd.f32 0.0, %v3993
          %v3995 = vpop.f32.mrf.mxu0
          %3996 = vmatprep.mubr.f32.mxu0 0.0
          %3997 = vmatmul.mubr.f32.gmra.mxu0 %v3912
          %v3998 = vpop.f32.mrf.mxu0
          %v3999 = vadd.f32 0.0, %v3998
          %v4000 = vpop.f32.mrf.mxu0
          %4001 = vmatprep.mubr.f32.mxu0 0.0
          %4002 = vmatmul.mubr.f32.gmra.mxu0 %v3913
          %v4003 = vpop.f32.mrf.mxu0
          %v4004 = vadd.f32 0.0, %v4003
          %v4005 = vpop.f32.mrf.mxu0
          %4006 = vmatprep.mubr.f32.mxu0 0.0
          %4007 = vmatmul.mubr.f32.gmra.mxu0 %v3914
          %v4008 = vpop.f32.mrf.mxu0
          %v4009 = vadd.f32 0.0, %v4008
          %v4010 = vpop.f32.mrf.mxu0
          %4011 = vdwg.mxu0
          %4012 = vxpose.xlu0.b32.start [1/16] %v3848, 128
          %4013 = vxpose.xlu0.b32.cont [2/16] %v3850, 128
          %4014 = vxpose.xlu0.b32.cont [3/16] %v3852, 128
          %4015 = vxpose.xlu0.b32.cont [4/16] %v3854, 128
          %4016 = vxpose.xlu0.b32.cont [5/16] %v3856, 128
          %4017 = vxpose.xlu0.b32.cont [6/16] %v3858, 128
          %4018 = vxpose.xlu0.b32.cont [7/16] %v3860, 128
          %4019 = vxpose.xlu0.b32.cont [8/16] %v3862, 128
          %4020 = vxpose.xlu0.b32.cont [9/16] %v3864, 128
          %4021 = vxpose.xlu0.b32.cont [10/16] %v3866, 128
          %4022 = vxpose.xlu0.b32.cont [11/16] %v3868, 128
          %4023 = vxpose.xlu0.b32.cont [12/16] %v3870, 128
          %4024 = vxpose.xlu0.b32.cont [13/16] %v3872, 128
          %4025 = vxpose.xlu0.b32.cont [14/16] %v3874, 128
          %4026 = vxpose.xlu0.b32.cont [15/16] %v3876, 128
          %4027 = vxpose.xlu0.b32.end [16/16] %v3878, 128
          %v4028 = vpop.trf.xlu0
          %v4029 = vpop.trf.xlu0
          %v4030 = vpop.trf.xlu0
          %v4031 = vpop.trf.xlu0
          %v4032 = vpop.trf.xlu0
          %v4033 = vpop.trf.xlu0
          %v4034 = vpop.trf.xlu0
          %v4035 = vpop.trf.xlu0
          %v4036 = vpop.trf.xlu0
          %v4037 = vpop.trf.xlu0
          %v4038 = vpop.trf.xlu0
          %v4039 = vpop.trf.xlu0
          %v4040 = vpop.trf.xlu0
          %v4041 = vpop.trf.xlu0
          %v4042 = vpop.trf.xlu0
          %v4043 = vpop.trf.xlu0
          %4044 = vmatprep.subr.mxu0 0.0
          %4045 = vmatpush1.msra.mxu0 %v3894
          %4046 = vmatprep.subr.mxu0 0.0
          %4047 = vmatpush1.msra.mxu0 %v3893
          %4048 = vmatprep.subr.mxu0 0.0
          %4049 = vmatpush1.msra.mxu0 %v3892
          %4050 = vmatprep.subr.mxu0 0.0
          %4051 = vmatpush1.msra.mxu0 %v3891
          %4052 = vmatprep.subr.mxu0 0.0
          %4053 = vmatpush1.msra.mxu0 %v3890
          %4054 = vmatprep.subr.mxu0 0.0
          %4055 = vmatpush1.msra.mxu0 %v3889
          %4056 = vmatprep.subr.mxu0 0.0
          %4057 = vmatpush1.msra.mxu0 %v3888
          %4058 = vmatprep.subr.mxu0 0.0
          %4059 = vmatpush1.msra.mxu0 %v3887
          %4060 = vmatprep.subr.mxu0 0.0
          %4061 = vmatpush1.msra.mxu0 %v3886
          %4062 = vmatprep.subr.mxu0 0.0
          %4063 = vmatpush1.msra.mxu0 %v3885
          %4064 = vmatprep.subr.mxu0 0.0
          %4065 = vmatpush1.msra.mxu0 %v3884
          %4066 = vmatprep.subr.mxu0 0.0
          %4067 = vmatpush1.msra.mxu0 %v3883
          %4068 = vmatprep.subr.mxu0 0.0
          %4069 = vmatpush1.msra.mxu0 %v3882
          %4070 = vmatprep.subr.mxu0 0.0
          %4071 = vmatpush1.msra.mxu0 %v3881
          %4072 = vmatprep.subr.mxu0 0.0
          %4073 = vmatpush1.msra.mxu0 %v3880
          %4074 = vmatprep.subr.mxu0 0.0
          %4075 = vmatpush1.msra.mxu0 %v3879
          %4076 = vmatprep.subr.mxu0 0.0
          %4077 = vmatpush2.msra.mxu0 0.0
          %4078 = vmatprep.subr.mxu0 0.0
          %4079 = vmatpush2.msra.mxu0 0.0
          %4080 = vmatprep.subr.mxu0 0.0
          %4081 = vmatpush2.msra.mxu0 0.0
          %4082 = vmatprep.subr.mxu0 0.0
          %4083 = vmatpush2.msra.mxu0 0.0
          %4084 = vmatprep.subr.mxu0 0.0
          %4085 = vmatpush2.msra.mxu0 0.0
          %4086 = vmatprep.subr.mxu0 0.0
          %4087 = vmatpush2.msra.mxu0 0.0
          %4088 = vmatprep.subr.mxu0 0.0
          %4089 = vmatpush2.msra.mxu0 0.0
          %4090 = vmatprep.subr.mxu0 0.0
          %4091 = vmatpush2.msra.mxu0 0.0
          %4092 = vmatprep.subr.mxu0 0.0
          %4093 = vmatpush2.msra.mxu0 0.0
          %4094 = vmatprep.subr.mxu0 0.0
          %4095 = vmatpush2.msra.mxu0 0.0
          %4096 = vmatprep.subr.mxu0 0.0
          %4097 = vmatpush2.msra.mxu0 0.0
          %4098 = vmatprep.subr.mxu0 0.0
          %4099 = vmatpush2.msra.mxu0 0.0
          %4100 = vmatprep.subr.mxu0 0.0
          %4101 = vmatpush2.msra.mxu0 0.0
          %4102 = vmatprep.subr.mxu0 0.0
          %4103 = vmatpush2.msra.mxu0 0.0
          %4104 = vmatprep.subr.mxu0 0.0
          %4105 = vmatpush2.msra.mxu0 0.0
          %4106 = vmatprep.subr.mxu0 0.0
          %4107 = vmatpush2.msra.mxu0 0.0
          %4108 = vmatprep.mubr.f32.mxu0 0.0
          %4109 = vmatmul.mubr.f32.gmra.mxu0 %v4028
          %v4110 = vpop.f32.mrf.mxu0
          %v4111 = vadd.f32 0.0, %v4110
          %v4112 = vpop.f32.mrf.mxu0
          %4113 = vmatprep.mubr.f32.mxu0 0.0
          %4114 = vmatmul.mubr.f32.gmra.mxu0 %v4029
          %v4115 = vpop.f32.mrf.mxu0
          %v4116 = vadd.f32 0.0, %v4115
          %v4117 = vpop.f32.mrf.mxu0
          %4118 = vmatprep.mubr.f32.mxu0 0.0
          %4119 = vmatmul.mubr.f32.gmra.mxu0 %v4030
          %v4120 = vpop.f32.mrf.mxu0
          %v4121 = vadd.f32 0.0, %v4120
          %v4122 = vpop.f32.mrf.mxu0
          %4123 = vmatprep.mubr.f32.mxu0 0.0
          %4124 = vmatmul.mubr.f32.gmra.mxu0 %v4031
          %v4125 = vpop.f32.mrf.mxu0
          %v4126 = vadd.f32 0.0, %v4125
          %v4127 = vpop.f32.mrf.mxu0
          %4128 = vdwg.mxu0
          %v4129 = vld [vmem:[%s6] sm:$0x1]
          %v4131 = vlaneseq
          %v4132 = vshrl.u32 %v4131, 7
          %v4133 = vsub.s32 0, %v4132
          %v4134 = vrot.slane %v4129, %v4133
          %v4136 = vadd.f32 %v3994, %v4134
          %v4137 = vadd.f32 %v3999, %v4134
          %v4138 = vadd.f32 %v4004, %v4134
          %v4139 = vadd.f32 %v4009, %v4134
          %v4140 = vadd.f32 %v4111, %v4134
          %v4141 = vadd.f32 %v4116, %v4134
          %v4142 = vadd.f32 %v4121, %v4134
          %v4143 = vadd.f32 %v4126, %v4134
          %4144 = vst [vmem:[%s518] sm:$0xff] %v4136
          %4145 = vst [vmem:[%s518 + $0x8] sm:$0xff] %v4137
          %4146 = vst [vmem:[%s518 + $0x10] sm:$0xff] %v4138
          %4147 = vst [vmem:[%s518 + $0x18] sm:$0xff] %v4139
          %4148 = vst [vmem:[%s518 + $0x20] sm:$0xff] %v4140
          %4149 = vst [vmem:[%s518 + $0x28] sm:$0xff] %v4141
          %4150 = vst [vmem:[%s518 + $0x30] sm:$0xff] %v4142
          %4151 = vst [vmem:[%s518 + $0x38] sm:$0xff] %v4143
        $region94: #{tpu_custom_call.1} parent=81 // pred_fallthru
          _
        %s4152 = sand.u32 %s220, 1
        %s4153 = scalar_lea.sflag [#allocation8], %s4152
        %s4154 = sand.u32 %s220, 1
        %s4155 = smul.addr %s4154, 64
        %s4156 = scalar_lea.vmem [#allocation7], %s4155
        // Predicated region
        $region95: #{tpu_custom_call.1} parent=81 // pred_check
          %p4157 = pneg %p230
        $region96: #{tpu_custom_call.1} parent=81 // pred_check_branch
          %4159 = sbr.rel (%p4157) target = $region98
        $region97: #{tpu_custom_call.1} parent=81 // pred_region
          %s4160 = smul.u32 8, %s27
          %s4162 = ssub.s32 1024, 1024
          %4163 = vsyncadd %s4153, %s4162
          %s4164 = smul.addr %s26, 16
          %s4165 = sadd.s32 %s4160, %s4164
          %s4166 = smul.addr %s4165, 128
          %s4167 = scalar_lea.hbm %s7, %s4166
          %s4168 = sshll.u32 %s4156, 4
          %s4169 = int_to_ptr.vmem [resolvable:$true] %s4168
          %4174 = dma.vmem_to_hbm [thread:$0]  %s4169, 1024, %s4167, %s4153, 128, 128, 8
        $region98: #{tpu_custom_call.1} parent=81 // pred_fallthru
          _
      $region82: #{tpu_custom_call.1} parent=5 // pred_fallthru
        _
      %p4175 = scmp.le.s32.totalorder 2, %s16
      // Predicated region
      $region99: #{tpu_custom_call.1} parent=5 // pred_check
        %p4176 = pneg %p4175
      $region100: #{tpu_custom_call.1} parent=5 // pred_check_branch
        %4178 = sbr.rel (%p4176) target = $region102
      $region101: #{tpu_custom_call.1} parent=5 // pred_region
        %s4179 = ssub.s32 %s16, 2
        // Predicated region
        $region103: #{tpu_custom_call.1} parent=101 // pred_check
          %p4180 = pneg %p236
        $region104: #{tpu_custom_call.1} parent=101 // pred_check_branch
          %4182 = sbr.rel (%p4180) target = $region106
        $region105: #{tpu_custom_call.1} parent=101 // pred_region
          %s4183 = sand.u32 %s221, 1
          %s4184 = scalar_lea.sflag [#allocation8], %s4183
          %s4185 = sand.u32 %s221, 1
          %s4186 = smul.addr %s4185, 64
          %s4187 = scalar_lea.vmem [#allocation7], %s4186
          %4188 = dma.done %s4184, 1024
        $region106: #{tpu_custom_call.1} parent=101 // pred_fallthru
          _
      $region102: #{tpu_custom_call.1} parent=5 // pred_fallthru
        _
    $region6: #{tpu_custom_call.1} parent=1 // loop_footer
      %s20 = sadd.s32 1, %s16
    $region7: #{tpu_custom_call.1} parent=1 // loop_footer_branch
      %15 = sbr.rel target = $region3
    $region8: #{tpu_custom_call.1} parent=1 // loop_exit
      _
    %4189 = vsyncpa [#allocation8], 1
    %s4190 = scalar_lea.sflag [#allocation8], 1
    %4191 = vsyncpa %s4190, 1

</llo_original>
